<compile_context>
chip_gen: v6e
topology: v6e:2x2x1
jax: 0.10.0
libtpu: 0.0.40
codegen_flags: <defaults>
</compile_context>

<pallas_src>
import jax
import jax.numpy as jnp
from jax.experimental import pallas as pl
from jax.experimental.pallas import tpu as pltpu


def _round_up(x, m):
    return ((x + m - 1) // m) * m


def _head_kernel_nchw(x_ref, w_ref, o_ref):
    # x_ref: (TB, C, HW)   w_ref: (C, NCP) with 1/HW folded   o_ref: (TB, NCP) f32
    # Spatial pooling: f32-accumulating reduce over the last (lane) axis; the
    # cast happens per-vreg inside the reduction (no full-tile f32 copy).
    pooled = jnp.sum(x_ref[...], axis=-1, dtype=jnp.float32)            # (TB, C)
    out = jnp.dot(pooled, w_ref[...].astype(jnp.float32),
                  preferred_element_type=jnp.float32)
    o_ref[...] = out.astype(o_ref.dtype)


def _head_kernel_nhwc(x_ref, w_ref, o_ref):
    # x_ref: (TB, HW, C): sublane-direction reduce; pooled is lane-dense in C.
    pooled = jnp.sum(x_ref[...], axis=1, dtype=jnp.float32)             # (TB, C)
    out = jnp.dot(pooled, w_ref[...].astype(jnp.float32),
                  preferred_element_type=jnp.float32)
    o_ref[...] = out.astype(o_ref.dtype)


def mobilenet_head(x, fc_weight, *, data_format="NCHW", weight_dtype=None,
                   tile_b=None):
    """MobileNet head forward (eval mode).

    x:         (B, C, H, W) if data_format == "NCHW" (PyTorch layout), or
               (B, H, W, C) if data_format == "NHWC" (TPU-friendly fast path).
    fc_weight: (num_classes, C) nn.Linear weight (bias=False), PyTorch layout.
    Returns (B, num_classes) float32 logits.
    """
    if data_format == "NCHW":
        B, C, H, W = x.shape
    elif data_format == "NHWC":
        B, H, W, C = x.shape
    else:
        raise ValueError(f"unknown data_format: {data_format}")
    HW = H * W
    num_classes, c_in = fc_weight.shape
    assert c_in == C, "fc expects feature dim C"
    NCP = _round_up(num_classes, 128)            # lane-dense padded class dim

    # Weight: (num_classes, C) -> (C, NCP), pooling scale 1/HW folded in (f32),
    # zero-padded lanes so padded output columns are exactly zero.
    if weight_dtype is None:
        weight_dtype = fc_weight.dtype
    w_t = jnp.transpose(fc_weight, (1, 0)).astype(jnp.float32) * (1.0 / float(HW))
    w_pad = (jnp.zeros((C, NCP), jnp.float32).at[:, :num_classes].set(w_t)
             .astype(weight_dtype))

    itemsize = x.dtype.itemsize
    sub = 32 // itemsize                         # sublane multiple (8 f32 / 16 bf16)

    # Free reshape (merge trailing dims only, no HBM data movement).
    if data_format == "NCHW":
        x3 = x.reshape(B, C, HW)                 # kernel blocks: (TB, C, HW)
        kernel = _head_kernel_nchw
        per_row_bytes = _round_up(C, sub) * _round_up(HW, 128) * itemsize
        # NOTE: for HW % 128 != 0 (e.g. 7x7=49) lanes are partially used; the
        # VMEM math above accounts for it, but prefer data_format="NHWC".
    else:
        x3 = x.reshape(B, HW, C)                 # kernel blocks: (TB, HW, C)
        kernel = _head_kernel_nhwc
        per_row_bytes = _round_up(HW, sub) * _round_up(C, 128) * itemsize

    # Generation-aware VMEM budget (v7x: 64 MiB physical; v5e/v6e: 128 MiB).
    try:
        vmem_cap = int(pltpu.get_tpu_info().vmem_capacity_bytes)
    except Exception:
        vmem_cap = 64 * 1024 * 1024              # conservative fallback (v7x)
    usable = min((vmem_cap * 3) // 4, 96 * 1024 * 1024)   # ~48 MiB v7x, 96 MiB v5e/v6e

    w_block_bytes = _round_up(C, 8) * NCP * jnp.dtype(weight_dtype).itemsize
    slack = 4 * 1024 * 1024                      # output blocks + compiler scratch

    if tile_b is None:
        budget = max(usable - 2 * w_block_bytes - slack, 0)
        rows = budget // (2 * per_row_bytes)     # 2x: double-buffered input DMA
        if rows >= B:
            tb = B
        elif rows >= 8:
            tb = (rows // 8) * 8                 # keep output block sublane-aligned
        else:
            tb = min(8, B)                       # floor; VMEM request bumped below
        # Guarantee >= 2 grid steps when there is enough batch so both v7x
        # TensorCores get work (no-op cost on single-TC v5e/v6e).
        if B >= 16:
            tb = min(tb, _round_up(pl.cdiv(B, 2), 8))
    else:
        tb = tile_b
    TB = int(tb)

    required = (2 * TB * per_row_bytes + 2 * w_block_bytes
                + 2 * _round_up(TB, 8) * NCP * 4 + 2 * 1024 * 1024)
    vmem_limit = int(max(usable, required))

    grid = (pl.cdiv(B, TB),)
    in_block_shape = (TB,) + x3.shape[1:]

    cost = pl.CostEstimate(
        flops=int(2 * B * C * NCP + B * C * HW),
        transcendentals=0,
        bytes_accessed=int(B * C * HW * itemsize
                           + C * NCP * jnp.dtype(weight_dtype).itemsize
                           + B * NCP * 4),
    )

    out_padded = pl.pallas_call(
        kernel,
        out_shape=jax.ShapeDtypeStruct((B, NCP), jnp.float32),
        grid=grid,
        in_specs=[
            pl.BlockSpec(in_block_shape, lambda i: (i, 0, 0)),
            pl.BlockSpec((C, NCP), lambda i: (0, 0)),   # constant map -> resident
        ],
        out_specs=pl.BlockSpec((TB, NCP), lambda i: (i, 0)),
        compiler_params=pltpu.CompilerParams(
            dimension_semantics=("parallel",),
            vmem_limit_bytes=vmem_limit,
        ),
        cost_estimate=cost,
    )(x3, w_pad)

    return out_padded[:, :num_classes]


def reference(x_nchw, fc_weight):
    # adaptive_avg_pool2d(x, 1).reshape(B, -1); dropout = identity (eval); fc.
    pooled = jnp.mean(x_nchw.astype(jnp.float32), axis=(2, 3))
    return pooled @ fc_weight.astype(jnp.float32).T


if __name__ == "__main__":
    key = jax.random.PRNGKey(0)
    kx, kw = jax.random.split(key)

    # Small shapes consistent with the module: fc requires 1280 input features.
    B, C, H, W = 2, 1280, 16, 16
    num_classes = 16

    x = jax.random.normal(kx, (B, C, H, W), dtype=jnp.float32)
    bound = 1.0 / jnp.sqrt(jnp.float32(C))
    fc_weight = jax.random.uniform(kw, (num_classes, C), dtype=jnp.float32,
                                   minval=-bound, maxval=bound)

    ref = reference(x, fc_weight)

    # 1) NCHW f32 path (matches the PyTorch module exactly, eval mode).
    out = jax.block_until_ready(mobilenet_head(x, fc_weight))
    assert out.shape == (B, num_classes)
    assert jnp.allclose(out, ref, atol=1e-4, rtol=1e-4), "NCHW f32 mismatch"

    # 2) bf16 streaming path (backbone produced bf16): halves HBM bytes read,
    #    f32 accumulation inside the kernel.
    x_bf16 = x.astype(jnp.bfloat16)
    out_bf = jax.block_until_ready(mobilenet_head(x_bf16, fc_weight))
    ref_bf = reference(x_bf16.astype(jnp.float32), fc_weight)
    assert jnp.allclose(out_bf, ref_bf, atol=5e-3, rtol=5e-3), "NCHW bf16 mismatch"

    # 3) NHWC fast path (sublane-direction pooling reduce, pooled lane-dense in C).
    x_nhwc = jnp.transpose(x, (0, 2, 3, 1))
    out_nhwc = jax.block_until_ready(
        mobilenet_head(x_nhwc, fc_weight, data_format="NHWC"))
    assert jnp.allclose(out_nhwc, ref, atol=1e-4, rtol=1e-4), "NHWC f32 mismatch"

    print("KERNEL_OK")
</pallas_src>

<mosaic_0001>
module attributes {stable_mosaic.version = 11 : i64} {
  func.func @_head_kernel_nchw(%arg0: i32, %arg1: memref<2x1280x256xf32, #tpu.memory_space<vmem>>, %arg2: memref<1280x128xf32, #tpu.memory_space<vmem>>, %arg3: memref<2x128xf32, #tpu.memory_space<vmem>>) attributes {dimension_semantics = [#tpu.dimension_semantics<parallel>], iteration_bounds = array<i64: 1>, scalar_prefetch = 0 : i64, scratch_operands = 0 : i64, tpu.core_type = #tpu.core_type<tc>, window_params = [{transform_indices = @transform_0, window_bounds = array<i64: 2, 1280, 256>}, {pipeline_mode = #tpu.pipeline_mode<synchronous>, transform_indices = @transform_1, window_bounds = array<i64: 1280, 128>}, {transform_indices = @transform_2, window_bounds = array<i64: 2, 128>}]} {
    %c0 = arith.constant 0 : index
    %c0_0 = arith.constant 0 : index
    %c0_1 = arith.constant 0 : index
    %0 = vector.load %arg1[%c0, %c0_0, %c0_1] : memref<2x1280x256xf32, #tpu.memory_space<vmem>>, vector<2x1280x256xf32>
    %cst = arith.constant dense<0.000000e+00> : vector<2x1280xf32>
    %1 = vector.multi_reduction <add>, %0, %cst [2] : vector<2x1280x256xf32> to vector<2x1280xf32>
    %c0_2 = arith.constant 0 : index
    %c0_3 = arith.constant 0 : index
    %2 = vector.load %arg2[%c0_2, %c0_3] : memref<1280x128xf32, #tpu.memory_space<vmem>>, vector<1280x128xf32>
    %cst_4 = arith.constant dense<0.000000e+00> : vector<2x128xf32>
    %3 = tpu.matmul %1, %2, %cst_4 {dimension_numbers = #tpu.dot_dimension_numbers<[1], [0], [0], [1], [0, 0, 1, 1], [], []>} : vector<2x1280xf32>, vector<1280x128xf32>, vector<2x128xf32> -> vector<2x128xf32>
    %c0_5 = arith.constant 0 : index
    %c0_6 = arith.constant 0 : index
    %4 = vector.load %arg3[%c0_5, %c0_6] : memref<2x128xf32, #tpu.memory_space<vmem>>, vector<2x128xf32>
    tpu.vector_store %arg3[%c0_5, %c0_6], %3 {strides = array<i32>} : memref<2x128xf32, #tpu.memory_space<vmem>>, vector<2x128xf32>,
    return
  }
  func.func @transform_0(%arg0: i32) -> (i32, i32, i32) {
    %c0_i32 = arith.constant 0 : i32
    %c0_i32_0 = arith.constant 0 : i32
    %c0_i32_1 = arith.constant 0 : i32
    return %arg0, %c0_i32, %c0_i32_0 : i32, i32, i32
  }
  func.func @transform_1(%arg0: i32) -> (i32, i32) {
    %c0_i32 = arith.constant 0 : i32
    %c0_i32_0 = arith.constant 0 : i32
    %c0_i32_1 = arith.constant 0 : i32
    return %c0_i32, %c0_i32_0 : i32, i32
  }
  func.func @transform_2(%arg0: i32) -> (i32, i32) {
    %c0_i32 = arith.constant 0 : i32
    %c0_i32_0 = arith.constant 0 : i32
    return %arg0, %c0_i32 : i32, i32
  }
}

</mosaic_0001>

<llo_original>
// kernel: tpu_custom_call.1
$region0: #{tpu_custom_call.1}
  #allocation0 [shape = 'u32[]', space=smem, size = 0x4, offset = 0x4, fixed_abs, tag = 'smem constant byte address 0x4 - core index']
  #allocation1 [shape = 'u32[144,128]{1,0:T(1,128)}', space=vmem, size = 0x12000, scoped, tag = 'internal scratch']
  %s0 = inlined_call_operand.hbm [shape: f32[2,1280,256], index: 0, kind: input, shape index: {}]
  %s1 = inlined_call_operand.hbm [shape: f32[1280,128], index: 1, kind: input, shape index: {}]
  %s2 = inlined_call_operand.hbm [shape: f32[2,128], index: 2, kind: output, shape index: {}]
  %s3 = sld [smem:[#allocation0]]
  $region26: #{tpu_custom_call.1} parent=0
    _
  %s5 = ssub.s32 1, %s3
  %s6 = scalar_select 0, %s5, %s3
  $region1: #{tpu_custom_call.1} parent=0
    #allocation2 [shape = 'u8[2621440]{0}', space=vmem, size = 0x280000, scoped, tag = 'input window, operand 0, single buffered']
    #allocation3 [shape = 's32[1]{0}', space=sflag, size = 0x4, scoped, tag = 'scoped memory for tpu_custom_call.1']
    #allocation4 [shape = 's32[1]{0}', space=sflag, size = 0x4, scoped, tag = 'scoped memory for tpu_custom_call.1']
    #allocation5 [shape = 'u8[655360]{0}', space=vmem, size = 0xa0000, scoped, tag = 'input window, operand 1, single buffered']
    #allocation6 [shape = 's32[1]{0}', space=sflag, size = 0x4, scoped, tag = 'scoped memory for tpu_custom_call.1']
    #allocation7 [shape = 'u8[1024]{0}', space=vmem, size = 0x400, scoped, tag = 'output window, operand 0, single buffered']
    %7 = vsyncpa [#allocation3], 0
    %8 = vsyncpa [#allocation6], 0
    %9 = vsyncpa [#allocation4], 0
    // Predicated region
    $region2: #{tpu_custom_call.1} parent=1 // pred_check
      _
    $region3: #{tpu_custom_call.1} parent=1 // pred_check_branch
      %11 = sbr.rel (0) target = $region5
    $region4: #{tpu_custom_call.1} parent=1 // pred_region
      %s13 = ssub.s32 81920, 81920
      %14 = vsyncadd [#allocation3], %s13
      %s15 = sshll.u32 [#allocation2], 4
      %s16 = int_to_ptr.vmem [resolvable:$true] %s15
      %21 = dma.hbm_to_vmem [thread:$0]  %s0, 81920, %s16, [#allocation3], 256, 256, 16
    $region5: #{tpu_custom_call.1} parent=1 // pred_fallthru
      _
    // Predicated region
    $region6: #{tpu_custom_call.1} parent=1 // pred_check
      _
    $region7: #{tpu_custom_call.1} parent=1 // pred_check_branch
      %23 = sbr.rel (0) target = $region9
    $region8: #{tpu_custom_call.1} parent=1 // pred_region
      %s25 = ssub.s32 20480, 20480
      %26 = vsyncadd [#allocation6], %s25
      %s27 = sshll.u32 [#allocation5], 4
      %s28 = int_to_ptr.vmem [resolvable:$true] %s27
      %33 = dma.hbm_to_vmem [thread:$0]  %s1, 20480, %s28, [#allocation6], 128, 128, 8
    $region9: #{tpu_custom_call.1} parent=1 // pred_fallthru
      _
    // Predicated region
    $region10: #{tpu_custom_call.1} parent=1 // pred_check
      _
    $region11: #{tpu_custom_call.1} parent=1 // pred_check_branch
      %35 = sbr.rel (0) target = $region13
    $region12: #{tpu_custom_call.1} parent=1 // pred_region
      %36 = dma.done [#allocation3], 81920
    $region13: #{tpu_custom_call.1} parent=1 // pred_fallthru
      _
    // Predicated region
    $region14: #{tpu_custom_call.1} parent=1 // pred_check
      _
    $region15: #{tpu_custom_call.1} parent=1 // pred_check_branch
      %38 = sbr.rel (0) target = $region17
    $region16: #{tpu_custom_call.1} parent=1 // pred_region
      %39 = dma.done [#allocation6], 20480
    $region17: #{tpu_custom_call.1} parent=1 // pred_fallthru
      _
    %v40 = vld [vmem:[#allocation2] sm:$0xff]
    %v41 = vld [vmem:[#allocation2 + $0x8] sm:$0xff]
    %v42 = vld [vmem:[#allocation2 + $0x10] sm:$0xff]
    %v43 = vld [vmem:[#allocation2 + $0x18] sm:$0xff]
    %v44 = vld [vmem:[#allocation2 + $0x20] sm:$0xff]
    %v45 = vld [vmem:[#allocation2 + $0x28] sm:$0xff]
    %v46 = vld [vmem:[#allocation2 + $0x30] sm:$0xff]
    %v47 = vld [vmem:[#allocation2 + $0x38] sm:$0xff]
    %v48 = vld [vmem:[#allocation2 + $0x40] sm:$0xff]
    %v49 = vld [vmem:[#allocation2 + $0x48] sm:$0xff]
    %v50 = vld [vmem:[#allocation2 + $0x50] sm:$0xff]
    %v51 = vld [vmem:[#allocation2 + $0x58] sm:$0xff]
    %v52 = vld [vmem:[#allocation2 + $0x60] sm:$0xff]
    %v53 = vld [vmem:[#allocation2 + $0x68] sm:$0xff]
    %v54 = vld [vmem:[#allocation2 + $0x70] sm:$0xff]
    %v55 = vld [vmem:[#allocation2 + $0x78] sm:$0xff]
    %v56 = vld [vmem:[#allocation2 + $0x80] sm:$0xff]
    %v57 = vld [vmem:[#allocation2 + $0x88] sm:$0xff]
    %v58 = vld [vmem:[#allocation2 + $0x90] sm:$0xff]
    %v59 = vld [vmem:[#allocation2 + $0x98] sm:$0xff]
    %v60 = vld [vmem:[#allocation2 + $0xa0] sm:$0xff]
    %v61 = vld [vmem:[#allocation2 + $0xa8] sm:$0xff]
    %v62 = vld [vmem:[#allocation2 + $0xb0] sm:$0xff]
    %v63 = vld [vmem:[#allocation2 + $0xb8] sm:$0xff]
    %v64 = vld [vmem:[#allocation2 + $0xc0] sm:$0xff]
    %v65 = vld [vmem:[#allocation2 + $0xc8] sm:$0xff]
    %v66 = vld [vmem:[#allocation2 + $0xd0] sm:$0xff]
    %v67 = vld [vmem:[#allocation2 + $0xd8] sm:$0xff]
    %v68 = vld [vmem:[#allocation2 + $0xe0] sm:$0xff]
    %v69 = vld [vmem:[#allocation2 + $0xe8] sm:$0xff]
    %v70 = vld [vmem:[#allocation2 + $0xf0] sm:$0xff]
    %v71 = vld [vmem:[#allocation2 + $0xf8] sm:$0xff]
    %v72 = vld [vmem:[#allocation2 + $0x100] sm:$0xff]
    %v73 = vld [vmem:[#allocation2 + $0x108] sm:$0xff]
    %v74 = vld [vmem:[#allocation2 + $0x110] sm:$0xff]
    %v75 = vld [vmem:[#allocation2 + $0x118] sm:$0xff]
    %v76 = vld [vmem:[#allocation2 + $0x120] sm:$0xff]
    %v77 = vld [vmem:[#allocation2 + $0x128] sm:$0xff]
    %v78 = vld [vmem:[#allocation2 + $0x130] sm:$0xff]
    %v79 = vld [vmem:[#allocation2 + $0x138] sm:$0xff]
    %v80 = vld [vmem:[#allocation2 + $0x140] sm:$0xff]
    %v81 = vld [vmem:[#allocation2 + $0x148] sm:$0xff]
    %v82 = vld [vmem:[#allocation2 + $0x150] sm:$0xff]
    %v83 = vld [vmem:[#allocation2 + $0x158] sm:$0xff]
    %v84 = vld [vmem:[#allocation2 + $0x160] sm:$0xff]
    %v85 = vld [vmem:[#allocation2 + $0x168] sm:$0xff]
    %v86 = vld [vmem:[#allocation2 + $0x170] sm:$0xff]
    %v87 = vld [vmem:[#allocation2 + $0x178] sm:$0xff]
    %v88 = vld [vmem:[#allocation2 + $0x180] sm:$0xff]
    %v89 = vld [vmem:[#allocation2 + $0x188] sm:$0xff]
    %v90 = vld [vmem:[#allocation2 + $0x190] sm:$0xff]
    %v91 = vld [vmem:[#allocation2 + $0x198] sm:$0xff]
    %v92 = vld [vmem:[#allocation2 + $0x1a0] sm:$0xff]
    %v93 = vld [vmem:[#allocation2 + $0x1a8] sm:$0xff]
    %v94 = vld [vmem:[#allocation2 + $0x1b0] sm:$0xff]
    %v95 = vld [vmem:[#allocation2 + $0x1b8] sm:$0xff]
    %v96 = vld [vmem:[#allocation2 + $0x1c0] sm:$0xff]
    %v97 = vld [vmem:[#allocation2 + $0x1c8] sm:$0xff]
    %v98 = vld [vmem:[#allocation2 + $0x1d0] sm:$0xff]
    %v99 = vld [vmem:[#allocation2 + $0x1d8] sm:$0xff]
    %v100 = vld [vmem:[#allocation2 + $0x1e0] sm:$0xff]
    %v101 = vld [vmem:[#allocation2 + $0x1e8] sm:$0xff]
    %v102 = vld [vmem:[#allocation2 + $0x1f0] sm:$0xff]
    %v103 = vld [vmem:[#allocation2 + $0x1f8] sm:$0xff]
    %v104 = vld [vmem:[#allocation2 + $0x200] sm:$0xff]
    %v105 = vld [vmem:[#allocation2 + $0x208] sm:$0xff]
    %v106 = vld [vmem:[#allocation2 + $0x210] sm:$0xff]
    %v107 = vld [vmem:[#allocation2 + $0x218] sm:$0xff]
    %v108 = vld [vmem:[#allocation2 + $0x220] sm:$0xff]
    %v109 = vld [vmem:[#allocation2 + $0x228] sm:$0xff]
    %v110 = vld [vmem:[#allocation2 + $0x230] sm:$0xff]
    %v111 = vld [vmem:[#allocation2 + $0x238] sm:$0xff]
    %v112 = vld [vmem:[#allocation2 + $0x240] sm:$0xff]
    %v113 = vld [vmem:[#allocation2 + $0x248] sm:$0xff]
    %v114 = vld [vmem:[#allocation2 + $0x250] sm:$0xff]
    %v115 = vld [vmem:[#allocation2 + $0x258] sm:$0xff]
    %v116 = vld [vmem:[#allocation2 + $0x260] sm:$0xff]
    %v117 = vld [vmem:[#allocation2 + $0x268] sm:$0xff]
    %v118 = vld [vmem:[#allocation2 + $0x270] sm:$0xff]
    %v119 = vld [vmem:[#allocation2 + $0x278] sm:$0xff]
    %v120 = vld [vmem:[#allocation2 + $0x280] sm:$0xff]
    %v121 = vld [vmem:[#allocation2 + $0x288] sm:$0xff]
    %v122 = vld [vmem:[#allocation2 + $0x290] sm:$0xff]
    %v123 = vld [vmem:[#allocation2 + $0x298] sm:$0xff]
    %v124 = vld [vmem:[#allocation2 + $0x2a0] sm:$0xff]
    %v125 = vld [vmem:[#allocation2 + $0x2a8] sm:$0xff]
    %v126 = vld [vmem:[#allocation2 + $0x2b0] sm:$0xff]
    %v127 = vld [vmem:[#allocation2 + $0x2b8] sm:$0xff]
    %v128 = vld [vmem:[#allocation2 + $0x2c0] sm:$0xff]
    %v129 = vld [vmem:[#allocation2 + $0x2c8] sm:$0xff]
    %v130 = vld [vmem:[#allocation2 + $0x2d0] sm:$0xff]
    %v131 = vld [vmem:[#allocation2 + $0x2d8] sm:$0xff]
    %v132 = vld [vmem:[#allocation2 + $0x2e0] sm:$0xff]
    %v133 = vld [vmem:[#allocation2 + $0x2e8] sm:$0xff]
    %v134 = vld [vmem:[#allocation2 + $0x2f0] sm:$0xff]
    %v135 = vld [vmem:[#allocation2 + $0x2f8] sm:$0xff]
    %v136 = vld [vmem:[#allocation2 + $0x300] sm:$0xff]
    %v137 = vld [vmem:[#allocation2 + $0x308] sm:$0xff]
    %v138 = vld [vmem:[#allocation2 + $0x310] sm:$0xff]
    %v139 = vld [vmem:[#allocation2 + $0x318] sm:$0xff]
    %v140 = vld [vmem:[#allocation2 + $0x320] sm:$0xff]
    %v141 = vld [vmem:[#allocation2 + $0x328] sm:$0xff]
    %v142 = vld [vmem:[#allocation2 + $0x330] sm:$0xff]
    %v143 = vld [vmem:[#allocation2 + $0x338] sm:$0xff]
    %v144 = vld [vmem:[#allocation2 + $0x340] sm:$0xff]
    %v145 = vld [vmem:[#allocation2 + $0x348] sm:$0xff]
    %v146 = vld [vmem:[#allocation2 + $0x350] sm:$0xff]
    %v147 = vld [vmem:[#allocation2 + $0x358] sm:$0xff]
    %v148 = vld [vmem:[#allocation2 + $0x360] sm:$0xff]
    %v149 = vld [vmem:[#allocation2 + $0x368] sm:$0xff]
    %v150 = vld [vmem:[#allocation2 + $0x370] sm:$0xff]
    %v151 = vld [vmem:[#allocation2 + $0x378] sm:$0xff]
    %v152 = vld [vmem:[#allocation2 + $0x380] sm:$0xff]
    %v153 = vld [vmem:[#allocation2 + $0x388] sm:$0xff]
    %v154 = vld [vmem:[#allocation2 + $0x390] sm:$0xff]
    %v155 = vld [vmem:[#allocation2 + $0x398] sm:$0xff]
    %v156 = vld [vmem:[#allocation2 + $0x3a0] sm:$0xff]
    %v157 = vld [vmem:[#allocation2 + $0x3a8] sm:$0xff]
    %v158 = vld [vmem:[#allocation2 + $0x3b0] sm:$0xff]
    %v159 = vld [vmem:[#allocation2 + $0x3b8] sm:$0xff]
    %v160 = vld [vmem:[#allocation2 + $0x3c0] sm:$0xff]
    %v161 = vld [vmem:[#allocation2 + $0x3c8] sm:$0xff]
    %v162 = vld [vmem:[#allocation2 + $0x3d0] sm:$0xff]
    %v163 = vld [vmem:[#allocation2 + $0x3d8] sm:$0xff]
    %v164 = vld [vmem:[#allocation2 + $0x3e0] sm:$0xff]
    %v165 = vld [vmem:[#allocation2 + $0x3e8] sm:$0xff]
    %v166 = vld [vmem:[#allocation2 + $0x3f0] sm:$0xff]
    %v167 = vld [vmem:[#allocation2 + $0x3f8] sm:$0xff]
    %v168 = vld [vmem:[#allocation2 + $0x400] sm:$0xff]
    %v169 = vld [vmem:[#allocation2 + $0x408] sm:$0xff]
    %v170 = vld [vmem:[#allocation2 + $0x410] sm:$0xff]
    %v171 = vld [vmem:[#allocation2 + $0x418] sm:$0xff]
    %v172 = vld [vmem:[#allocation2 + $0x420] sm:$0xff]
    %v173 = vld [vmem:[#allocation2 + $0x428] sm:$0xff]
    %v174 = vld [vmem:[#allocation2 + $0x430] sm:$0xff]
    %v175 = vld [vmem:[#allocation2 + $0x438] sm:$0xff]
    %v176 = vld [vmem:[#allocation2 + $0x440] sm:$0xff]
    %v177 = vld [vmem:[#allocation2 + $0x448] sm:$0xff]
    %v178 = vld [vmem:[#allocation2 + $0x450] sm:$0xff]
    %v179 = vld [vmem:[#allocation2 + $0x458] sm:$0xff]
    %v180 = vld [vmem:[#allocation2 + $0x460] sm:$0xff]
    %v181 = vld [vmem:[#allocation2 + $0x468] sm:$0xff]
    %v182 = vld [vmem:[#allocation2 + $0x470] sm:$0xff]
    %v183 = vld [vmem:[#allocation2 + $0x478] sm:$0xff]
    %v184 = vld [vmem:[#allocation2 + $0x480] sm:$0xff]
    %v185 = vld [vmem:[#allocation2 + $0x488] sm:$0xff]
    %v186 = vld [vmem:[#allocation2 + $0x490] sm:$0xff]
    %v187 = vld [vmem:[#allocation2 + $0x498] sm:$0xff]
    %v188 = vld [vmem:[#allocation2 + $0x4a0] sm:$0xff]
    %v189 = vld [vmem:[#allocation2 + $0x4a8] sm:$0xff]
    %v190 = vld [vmem:[#allocation2 + $0x4b0] sm:$0xff]
    %v191 = vld [vmem:[#allocation2 + $0x4b8] sm:$0xff]
    %v192 = vld [vmem:[#allocation2 + $0x4c0] sm:$0xff]
    %v193 = vld [vmem:[#allocation2 + $0x4c8] sm:$0xff]
    %v194 = vld [vmem:[#allocation2 + $0x4d0] sm:$0xff]
    %v195 = vld [vmem:[#allocation2 + $0x4d8] sm:$0xff]
    %v196 = vld [vmem:[#allocation2 + $0x4e0] sm:$0xff]
    %v197 = vld [vmem:[#allocation2 + $0x4e8] sm:$0xff]
    %v198 = vld [vmem:[#allocation2 + $0x4f0] sm:$0xff]
    %v199 = vld [vmem:[#allocation2 + $0x4f8] sm:$0xff]
    %v200 = vld [vmem:[#allocation2 + $0x500] sm:$0xff]
    %v201 = vld [vmem:[#allocation2 + $0x508] sm:$0xff]
    %v202 = vld [vmem:[#allocation2 + $0x510] sm:$0xff]
    %v203 = vld [vmem:[#allocation2 + $0x518] sm:$0xff]
    %v204 = vld [vmem:[#allocation2 + $0x520] sm:$0xff]
    %v205 = vld [vmem:[#allocation2 + $0x528] sm:$0xff]
    %v206 = vld [vmem:[#allocation2 + $0x530] sm:$0xff]
    %v207 = vld [vmem:[#allocation2 + $0x538] sm:$0xff]
    %v208 = vld [vmem:[#allocation2 + $0x540] sm:$0xff]
    %v209 = vld [vmem:[#allocation2 + $0x548] sm:$0xff]
    %v210 = vld [vmem:[#allocation2 + $0x550] sm:$0xff]
    %v211 = vld [vmem:[#allocation2 + $0x558] sm:$0xff]
    %v212 = vld [vmem:[#allocation2 + $0x560] sm:$0xff]
    %v213 = vld [vmem:[#allocation2 + $0x568] sm:$0xff]
    %v214 = vld [vmem:[#allocation2 + $0x570] sm:$0xff]
    %v215 = vld [vmem:[#allocation2 + $0x578] sm:$0xff]
    %v216 = vld [vmem:[#allocation2 + $0x580] sm:$0xff]
    %v217 = vld [vmem:[#allocation2 + $0x588] sm:$0xff]
    %v218 = vld [vmem:[#allocation2 + $0x590] sm:$0xff]
    %v219 = vld [vmem:[#allocation2 + $0x598] sm:$0xff]
    %v220 = vld [vmem:[#allocation2 + $0x5a0] sm:$0xff]
    %v221 = vld [vmem:[#allocation2 + $0x5a8] sm:$0xff]
    %v222 = vld [vmem:[#allocation2 + $0x5b0] sm:$0xff]
    %v223 = vld [vmem:[#allocation2 + $0x5b8] sm:$0xff]
    %v224 = vld [vmem:[#allocation2 + $0x5c0] sm:$0xff]
    %v225 = vld [vmem:[#allocation2 + $0x5c8] sm:$0xff]
    %v226 = vld [vmem:[#allocation2 + $0x5d0] sm:$0xff]
    %v227 = vld [vmem:[#allocation2 + $0x5d8] sm:$0xff]
    %v228 = vld [vmem:[#allocation2 + $0x5e0] sm:$0xff]
    %v229 = vld [vmem:[#allocation2 + $0x5e8] sm:$0xff]
    %v230 = vld [vmem:[#allocation2 + $0x5f0] sm:$0xff]
    %v231 = vld [vmem:[#allocation2 + $0x5f8] sm:$0xff]
    %v232 = vld [vmem:[#allocation2 + $0x600] sm:$0xff]
    %v233 = vld [vmem:[#allocation2 + $0x608] sm:$0xff]
    %v234 = vld [vmem:[#allocation2 + $0x610] sm:$0xff]
    %v235 = vld [vmem:[#allocation2 + $0x618] sm:$0xff]
    %v236 = vld [vmem:[#allocation2 + $0x620] sm:$0xff]
    %v237 = vld [vmem:[#allocation2 + $0x628] sm:$0xff]
    %v238 = vld [vmem:[#allocation2 + $0x630] sm:$0xff]
    %v239 = vld [vmem:[#allocation2 + $0x638] sm:$0xff]
    %v240 = vld [vmem:[#allocation2 + $0x640] sm:$0xff]
    %v241 = vld [vmem:[#allocation2 + $0x648] sm:$0xff]
    %v242 = vld [vmem:[#allocation2 + $0x650] sm:$0xff]
    %v243 = vld [vmem:[#allocation2 + $0x658] sm:$0xff]
    %v244 = vld [vmem:[#allocation2 + $0x660] sm:$0xff]
    %v245 = vld [vmem:[#allocation2 + $0x668] sm:$0xff]
    %v246 = vld [vmem:[#allocation2 + $0x670] sm:$0xff]
    %v247 = vld [vmem:[#allocation2 + $0x678] sm:$0xff]
    %v248 = vld [vmem:[#allocation2 + $0x680] sm:$0xff]
    %v249 = vld [vmem:[#allocation2 + $0x688] sm:$0xff]
    %v250 = vld [vmem:[#allocation2 + $0x690] sm:$0xff]
    %v251 = vld [vmem:[#allocation2 + $0x698] sm:$0xff]
    %v252 = vld [vmem:[#allocation2 + $0x6a0] sm:$0xff]
    %v253 = vld [vmem:[#allocation2 + $0x6a8] sm:$0xff]
    %v254 = vld [vmem:[#allocation2 + $0x6b0] sm:$0xff]
    %v255 = vld [vmem:[#allocation2 + $0x6b8] sm:$0xff]
    %v256 = vld [vmem:[#allocation2 + $0x6c0] sm:$0xff]
    %v257 = vld [vmem:[#allocation2 + $0x6c8] sm:$0xff]
    %v258 = vld [vmem:[#allocation2 + $0x6d0] sm:$0xff]
    %v259 = vld [vmem:[#allocation2 + $0x6d8] sm:$0xff]
    %v260 = vld [vmem:[#allocation2 + $0x6e0] sm:$0xff]
    %v261 = vld [vmem:[#allocation2 + $0x6e8] sm:$0xff]
    %v262 = vld [vmem:[#allocation2 + $0x6f0] sm:$0xff]
    %v263 = vld [vmem:[#allocation2 + $0x6f8] sm:$0xff]
    %v264 = vld [vmem:[#allocation2 + $0x700] sm:$0xff]
    %v265 = vld [vmem:[#allocation2 + $0x708] sm:$0xff]
    %v266 = vld [vmem:[#allocation2 + $0x710] sm:$0xff]
    %v267 = vld [vmem:[#allocation2 + $0x718] sm:$0xff]
    %v268 = vld [vmem:[#allocation2 + $0x720] sm:$0xff]
    %v269 = vld [vmem:[#allocation2 + $0x728] sm:$0xff]
    %v270 = vld [vmem:[#allocation2 + $0x730] sm:$0xff]
    %v271 = vld [vmem:[#allocation2 + $0x738] sm:$0xff]
    %v272 = vld [vmem:[#allocation2 + $0x740] sm:$0xff]
    %v273 = vld [vmem:[#allocation2 + $0x748] sm:$0xff]
    %v274 = vld [vmem:[#allocation2 + $0x750] sm:$0xff]
    %v275 = vld [vmem:[#allocation2 + $0x758] sm:$0xff]
    %v276 = vld [vmem:[#allocation2 + $0x760] sm:$0xff]
    %v277 = vld [vmem:[#allocation2 + $0x768] sm:$0xff]
    %v278 = vld [vmem:[#allocation2 + $0x770] sm:$0xff]
    %v279 = vld [vmem:[#allocation2 + $0x778] sm:$0xff]
    %v280 = vld [vmem:[#allocation2 + $0x780] sm:$0xff]
    %v281 = vld [vmem:[#allocation2 + $0x788] sm:$0xff]
    %v282 = vld [vmem:[#allocation2 + $0x790] sm:$0xff]
    %v283 = vld [vmem:[#allocation2 + $0x798] sm:$0xff]
    %v284 = vld [vmem:[#allocation2 + $0x7a0] sm:$0xff]
    %v285 = vld [vmem:[#allocation2 + $0x7a8] sm:$0xff]
    %v286 = vld [vmem:[#allocation2 + $0x7b0] sm:$0xff]
    %v287 = vld [vmem:[#allocation2 + $0x7b8] sm:$0xff]
    %v288 = vld [vmem:[#allocation2 + $0x7c0] sm:$0xff]
    %v289 = vld [vmem:[#allocation2 + $0x7c8] sm:$0xff]
    %v290 = vld [vmem:[#allocation2 + $0x7d0] sm:$0xff]
    %v291 = vld [vmem:[#allocation2 + $0x7d8] sm:$0xff]
    %v292 = vld [vmem:[#allocation2 + $0x7e0] sm:$0xff]
    %v293 = vld [vmem:[#allocation2 + $0x7e8] sm:$0xff]
    %v294 = vld [vmem:[#allocation2 + $0x7f0] sm:$0xff]
    %v295 = vld [vmem:[#allocation2 + $0x7f8] sm:$0xff]
    %v296 = vld [vmem:[#allocation2 + $0x800] sm:$0xff]
    %v297 = vld [vmem:[#allocation2 + $0x808] sm:$0xff]
    %v298 = vld [vmem:[#allocation2 + $0x810] sm:$0xff]
    %v299 = vld [vmem:[#allocation2 + $0x818] sm:$0xff]
    %v300 = vld [vmem:[#allocation2 + $0x820] sm:$0xff]
    %v301 = vld [vmem:[#allocation2 + $0x828] sm:$0xff]
    %v302 = vld [vmem:[#allocation2 + $0x830] sm:$0xff]
    %v303 = vld [vmem:[#allocation2 + $0x838] sm:$0xff]
    %v304 = vld [vmem:[#allocation2 + $0x840] sm:$0xff]
    %v305 = vld [vmem:[#allocation2 + $0x848] sm:$0xff]
    %v306 = vld [vmem:[#allocation2 + $0x850] sm:$0xff]
    %v307 = vld [vmem:[#allocation2 + $0x858] sm:$0xff]
    %v308 = vld [vmem:[#allocation2 + $0x860] sm:$0xff]
    %v309 = vld [vmem:[#allocation2 + $0x868] sm:$0xff]
    %v310 = vld [vmem:[#allocation2 + $0x870] sm:$0xff]
    %v311 = vld [vmem:[#allocation2 + $0x878] sm:$0xff]
    %v312 = vld [vmem:[#allocation2 + $0x880] sm:$0xff]
    %v313 = vld [vmem:[#allocation2 + $0x888] sm:$0xff]
    %v314 = vld [vmem:[#allocation2 + $0x890] sm:$0xff]
    %v315 = vld [vmem:[#allocation2 + $0x898] sm:$0xff]
    %v316 = vld [vmem:[#allocation2 + $0x8a0] sm:$0xff]
    %v317 = vld [vmem:[#allocation2 + $0x8a8] sm:$0xff]
    %v318 = vld [vmem:[#allocation2 + $0x8b0] sm:$0xff]
    %v319 = vld [vmem:[#allocation2 + $0x8b8] sm:$0xff]
    %v320 = vld [vmem:[#allocation2 + $0x8c0] sm:$0xff]
    %v321 = vld [vmem:[#allocation2 + $0x8c8] sm:$0xff]
    %v322 = vld [vmem:[#allocation2 + $0x8d0] sm:$0xff]
    %v323 = vld [vmem:[#allocation2 + $0x8d8] sm:$0xff]
    %v324 = vld [vmem:[#allocation2 + $0x8e0] sm:$0xff]
    %v325 = vld [vmem:[#allocation2 + $0x8e8] sm:$0xff]
    %v326 = vld [vmem:[#allocation2 + $0x8f0] sm:$0xff]
    %v327 = vld [vmem:[#allocation2 + $0x8f8] sm:$0xff]
    %v328 = vld [vmem:[#allocation2 + $0x900] sm:$0xff]
    %v329 = vld [vmem:[#allocation2 + $0x908] sm:$0xff]
    %v330 = vld [vmem:[#allocation2 + $0x910] sm:$0xff]
    %v331 = vld [vmem:[#allocation2 + $0x918] sm:$0xff]
    %v332 = vld [vmem:[#allocation2 + $0x920] sm:$0xff]
    %v333 = vld [vmem:[#allocation2 + $0x928] sm:$0xff]
    %v334 = vld [vmem:[#allocation2 + $0x930] sm:$0xff]
    %v335 = vld [vmem:[#allocation2 + $0x938] sm:$0xff]
    %v336 = vld [vmem:[#allocation2 + $0x940] sm:$0xff]
    %v337 = vld [vmem:[#allocation2 + $0x948] sm:$0xff]
    %v338 = vld [vmem:[#allocation2 + $0x950] sm:$0xff]
    %v339 = vld [vmem:[#allocation2 + $0x958] sm:$0xff]
    %v340 = vld [vmem:[#allocation2 + $0x960] sm:$0xff]
    %v341 = vld [vmem:[#allocation2 + $0x968] sm:$0xff]
    %v342 = vld [vmem:[#allocation2 + $0x970] sm:$0xff]
    %v343 = vld [vmem:[#allocation2 + $0x978] sm:$0xff]
    %v344 = vld [vmem:[#allocation2 + $0x980] sm:$0xff]
    %v345 = vld [vmem:[#allocation2 + $0x988] sm:$0xff]
    %v346 = vld [vmem:[#allocation2 + $0x990] sm:$0xff]
    %v347 = vld [vmem:[#allocation2 + $0x998] sm:$0xff]
    %v348 = vld [vmem:[#allocation2 + $0x9a0] sm:$0xff]
    %v349 = vld [vmem:[#allocation2 + $0x9a8] sm:$0xff]
    %v350 = vld [vmem:[#allocation2 + $0x9b0] sm:$0xff]
    %v351 = vld [vmem:[#allocation2 + $0x9b8] sm:$0xff]
    %v352 = vld [vmem:[#allocation2 + $0x9c0] sm:$0xff]
    %v353 = vld [vmem:[#allocation2 + $0x9c8] sm:$0xff]
    %v354 = vld [vmem:[#allocation2 + $0x9d0] sm:$0xff]
    %v355 = vld [vmem:[#allocation2 + $0x9d8] sm:$0xff]
    %v356 = vld [vmem:[#allocation2 + $0x9e0] sm:$0xff]
    %v357 = vld [vmem:[#allocation2 + $0x9e8] sm:$0xff]
    %v358 = vld [vmem:[#allocation2 + $0x9f0] sm:$0xff]
    %v359 = vld [vmem:[#allocation2 + $0x9f8] sm:$0xff]
    %v360 = vld [vmem:[#allocation2 + $0xa00] sm:$0xff]
    %v361 = vld [vmem:[#allocation2 + $0xa08] sm:$0xff]
    %v362 = vld [vmem:[#allocation2 + $0xa10] sm:$0xff]
    %v363 = vld [vmem:[#allocation2 + $0xa18] sm:$0xff]
    %v364 = vld [vmem:[#allocation2 + $0xa20] sm:$0xff]
    %v365 = vld [vmem:[#allocation2 + $0xa28] sm:$0xff]
    %v366 = vld [vmem:[#allocation2 + $0xa30] sm:$0xff]
    %v367 = vld [vmem:[#allocation2 + $0xa38] sm:$0xff]
    %v368 = vld [vmem:[#allocation2 + $0xa40] sm:$0xff]
    %v369 = vld [vmem:[#allocation2 + $0xa48] sm:$0xff]
    %v370 = vld [vmem:[#allocation2 + $0xa50] sm:$0xff]
    %v371 = vld [vmem:[#allocation2 + $0xa58] sm:$0xff]
    %v372 = vld [vmem:[#allocation2 + $0xa60] sm:$0xff]
    %v373 = vld [vmem:[#allocation2 + $0xa68] sm:$0xff]
    %v374 = vld [vmem:[#allocation2 + $0xa70] sm:$0xff]
    %v375 = vld [vmem:[#allocation2 + $0xa78] sm:$0xff]
    %v376 = vld [vmem:[#allocation2 + $0xa80] sm:$0xff]
    %v377 = vld [vmem:[#allocation2 + $0xa88] sm:$0xff]
    %v378 = vld [vmem:[#allocation2 + $0xa90] sm:$0xff]
    %v379 = vld [vmem:[#allocation2 + $0xa98] sm:$0xff]
    %v380 = vld [vmem:[#allocation2 + $0xaa0] sm:$0xff]
    %v381 = vld [vmem:[#allocation2 + $0xaa8] sm:$0xff]
    %v382 = vld [vmem:[#allocation2 + $0xab0] sm:$0xff]
    %v383 = vld [vmem:[#allocation2 + $0xab8] sm:$0xff]
    %v384 = vld [vmem:[#allocation2 + $0xac0] sm:$0xff]
    %v385 = vld [vmem:[#allocation2 + $0xac8] sm:$0xff]
    %v386 = vld [vmem:[#allocation2 + $0xad0] sm:$0xff]
    %v387 = vld [vmem:[#allocation2 + $0xad8] sm:$0xff]
    %v388 = vld [vmem:[#allocation2 + $0xae0] sm:$0xff]
    %v389 = vld [vmem:[#allocation2 + $0xae8] sm:$0xff]
    %v390 = vld [vmem:[#allocation2 + $0xaf0] sm:$0xff]
    %v391 = vld [vmem:[#allocation2 + $0xaf8] sm:$0xff]
    %v392 = vld [vmem:[#allocation2 + $0xb00] sm:$0xff]
    %v393 = vld [vmem:[#allocation2 + $0xb08] sm:$0xff]
    %v394 = vld [vmem:[#allocation2 + $0xb10] sm:$0xff]
    %v395 = vld [vmem:[#allocation2 + $0xb18] sm:$0xff]
    %v396 = vld [vmem:[#allocation2 + $0xb20] sm:$0xff]
    %v397 = vld [vmem:[#allocation2 + $0xb28] sm:$0xff]
    %v398 = vld [vmem:[#allocation2 + $0xb30] sm:$0xff]
    %v399 = vld [vmem:[#allocation2 + $0xb38] sm:$0xff]
    %v400 = vld [vmem:[#allocation2 + $0xb40] sm:$0xff]
    %v401 = vld [vmem:[#allocation2 + $0xb48] sm:$0xff]
    %v402 = vld [vmem:[#allocation2 + $0xb50] sm:$0xff]
    %v403 = vld [vmem:[#allocation2 + $0xb58] sm:$0xff]
    %v404 = vld [vmem:[#allocation2 + $0xb60] sm:$0xff]
    %v405 = vld [vmem:[#allocation2 + $0xb68] sm:$0xff]
    %v406 = vld [vmem:[#allocation2 + $0xb70] sm:$0xff]
    %v407 = vld [vmem:[#allocation2 + $0xb78] sm:$0xff]
    %v408 = vld [vmem:[#allocation2 + $0xb80] sm:$0xff]
    %v409 = vld [vmem:[#allocation2 + $0xb88] sm:$0xff]
    %v410 = vld [vmem:[#allocation2 + $0xb90] sm:$0xff]
    %v411 = vld [vmem:[#allocation2 + $0xb98] sm:$0xff]
    %v412 = vld [vmem:[#allocation2 + $0xba0] sm:$0xff]
    %v413 = vld [vmem:[#allocation2 + $0xba8] sm:$0xff]
    %v414 = vld [vmem:[#allocation2 + $0xbb0] sm:$0xff]
    %v415 = vld [vmem:[#allocation2 + $0xbb8] sm:$0xff]
    %v416 = vld [vmem:[#allocation2 + $0xbc0] sm:$0xff]
    %v417 = vld [vmem:[#allocation2 + $0xbc8] sm:$0xff]
    %v418 = vld [vmem:[#allocation2 + $0xbd0] sm:$0xff]
    %v419 = vld [vmem:[#allocation2 + $0xbd8] sm:$0xff]
    %v420 = vld [vmem:[#allocation2 + $0xbe0] sm:$0xff]
    %v421 = vld [vmem:[#allocation2 + $0xbe8] sm:$0xff]
    %v422 = vld [vmem:[#allocation2 + $0xbf0] sm:$0xff]
    %v423 = vld [vmem:[#allocation2 + $0xbf8] sm:$0xff]
    %v424 = vld [vmem:[#allocation2 + $0xc00] sm:$0xff]
    %v425 = vld [vmem:[#allocation2 + $0xc08] sm:$0xff]
    %v426 = vld [vmem:[#allocation2 + $0xc10] sm:$0xff]
    %v427 = vld [vmem:[#allocation2 + $0xc18] sm:$0xff]
    %v428 = vld [vmem:[#allocation2 + $0xc20] sm:$0xff]
    %v429 = vld [vmem:[#allocation2 + $0xc28] sm:$0xff]
    %v430 = vld [vmem:[#allocation2 + $0xc30] sm:$0xff]
    %v431 = vld [vmem:[#allocation2 + $0xc38] sm:$0xff]
    %v432 = vld [vmem:[#allocation2 + $0xc40] sm:$0xff]
    %v433 = vld [vmem:[#allocation2 + $0xc48] sm:$0xff]
    %v434 = vld [vmem:[#allocation2 + $0xc50] sm:$0xff]
    %v435 = vld [vmem:[#allocation2 + $0xc58] sm:$0xff]
    %v436 = vld [vmem:[#allocation2 + $0xc60] sm:$0xff]
    %v437 = vld [vmem:[#allocation2 + $0xc68] sm:$0xff]
    %v438 = vld [vmem:[#allocation2 + $0xc70] sm:$0xff]
    %v439 = vld [vmem:[#allocation2 + $0xc78] sm:$0xff]
    %v440 = vld [vmem:[#allocation2 + $0xc80] sm:$0xff]
    %v441 = vld [vmem:[#allocation2 + $0xc88] sm:$0xff]
    %v442 = vld [vmem:[#allocation2 + $0xc90] sm:$0xff]
    %v443 = vld [vmem:[#allocation2 + $0xc98] sm:$0xff]
    %v444 = vld [vmem:[#allocation2 + $0xca0] sm:$0xff]
    %v445 = vld [vmem:[#allocation2 + $0xca8] sm:$0xff]
    %v446 = vld [vmem:[#allocation2 + $0xcb0] sm:$0xff]
    %v447 = vld [vmem:[#allocation2 + $0xcb8] sm:$0xff]
    %v448 = vld [vmem:[#allocation2 + $0xcc0] sm:$0xff]
    %v449 = vld [vmem:[#allocation2 + $0xcc8] sm:$0xff]
    %v450 = vld [vmem:[#allocation2 + $0xcd0] sm:$0xff]
    %v451 = vld [vmem:[#allocation2 + $0xcd8] sm:$0xff]
    %v452 = vld [vmem:[#allocation2 + $0xce0] sm:$0xff]
    %v453 = vld [vmem:[#allocation2 + $0xce8] sm:$0xff]
    %v454 = vld [vmem:[#allocation2 + $0xcf0] sm:$0xff]
    %v455 = vld [vmem:[#allocation2 + $0xcf8] sm:$0xff]
    %v456 = vld [vmem:[#allocation2 + $0xd00] sm:$0xff]
    %v457 = vld [vmem:[#allocation2 + $0xd08] sm:$0xff]
    %v458 = vld [vmem:[#allocation2 + $0xd10] sm:$0xff]
    %v459 = vld [vmem:[#allocation2 + $0xd18] sm:$0xff]
    %v460 = vld [vmem:[#allocation2 + $0xd20] sm:$0xff]
    %v461 = vld [vmem:[#allocation2 + $0xd28] sm:$0xff]
    %v462 = vld [vmem:[#allocation2 + $0xd30] sm:$0xff]
    %v463 = vld [vmem:[#allocation2 + $0xd38] sm:$0xff]
    %v464 = vld [vmem:[#allocation2 + $0xd40] sm:$0xff]
    %v465 = vld [vmem:[#allocation2 + $0xd48] sm:$0xff]
    %v466 = vld [vmem:[#allocation2 + $0xd50] sm:$0xff]
    %v467 = vld [vmem:[#allocation2 + $0xd58] sm:$0xff]
    %v468 = vld [vmem:[#allocation2 + $0xd60] sm:$0xff]
    %v469 = vld [vmem:[#allocation2 + $0xd68] sm:$0xff]
    %v470 = vld [vmem:[#allocation2 + $0xd70] sm:$0xff]
    %v471 = vld [vmem:[#allocation2 + $0xd78] sm:$0xff]
    %v472 = vld [vmem:[#allocation2 + $0xd80] sm:$0xff]
    %v473 = vld [vmem:[#allocation2 + $0xd88] sm:$0xff]
    %v474 = vld [vmem:[#allocation2 + $0xd90] sm:$0xff]
    %v475 = vld [vmem:[#allocation2 + $0xd98] sm:$0xff]
    %v476 = vld [vmem:[#allocation2 + $0xda0] sm:$0xff]
    %v477 = vld [vmem:[#allocation2 + $0xda8] sm:$0xff]
    %v478 = vld [vmem:[#allocation2 + $0xdb0] sm:$0xff]
    %v479 = vld [vmem:[#allocation2 + $0xdb8] sm:$0xff]
    %v480 = vld [vmem:[#allocation2 + $0xdc0] sm:$0xff]
    %v481 = vld [vmem:[#allocation2 + $0xdc8] sm:$0xff]
    %v482 = vld [vmem:[#allocation2 + $0xdd0] sm:$0xff]
    %v483 = vld [vmem:[#allocation2 + $0xdd8] sm:$0xff]
    %v484 = vld [vmem:[#allocation2 + $0xde0] sm:$0xff]
    %v485 = vld [vmem:[#allocation2 + $0xde8] sm:$0xff]
    %v486 = vld [vmem:[#allocation2 + $0xdf0] sm:$0xff]
    %v487 = vld [vmem:[#allocation2 + $0xdf8] sm:$0xff]
    %v488 = vld [vmem:[#allocation2 + $0xe00] sm:$0xff]
    %v489 = vld [vmem:[#allocation2 + $0xe08] sm:$0xff]
    %v490 = vld [vmem:[#allocation2 + $0xe10] sm:$0xff]
    %v491 = vld [vmem:[#allocation2 + $0xe18] sm:$0xff]
    %v492 = vld [vmem:[#allocation2 + $0xe20] sm:$0xff]
    %v493 = vld [vmem:[#allocation2 + $0xe28] sm:$0xff]
    %v494 = vld [vmem:[#allocation2 + $0xe30] sm:$0xff]
    %v495 = vld [vmem:[#allocation2 + $0xe38] sm:$0xff]
    %v496 = vld [vmem:[#allocation2 + $0xe40] sm:$0xff]
    %v497 = vld [vmem:[#allocation2 + $0xe48] sm:$0xff]
    %v498 = vld [vmem:[#allocation2 + $0xe50] sm:$0xff]
    %v499 = vld [vmem:[#allocation2 + $0xe58] sm:$0xff]
    %v500 = vld [vmem:[#allocation2 + $0xe60] sm:$0xff]
    %v501 = vld [vmem:[#allocation2 + $0xe68] sm:$0xff]
    %v502 = vld [vmem:[#allocation2 + $0xe70] sm:$0xff]
    %v503 = vld [vmem:[#allocation2 + $0xe78] sm:$0xff]
    %v504 = vld [vmem:[#allocation2 + $0xe80] sm:$0xff]
    %v505 = vld [vmem:[#allocation2 + $0xe88] sm:$0xff]
    %v506 = vld [vmem:[#allocation2 + $0xe90] sm:$0xff]
    %v507 = vld [vmem:[#allocation2 + $0xe98] sm:$0xff]
    %v508 = vld [vmem:[#allocation2 + $0xea0] sm:$0xff]
    %v509 = vld [vmem:[#allocation2 + $0xea8] sm:$0xff]
    %v510 = vld [vmem:[#allocation2 + $0xeb0] sm:$0xff]
    %v511 = vld [vmem:[#allocation2 + $0xeb8] sm:$0xff]
    %v512 = vld [vmem:[#allocation2 + $0xec0] sm:$0xff]
    %v513 = vld [vmem:[#allocation2 + $0xec8] sm:$0xff]
    %v514 = vld [vmem:[#allocation2 + $0xed0] sm:$0xff]
    %v515 = vld [vmem:[#allocation2 + $0xed8] sm:$0xff]
    %v516 = vld [vmem:[#allocation2 + $0xee0] sm:$0xff]
    %v517 = vld [vmem:[#allocation2 + $0xee8] sm:$0xff]
    %v518 = vld [vmem:[#allocation2 + $0xef0] sm:$0xff]
    %v519 = vld [vmem:[#allocation2 + $0xef8] sm:$0xff]
    %v520 = vld [vmem:[#allocation2 + $0xf00] sm:$0xff]
    %v521 = vld [vmem:[#allocation2 + $0xf08] sm:$0xff]
    %v522 = vld [vmem:[#allocation2 + $0xf10] sm:$0xff]
    %v523 = vld [vmem:[#allocation2 + $0xf18] sm:$0xff]
    %v524 = vld [vmem:[#allocation2 + $0xf20] sm:$0xff]
    %v525 = vld [vmem:[#allocation2 + $0xf28] sm:$0xff]
    %v526 = vld [vmem:[#allocation2 + $0xf30] sm:$0xff]
    %v527 = vld [vmem:[#allocation2 + $0xf38] sm:$0xff]
    %v528 = vld [vmem:[#allocation2 + $0xf40] sm:$0xff]
    %v529 = vld [vmem:[#allocation2 + $0xf48] sm:$0xff]
    %v530 = vld [vmem:[#allocation2 + $0xf50] sm:$0xff]
    %v531 = vld [vmem:[#allocation2 + $0xf58] sm:$0xff]
    %v532 = vld [vmem:[#allocation2 + $0xf60] sm:$0xff]
    %v533 = vld [vmem:[#allocation2 + $0xf68] sm:$0xff]
    %v534 = vld [vmem:[#allocation2 + $0xf70] sm:$0xff]
    %v535 = vld [vmem:[#allocation2 + $0xf78] sm:$0xff]
    %v536 = vld [vmem:[#allocation2 + $0xf80] sm:$0xff]
    %v537 = vld [vmem:[#allocation2 + $0xf88] sm:$0xff]
    %v538 = vld [vmem:[#allocation2 + $0xf90] sm:$0xff]
    %v539 = vld [vmem:[#allocation2 + $0xf98] sm:$0xff]
    %v540 = vld [vmem:[#allocation2 + $0xfa0] sm:$0xff]
    %v541 = vld [vmem:[#allocation2 + $0xfa8] sm:$0xff]
    %v542 = vld [vmem:[#allocation2 + $0xfb0] sm:$0xff]
    %v543 = vld [vmem:[#allocation2 + $0xfb8] sm:$0xff]
    %v544 = vld [vmem:[#allocation2 + $0xfc0] sm:$0xff]
    %v545 = vld [vmem:[#allocation2 + $0xfc8] sm:$0xff]
    %v546 = vld [vmem:[#allocation2 + $0xfd0] sm:$0xff]
    %v547 = vld [vmem:[#allocation2 + $0xfd8] sm:$0xff]
    %v548 = vld [vmem:[#allocation2 + $0xfe0] sm:$0xff]
    %v549 = vld [vmem:[#allocation2 + $0xfe8] sm:$0xff]
    %v550 = vld [vmem:[#allocation2 + $0xff0] sm:$0xff]
    %v551 = vld [vmem:[#allocation2 + $0xff8] sm:$0xff]
    %v552 = vld [vmem:[#allocation2 + $0x1000] sm:$0xff]
    %v553 = vld [vmem:[#allocation2 + $0x1008] sm:$0xff]
    %v554 = vld [vmem:[#allocation2 + $0x1010] sm:$0xff]
    %v555 = vld [vmem:[#allocation2 + $0x1018] sm:$0xff]
    %v556 = vld [vmem:[#allocation2 + $0x1020] sm:$0xff]
    %v557 = vld [vmem:[#allocation2 + $0x1028] sm:$0xff]
    %v558 = vld [vmem:[#allocation2 + $0x1030] sm:$0xff]
    %v559 = vld [vmem:[#allocation2 + $0x1038] sm:$0xff]
    %v560 = vld [vmem:[#allocation2 + $0x1040] sm:$0xff]
    %v561 = vld [vmem:[#allocation2 + $0x1048] sm:$0xff]
    %v562 = vld [vmem:[#allocation2 + $0x1050] sm:$0xff]
    %v563 = vld [vmem:[#allocation2 + $0x1058] sm:$0xff]
    %v564 = vld [vmem:[#allocation2 + $0x1060] sm:$0xff]
    %v565 = vld [vmem:[#allocation2 + $0x1068] sm:$0xff]
    %v566 = vld [vmem:[#allocation2 + $0x1070] sm:$0xff]
    %v567 = vld [vmem:[#allocation2 + $0x1078] sm:$0xff]
    %v568 = vld [vmem:[#allocation2 + $0x1080] sm:$0xff]
    %v569 = vld [vmem:[#allocation2 + $0x1088] sm:$0xff]
    %v570 = vld [vmem:[#allocation2 + $0x1090] sm:$0xff]
    %v571 = vld [vmem:[#allocation2 + $0x1098] sm:$0xff]
    %v572 = vld [vmem:[#allocation2 + $0x10a0] sm:$0xff]
    %v573 = vld [vmem:[#allocation2 + $0x10a8] sm:$0xff]
    %v574 = vld [vmem:[#allocation2 + $0x10b0] sm:$0xff]
    %v575 = vld [vmem:[#allocation2 + $0x10b8] sm:$0xff]
    %v576 = vld [vmem:[#allocation2 + $0x10c0] sm:$0xff]
    %v577 = vld [vmem:[#allocation2 + $0x10c8] sm:$0xff]
    %v578 = vld [vmem:[#allocation2 + $0x10d0] sm:$0xff]
    %v579 = vld [vmem:[#allocation2 + $0x10d8] sm:$0xff]
    %v580 = vld [vmem:[#allocation2 + $0x10e0] sm:$0xff]
    %v581 = vld [vmem:[#allocation2 + $0x10e8] sm:$0xff]
    %v582 = vld [vmem:[#allocation2 + $0x10f0] sm:$0xff]
    %v583 = vld [vmem:[#allocation2 + $0x10f8] sm:$0xff]
    %v584 = vld [vmem:[#allocation2 + $0x1100] sm:$0xff]
    %v585 = vld [vmem:[#allocation2 + $0x1108] sm:$0xff]
    %v586 = vld [vmem:[#allocation2 + $0x1110] sm:$0xff]
    %v587 = vld [vmem:[#allocation2 + $0x1118] sm:$0xff]
    %v588 = vld [vmem:[#allocation2 + $0x1120] sm:$0xff]
    %v589 = vld [vmem:[#allocation2 + $0x1128] sm:$0xff]
    %v590 = vld [vmem:[#allocation2 + $0x1130] sm:$0xff]
    %v591 = vld [vmem:[#allocation2 + $0x1138] sm:$0xff]
    %v592 = vld [vmem:[#allocation2 + $0x1140] sm:$0xff]
    %v593 = vld [vmem:[#allocation2 + $0x1148] sm:$0xff]
    %v594 = vld [vmem:[#allocation2 + $0x1150] sm:$0xff]
    %v595 = vld [vmem:[#allocation2 + $0x1158] sm:$0xff]
    %v596 = vld [vmem:[#allocation2 + $0x1160] sm:$0xff]
    %v597 = vld [vmem:[#allocation2 + $0x1168] sm:$0xff]
    %v598 = vld [vmem:[#allocation2 + $0x1170] sm:$0xff]
    %v599 = vld [vmem:[#allocation2 + $0x1178] sm:$0xff]
    %v600 = vld [vmem:[#allocation2 + $0x1180] sm:$0xff]
    %v601 = vld [vmem:[#allocation2 + $0x1188] sm:$0xff]
    %v602 = vld [vmem:[#allocation2 + $0x1190] sm:$0xff]
    %v603 = vld [vmem:[#allocation2 + $0x1198] sm:$0xff]
    %v604 = vld [vmem:[#allocation2 + $0x11a0] sm:$0xff]
    %v605 = vld [vmem:[#allocation2 + $0x11a8] sm:$0xff]
    %v606 = vld [vmem:[#allocation2 + $0x11b0] sm:$0xff]
    %v607 = vld [vmem:[#allocation2 + $0x11b8] sm:$0xff]
    %v608 = vld [vmem:[#allocation2 + $0x11c0] sm:$0xff]
    %v609 = vld [vmem:[#allocation2 + $0x11c8] sm:$0xff]
    %v610 = vld [vmem:[#allocation2 + $0x11d0] sm:$0xff]
    %v611 = vld [vmem:[#allocation2 + $0x11d8] sm:$0xff]
    %v612 = vld [vmem:[#allocation2 + $0x11e0] sm:$0xff]
    %v613 = vld [vmem:[#allocation2 + $0x11e8] sm:$0xff]
    %v614 = vld [vmem:[#allocation2 + $0x11f0] sm:$0xff]
    %v615 = vld [vmem:[#allocation2 + $0x11f8] sm:$0xff]
    %v616 = vld [vmem:[#allocation2 + $0x1200] sm:$0xff]
    %v617 = vld [vmem:[#allocation2 + $0x1208] sm:$0xff]
    %v618 = vld [vmem:[#allocation2 + $0x1210] sm:$0xff]
    %v619 = vld [vmem:[#allocation2 + $0x1218] sm:$0xff]
    %v620 = vld [vmem:[#allocation2 + $0x1220] sm:$0xff]
    %v621 = vld [vmem:[#allocation2 + $0x1228] sm:$0xff]
    %v622 = vld [vmem:[#allocation2 + $0x1230] sm:$0xff]
    %v623 = vld [vmem:[#allocation2 + $0x1238] sm:$0xff]
    %v624 = vld [vmem:[#allocation2 + $0x1240] sm:$0xff]
    %v625 = vld [vmem:[#allocation2 + $0x1248] sm:$0xff]
    %v626 = vld [vmem:[#allocation2 + $0x1250] sm:$0xff]
    %v627 = vld [vmem:[#allocation2 + $0x1258] sm:$0xff]
    %v628 = vld [vmem:[#allocation2 + $0x1260] sm:$0xff]
    %v629 = vld [vmem:[#allocation2 + $0x1268] sm:$0xff]
    %v630 = vld [vmem:[#allocation2 + $0x1270] sm:$0xff]
    %v631 = vld [vmem:[#allocation2 + $0x1278] sm:$0xff]
    %v632 = vld [vmem:[#allocation2 + $0x1280] sm:$0xff]
    %v633 = vld [vmem:[#allocation2 + $0x1288] sm:$0xff]
    %v634 = vld [vmem:[#allocation2 + $0x1290] sm:$0xff]
    %v635 = vld [vmem:[#allocation2 + $0x1298] sm:$0xff]
    %v636 = vld [vmem:[#allocation2 + $0x12a0] sm:$0xff]
    %v637 = vld [vmem:[#allocation2 + $0x12a8] sm:$0xff]
    %v638 = vld [vmem:[#allocation2 + $0x12b0] sm:$0xff]
    %v639 = vld [vmem:[#allocation2 + $0x12b8] sm:$0xff]
    %v640 = vld [vmem:[#allocation2 + $0x12c0] sm:$0xff]
    %v641 = vld [vmem:[#allocation2 + $0x12c8] sm:$0xff]
    %v642 = vld [vmem:[#allocation2 + $0x12d0] sm:$0xff]
    %v643 = vld [vmem:[#allocation2 + $0x12d8] sm:$0xff]
    %v644 = vld [vmem:[#allocation2 + $0x12e0] sm:$0xff]
    %v645 = vld [vmem:[#allocation2 + $0x12e8] sm:$0xff]
    %v646 = vld [vmem:[#allocation2 + $0x12f0] sm:$0xff]
    %v647 = vld [vmem:[#allocation2 + $0x12f8] sm:$0xff]
    %v648 = vld [vmem:[#allocation2 + $0x1300] sm:$0xff]
    %v649 = vld [vmem:[#allocation2 + $0x1308] sm:$0xff]
    %v650 = vld [vmem:[#allocation2 + $0x1310] sm:$0xff]
    %v651 = vld [vmem:[#allocation2 + $0x1318] sm:$0xff]
    %v652 = vld [vmem:[#allocation2 + $0x1320] sm:$0xff]
    %v653 = vld [vmem:[#allocation2 + $0x1328] sm:$0xff]
    %v654 = vld [vmem:[#allocation2 + $0x1330] sm:$0xff]
    %v655 = vld [vmem:[#allocation2 + $0x1338] sm:$0xff]
    %v656 = vld [vmem:[#allocation2 + $0x1340] sm:$0xff]
    %v657 = vld [vmem:[#allocation2 + $0x1348] sm:$0xff]
    %v658 = vld [vmem:[#allocation2 + $0x1350] sm:$0xff]
    %v659 = vld [vmem:[#allocation2 + $0x1358] sm:$0xff]
    %v660 = vld [vmem:[#allocation2 + $0x1360] sm:$0xff]
    %v661 = vld [vmem:[#allocation2 + $0x1368] sm:$0xff]
    %v662 = vld [vmem:[#allocation2 + $0x1370] sm:$0xff]
    %v663 = vld [vmem:[#allocation2 + $0x1378] sm:$0xff]
    %v664 = vld [vmem:[#allocation2 + $0x1380] sm:$0xff]
    %v665 = vld [vmem:[#allocation2 + $0x1388] sm:$0xff]
    %v666 = vld [vmem:[#allocation2 + $0x1390] sm:$0xff]
    %v667 = vld [vmem:[#allocation2 + $0x1398] sm:$0xff]
    %v668 = vld [vmem:[#allocation2 + $0x13a0] sm:$0xff]
    %v669 = vld [vmem:[#allocation2 + $0x13a8] sm:$0xff]
    %v670 = vld [vmem:[#allocation2 + $0x13b0] sm:$0xff]
    %v671 = vld [vmem:[#allocation2 + $0x13b8] sm:$0xff]
    %v672 = vld [vmem:[#allocation2 + $0x13c0] sm:$0xff]
    %v673 = vld [vmem:[#allocation2 + $0x13c8] sm:$0xff]
    %v674 = vld [vmem:[#allocation2 + $0x13d0] sm:$0xff]
    %v675 = vld [vmem:[#allocation2 + $0x13d8] sm:$0xff]
    %v676 = vld [vmem:[#allocation2 + $0x13e0] sm:$0xff]
    %v677 = vld [vmem:[#allocation2 + $0x13e8] sm:$0xff]
    %v678 = vld [vmem:[#allocation2 + $0x13f0] sm:$0xff]
    %v679 = vld [vmem:[#allocation2 + $0x13f8] sm:$0xff]
    %v680 = vadd.f32 %v40, %v41
    %681 = vadd.xlane.f32.xlu0 %v680
    %v682 = vpop.xlane.xlu0 %681
    %v683 = vadd.f32 %v42, %v43
    %684 = vadd.xlane.f32.xlu0 %v683
    %v685 = vpop.xlane.xlu0 %684
    %v686 = vadd.f32 %v44, %v45
    %687 = vadd.xlane.f32.xlu0 %v686
    %v688 = vpop.xlane.xlu0 %687
    %v689 = vadd.f32 %v46, %v47
    %690 = vadd.xlane.f32.xlu0 %v689
    %v691 = vpop.xlane.xlu0 %690
    %v692 = vadd.f32 %v48, %v49
    %693 = vadd.xlane.f32.xlu0 %v692
    %v694 = vpop.xlane.xlu0 %693
    %v695 = vadd.f32 %v50, %v51
    %696 = vadd.xlane.f32.xlu0 %v695
    %v697 = vpop.xlane.xlu0 %696
    %v698 = vadd.f32 %v52, %v53
    %699 = vadd.xlane.f32.xlu0 %v698
    %v700 = vpop.xlane.xlu0 %699
    %v701 = vadd.f32 %v54, %v55
    %702 = vadd.xlane.f32.xlu0 %v701
    %v703 = vpop.xlane.xlu0 %702
    %v704 = vadd.f32 %v56, %v57
    %705 = vadd.xlane.f32.xlu0 %v704
    %v706 = vpop.xlane.xlu0 %705
    %v707 = vadd.f32 %v58, %v59
    %708 = vadd.xlane.f32.xlu0 %v707
    %v709 = vpop.xlane.xlu0 %708
    %v710 = vadd.f32 %v60, %v61
    %711 = vadd.xlane.f32.xlu0 %v710
    %v712 = vpop.xlane.xlu0 %711
    %v713 = vadd.f32 %v62, %v63
    %714 = vadd.xlane.f32.xlu0 %v713
    %v715 = vpop.xlane.xlu0 %714
    %v716 = vadd.f32 %v64, %v65
    %717 = vadd.xlane.f32.xlu0 %v716
    %v718 = vpop.xlane.xlu0 %717
    %v719 = vadd.f32 %v66, %v67
    %720 = vadd.xlane.f32.xlu0 %v719
    %v721 = vpop.xlane.xlu0 %720
    %v722 = vadd.f32 %v68, %v69
    %723 = vadd.xlane.f32.xlu0 %v722
    %v724 = vpop.xlane.xlu0 %723
    %v725 = vadd.f32 %v70, %v71
    %726 = vadd.xlane.f32.xlu0 %v725
    %v727 = vpop.xlane.xlu0 %726
    %v728 = vadd.f32 %v72, %v73
    %729 = vadd.xlane.f32.xlu0 %v728
    %v730 = vpop.xlane.xlu0 %729
    %v731 = vadd.f32 %v74, %v75
    %732 = vadd.xlane.f32.xlu0 %v731
    %v733 = vpop.xlane.xlu0 %732
    %v734 = vadd.f32 %v76, %v77
    %735 = vadd.xlane.f32.xlu0 %v734
    %v736 = vpop.xlane.xlu0 %735
    %v737 = vadd.f32 %v78, %v79
    %738 = vadd.xlane.f32.xlu0 %v737
    %v739 = vpop.xlane.xlu0 %738
    %v740 = vadd.f32 %v80, %v81
    %741 = vadd.xlane.f32.xlu0 %v740
    %v742 = vpop.xlane.xlu0 %741
    %v743 = vadd.f32 %v82, %v83
    %744 = vadd.xlane.f32.xlu0 %v743
    %v745 = vpop.xlane.xlu0 %744
    %v746 = vadd.f32 %v84, %v85
    %747 = vadd.xlane.f32.xlu0 %v746
    %v748 = vpop.xlane.xlu0 %747
    %v749 = vadd.f32 %v86, %v87
    %750 = vadd.xlane.f32.xlu0 %v749
    %v751 = vpop.xlane.xlu0 %750
    %v752 = vadd.f32 %v88, %v89
    %753 = vadd.xlane.f32.xlu0 %v752
    %v754 = vpop.xlane.xlu0 %753
    %v755 = vadd.f32 %v90, %v91
    %756 = vadd.xlane.f32.xlu0 %v755
    %v757 = vpop.xlane.xlu0 %756
    %v758 = vadd.f32 %v92, %v93
    %759 = vadd.xlane.f32.xlu0 %v758
    %v760 = vpop.xlane.xlu0 %759
    %v761 = vadd.f32 %v94, %v95
    %762 = vadd.xlane.f32.xlu0 %v761
    %v763 = vpop.xlane.xlu0 %762
    %v764 = vadd.f32 %v96, %v97
    %765 = vadd.xlane.f32.xlu0 %v764
    %v766 = vpop.xlane.xlu0 %765
    %v767 = vadd.f32 %v98, %v99
    %768 = vadd.xlane.f32.xlu0 %v767
    %v769 = vpop.xlane.xlu0 %768
    %v770 = vadd.f32 %v100, %v101
    %771 = vadd.xlane.f32.xlu0 %v770
    %v772 = vpop.xlane.xlu0 %771
    %v773 = vadd.f32 %v102, %v103
    %774 = vadd.xlane.f32.xlu0 %v773
    %v775 = vpop.xlane.xlu0 %774
    %v776 = vadd.f32 %v104, %v105
    %777 = vadd.xlane.f32.xlu0 %v776
    %v778 = vpop.xlane.xlu0 %777
    %v779 = vadd.f32 %v106, %v107
    %780 = vadd.xlane.f32.xlu0 %v779
    %v781 = vpop.xlane.xlu0 %780
    %v782 = vadd.f32 %v108, %v109
    %783 = vadd.xlane.f32.xlu0 %v782
    %v784 = vpop.xlane.xlu0 %783
    %v785 = vadd.f32 %v110, %v111
    %786 = vadd.xlane.f32.xlu0 %v785
    %v787 = vpop.xlane.xlu0 %786
    %v788 = vadd.f32 %v112, %v113
    %789 = vadd.xlane.f32.xlu0 %v788
    %v790 = vpop.xlane.xlu0 %789
    %v791 = vadd.f32 %v114, %v115
    %792 = vadd.xlane.f32.xlu0 %v791
    %v793 = vpop.xlane.xlu0 %792
    %v794 = vadd.f32 %v116, %v117
    %795 = vadd.xlane.f32.xlu0 %v794
    %v796 = vpop.xlane.xlu0 %795
    %v797 = vadd.f32 %v118, %v119
    %798 = vadd.xlane.f32.xlu0 %v797
    %v799 = vpop.xlane.xlu0 %798
    %v800 = vadd.f32 %v120, %v121
    %801 = vadd.xlane.f32.xlu0 %v800
    %v802 = vpop.xlane.xlu0 %801
    %v803 = vadd.f32 %v122, %v123
    %804 = vadd.xlane.f32.xlu0 %v803
    %v805 = vpop.xlane.xlu0 %804
    %v806 = vadd.f32 %v124, %v125
    %807 = vadd.xlane.f32.xlu0 %v806
    %v808 = vpop.xlane.xlu0 %807
    %v809 = vadd.f32 %v126, %v127
    %810 = vadd.xlane.f32.xlu0 %v809
    %v811 = vpop.xlane.xlu0 %810
    %v812 = vadd.f32 %v128, %v129
    %813 = vadd.xlane.f32.xlu0 %v812
    %v814 = vpop.xlane.xlu0 %813
    %v815 = vadd.f32 %v130, %v131
    %816 = vadd.xlane.f32.xlu0 %v815
    %v817 = vpop.xlane.xlu0 %816
    %v818 = vadd.f32 %v132, %v133
    %819 = vadd.xlane.f32.xlu0 %v818
    %v820 = vpop.xlane.xlu0 %819
    %v821 = vadd.f32 %v134, %v135
    %822 = vadd.xlane.f32.xlu0 %v821
    %v823 = vpop.xlane.xlu0 %822
    %v824 = vadd.f32 %v136, %v137
    %825 = vadd.xlane.f32.xlu0 %v824
    %v826 = vpop.xlane.xlu0 %825
    %v827 = vadd.f32 %v138, %v139
    %828 = vadd.xlane.f32.xlu0 %v827
    %v829 = vpop.xlane.xlu0 %828
    %v830 = vadd.f32 %v140, %v141
    %831 = vadd.xlane.f32.xlu0 %v830
    %v832 = vpop.xlane.xlu0 %831
    %v833 = vadd.f32 %v142, %v143
    %834 = vadd.xlane.f32.xlu0 %v833
    %v835 = vpop.xlane.xlu0 %834
    %v836 = vadd.f32 %v144, %v145
    %837 = vadd.xlane.f32.xlu0 %v836
    %v838 = vpop.xlane.xlu0 %837
    %v839 = vadd.f32 %v146, %v147
    %840 = vadd.xlane.f32.xlu0 %v839
    %v841 = vpop.xlane.xlu0 %840
    %v842 = vadd.f32 %v148, %v149
    %843 = vadd.xlane.f32.xlu0 %v842
    %v844 = vpop.xlane.xlu0 %843
    %v845 = vadd.f32 %v150, %v151
    %846 = vadd.xlane.f32.xlu0 %v845
    %v847 = vpop.xlane.xlu0 %846
    %v848 = vadd.f32 %v152, %v153
    %849 = vadd.xlane.f32.xlu0 %v848
    %v850 = vpop.xlane.xlu0 %849
    %v851 = vadd.f32 %v154, %v155
    %852 = vadd.xlane.f32.xlu0 %v851
    %v853 = vpop.xlane.xlu0 %852
    %v854 = vadd.f32 %v156, %v157
    %855 = vadd.xlane.f32.xlu0 %v854
    %v856 = vpop.xlane.xlu0 %855
    %v857 = vadd.f32 %v158, %v159
    %858 = vadd.xlane.f32.xlu0 %v857
    %v859 = vpop.xlane.xlu0 %858
    %v860 = vadd.f32 %v160, %v161
    %861 = vadd.xlane.f32.xlu0 %v860
    %v862 = vpop.xlane.xlu0 %861
    %v863 = vadd.f32 %v162, %v163
    %864 = vadd.xlane.f32.xlu0 %v863
    %v865 = vpop.xlane.xlu0 %864
    %v866 = vadd.f32 %v164, %v165
    %867 = vadd.xlane.f32.xlu0 %v866
    %v868 = vpop.xlane.xlu0 %867
    %v869 = vadd.f32 %v166, %v167
    %870 = vadd.xlane.f32.xlu0 %v869
    %v871 = vpop.xlane.xlu0 %870
    %v872 = vadd.f32 %v168, %v169
    %873 = vadd.xlane.f32.xlu0 %v872
    %v874 = vpop.xlane.xlu0 %873
    %v875 = vadd.f32 %v170, %v171
    %876 = vadd.xlane.f32.xlu0 %v875
    %v877 = vpop.xlane.xlu0 %876
    %v878 = vadd.f32 %v172, %v173
    %879 = vadd.xlane.f32.xlu0 %v878
    %v880 = vpop.xlane.xlu0 %879
    %v881 = vadd.f32 %v174, %v175
    %882 = vadd.xlane.f32.xlu0 %v881
    %v883 = vpop.xlane.xlu0 %882
    %v884 = vadd.f32 %v176, %v177
    %885 = vadd.xlane.f32.xlu0 %v884
    %v886 = vpop.xlane.xlu0 %885
    %v887 = vadd.f32 %v178, %v179
    %888 = vadd.xlane.f32.xlu0 %v887
    %v889 = vpop.xlane.xlu0 %888
    %v890 = vadd.f32 %v180, %v181
    %891 = vadd.xlane.f32.xlu0 %v890
    %v892 = vpop.xlane.xlu0 %891
    %v893 = vadd.f32 %v182, %v183
    %894 = vadd.xlane.f32.xlu0 %v893
    %v895 = vpop.xlane.xlu0 %894
    %v896 = vadd.f32 %v184, %v185
    %897 = vadd.xlane.f32.xlu0 %v896
    %v898 = vpop.xlane.xlu0 %897
    %v899 = vadd.f32 %v186, %v187
    %900 = vadd.xlane.f32.xlu0 %v899
    %v901 = vpop.xlane.xlu0 %900
    %v902 = vadd.f32 %v188, %v189
    %903 = vadd.xlane.f32.xlu0 %v902
    %v904 = vpop.xlane.xlu0 %903
    %v905 = vadd.f32 %v190, %v191
    %906 = vadd.xlane.f32.xlu0 %v905
    %v907 = vpop.xlane.xlu0 %906
    %v908 = vadd.f32 %v192, %v193
    %909 = vadd.xlane.f32.xlu0 %v908
    %v910 = vpop.xlane.xlu0 %909
    %v911 = vadd.f32 %v194, %v195
    %912 = vadd.xlane.f32.xlu0 %v911
    %v913 = vpop.xlane.xlu0 %912
    %v914 = vadd.f32 %v196, %v197
    %915 = vadd.xlane.f32.xlu0 %v914
    %v916 = vpop.xlane.xlu0 %915
    %v917 = vadd.f32 %v198, %v199
    %918 = vadd.xlane.f32.xlu0 %v917
    %v919 = vpop.xlane.xlu0 %918
    %v920 = vadd.f32 %v200, %v201
    %921 = vadd.xlane.f32.xlu0 %v920
    %v922 = vpop.xlane.xlu0 %921
    %v923 = vadd.f32 %v202, %v203
    %924 = vadd.xlane.f32.xlu0 %v923
    %v925 = vpop.xlane.xlu0 %924
    %v926 = vadd.f32 %v204, %v205
    %927 = vadd.xlane.f32.xlu0 %v926
    %v928 = vpop.xlane.xlu0 %927
    %v929 = vadd.f32 %v206, %v207
    %930 = vadd.xlane.f32.xlu0 %v929
    %v931 = vpop.xlane.xlu0 %930
    %v932 = vadd.f32 %v208, %v209
    %933 = vadd.xlane.f32.xlu0 %v932
    %v934 = vpop.xlane.xlu0 %933
    %v935 = vadd.f32 %v210, %v211
    %936 = vadd.xlane.f32.xlu0 %v935
    %v937 = vpop.xlane.xlu0 %936
    %v938 = vadd.f32 %v212, %v213
    %939 = vadd.xlane.f32.xlu0 %v938
    %v940 = vpop.xlane.xlu0 %939
    %v941 = vadd.f32 %v214, %v215
    %942 = vadd.xlane.f32.xlu0 %v941
    %v943 = vpop.xlane.xlu0 %942
    %v944 = vadd.f32 %v216, %v217
    %945 = vadd.xlane.f32.xlu0 %v944
    %v946 = vpop.xlane.xlu0 %945
    %v947 = vadd.f32 %v218, %v219
    %948 = vadd.xlane.f32.xlu0 %v947
    %v949 = vpop.xlane.xlu0 %948
    %v950 = vadd.f32 %v220, %v221
    %951 = vadd.xlane.f32.xlu0 %v950
    %v952 = vpop.xlane.xlu0 %951
    %v953 = vadd.f32 %v222, %v223
    %954 = vadd.xlane.f32.xlu0 %v953
    %v955 = vpop.xlane.xlu0 %954
    %v956 = vadd.f32 %v224, %v225
    %957 = vadd.xlane.f32.xlu0 %v956
    %v958 = vpop.xlane.xlu0 %957
    %v959 = vadd.f32 %v226, %v227
    %960 = vadd.xlane.f32.xlu0 %v959
    %v961 = vpop.xlane.xlu0 %960
    %v962 = vadd.f32 %v228, %v229
    %963 = vadd.xlane.f32.xlu0 %v962
    %v964 = vpop.xlane.xlu0 %963
    %v965 = vadd.f32 %v230, %v231
    %966 = vadd.xlane.f32.xlu0 %v965
    %v967 = vpop.xlane.xlu0 %966
    %v968 = vadd.f32 %v232, %v233
    %969 = vadd.xlane.f32.xlu0 %v968
    %v970 = vpop.xlane.xlu0 %969
    %v971 = vadd.f32 %v234, %v235
    %972 = vadd.xlane.f32.xlu0 %v971
    %v973 = vpop.xlane.xlu0 %972
    %v974 = vadd.f32 %v236, %v237
    %975 = vadd.xlane.f32.xlu0 %v974
    %v976 = vpop.xlane.xlu0 %975
    %v977 = vadd.f32 %v238, %v239
    %978 = vadd.xlane.f32.xlu0 %v977
    %v979 = vpop.xlane.xlu0 %978
    %v980 = vadd.f32 %v240, %v241
    %981 = vadd.xlane.f32.xlu0 %v980
    %v982 = vpop.xlane.xlu0 %981
    %v983 = vadd.f32 %v242, %v243
    %984 = vadd.xlane.f32.xlu0 %v983
    %v985 = vpop.xlane.xlu0 %984
    %v986 = vadd.f32 %v244, %v245
    %987 = vadd.xlane.f32.xlu0 %v986
    %v988 = vpop.xlane.xlu0 %987
    %v989 = vadd.f32 %v246, %v247
    %990 = vadd.xlane.f32.xlu0 %v989
    %v991 = vpop.xlane.xlu0 %990
    %v992 = vadd.f32 %v248, %v249
    %993 = vadd.xlane.f32.xlu0 %v992
    %v994 = vpop.xlane.xlu0 %993
    %v995 = vadd.f32 %v250, %v251
    %996 = vadd.xlane.f32.xlu0 %v995
    %v997 = vpop.xlane.xlu0 %996
    %v998 = vadd.f32 %v252, %v253
    %999 = vadd.xlane.f32.xlu0 %v998
    %v1000 = vpop.xlane.xlu0 %999
    %v1001 = vadd.f32 %v254, %v255
    %1002 = vadd.xlane.f32.xlu0 %v1001
    %v1003 = vpop.xlane.xlu0 %1002
    %v1004 = vadd.f32 %v256, %v257
    %1005 = vadd.xlane.f32.xlu0 %v1004
    %v1006 = vpop.xlane.xlu0 %1005
    %v1007 = vadd.f32 %v258, %v259
    %1008 = vadd.xlane.f32.xlu0 %v1007
    %v1009 = vpop.xlane.xlu0 %1008
    %v1010 = vadd.f32 %v260, %v261
    %1011 = vadd.xlane.f32.xlu0 %v1010
    %v1012 = vpop.xlane.xlu0 %1011
    %v1013 = vadd.f32 %v262, %v263
    %1014 = vadd.xlane.f32.xlu0 %v1013
    %v1015 = vpop.xlane.xlu0 %1014
    %v1016 = vadd.f32 %v264, %v265
    %1017 = vadd.xlane.f32.xlu0 %v1016
    %v1018 = vpop.xlane.xlu0 %1017
    %v1019 = vadd.f32 %v266, %v267
    %1020 = vadd.xlane.f32.xlu0 %v1019
    %v1021 = vpop.xlane.xlu0 %1020
    %v1022 = vadd.f32 %v268, %v269
    %1023 = vadd.xlane.f32.xlu0 %v1022
    %v1024 = vpop.xlane.xlu0 %1023
    %v1025 = vadd.f32 %v270, %v271
    %1026 = vadd.xlane.f32.xlu0 %v1025
    %v1027 = vpop.xlane.xlu0 %1026
    %v1028 = vadd.f32 %v272, %v273
    %1029 = vadd.xlane.f32.xlu0 %v1028
    %v1030 = vpop.xlane.xlu0 %1029
    %v1031 = vadd.f32 %v274, %v275
    %1032 = vadd.xlane.f32.xlu0 %v1031
    %v1033 = vpop.xlane.xlu0 %1032
    %v1034 = vadd.f32 %v276, %v277
    %1035 = vadd.xlane.f32.xlu0 %v1034
    %v1036 = vpop.xlane.xlu0 %1035
    %v1037 = vadd.f32 %v278, %v279
    %1038 = vadd.xlane.f32.xlu0 %v1037
    %v1039 = vpop.xlane.xlu0 %1038
    %v1040 = vadd.f32 %v280, %v281
    %1041 = vadd.xlane.f32.xlu0 %v1040
    %v1042 = vpop.xlane.xlu0 %1041
    %v1043 = vadd.f32 %v282, %v283
    %1044 = vadd.xlane.f32.xlu0 %v1043
    %v1045 = vpop.xlane.xlu0 %1044
    %v1046 = vadd.f32 %v284, %v285
    %1047 = vadd.xlane.f32.xlu0 %v1046
    %v1048 = vpop.xlane.xlu0 %1047
    %v1049 = vadd.f32 %v286, %v287
    %1050 = vadd.xlane.f32.xlu0 %v1049
    %v1051 = vpop.xlane.xlu0 %1050
    %v1052 = vadd.f32 %v288, %v289
    %1053 = vadd.xlane.f32.xlu0 %v1052
    %v1054 = vpop.xlane.xlu0 %1053
    %v1055 = vadd.f32 %v290, %v291
    %1056 = vadd.xlane.f32.xlu0 %v1055
    %v1057 = vpop.xlane.xlu0 %1056
    %v1058 = vadd.f32 %v292, %v293
    %1059 = vadd.xlane.f32.xlu0 %v1058
    %v1060 = vpop.xlane.xlu0 %1059
    %v1061 = vadd.f32 %v294, %v295
    %1062 = vadd.xlane.f32.xlu0 %v1061
    %v1063 = vpop.xlane.xlu0 %1062
    %v1064 = vadd.f32 %v296, %v297
    %1065 = vadd.xlane.f32.xlu0 %v1064
    %v1066 = vpop.xlane.xlu0 %1065
    %v1067 = vadd.f32 %v298, %v299
    %1068 = vadd.xlane.f32.xlu0 %v1067
    %v1069 = vpop.xlane.xlu0 %1068
    %v1070 = vadd.f32 %v300, %v301
    %1071 = vadd.xlane.f32.xlu0 %v1070
    %v1072 = vpop.xlane.xlu0 %1071
    %v1073 = vadd.f32 %v302, %v303
    %1074 = vadd.xlane.f32.xlu0 %v1073
    %v1075 = vpop.xlane.xlu0 %1074
    %v1076 = vadd.f32 %v304, %v305
    %1077 = vadd.xlane.f32.xlu0 %v1076
    %v1078 = vpop.xlane.xlu0 %1077
    %v1079 = vadd.f32 %v306, %v307
    %1080 = vadd.xlane.f32.xlu0 %v1079
    %v1081 = vpop.xlane.xlu0 %1080
    %v1082 = vadd.f32 %v308, %v309
    %1083 = vadd.xlane.f32.xlu0 %v1082
    %v1084 = vpop.xlane.xlu0 %1083
    %v1085 = vadd.f32 %v310, %v311
    %1086 = vadd.xlane.f32.xlu0 %v1085
    %v1087 = vpop.xlane.xlu0 %1086
    %v1088 = vadd.f32 %v312, %v313
    %1089 = vadd.xlane.f32.xlu0 %v1088
    %v1090 = vpop.xlane.xlu0 %1089
    %v1091 = vadd.f32 %v314, %v315
    %1092 = vadd.xlane.f32.xlu0 %v1091
    %v1093 = vpop.xlane.xlu0 %1092
    %v1094 = vadd.f32 %v316, %v317
    %1095 = vadd.xlane.f32.xlu0 %v1094
    %v1096 = vpop.xlane.xlu0 %1095
    %v1097 = vadd.f32 %v318, %v319
    %1098 = vadd.xlane.f32.xlu0 %v1097
    %v1099 = vpop.xlane.xlu0 %1098
    %v1100 = vadd.f32 %v320, %v321
    %1101 = vadd.xlane.f32.xlu0 %v1100
    %v1102 = vpop.xlane.xlu0 %1101
    %v1103 = vadd.f32 %v322, %v323
    %1104 = vadd.xlane.f32.xlu0 %v1103
    %v1105 = vpop.xlane.xlu0 %1104
    %v1106 = vadd.f32 %v324, %v325
    %1107 = vadd.xlane.f32.xlu0 %v1106
    %v1108 = vpop.xlane.xlu0 %1107
    %v1109 = vadd.f32 %v326, %v327
    %1110 = vadd.xlane.f32.xlu0 %v1109
    %v1111 = vpop.xlane.xlu0 %1110
    %v1112 = vadd.f32 %v328, %v329
    %1113 = vadd.xlane.f32.xlu0 %v1112
    %v1114 = vpop.xlane.xlu0 %1113
    %v1115 = vadd.f32 %v330, %v331
    %1116 = vadd.xlane.f32.xlu0 %v1115
    %v1117 = vpop.xlane.xlu0 %1116
    %v1118 = vadd.f32 %v332, %v333
    %1119 = vadd.xlane.f32.xlu0 %v1118
    %v1120 = vpop.xlane.xlu0 %1119
    %v1121 = vadd.f32 %v334, %v335
    %1122 = vadd.xlane.f32.xlu0 %v1121
    %v1123 = vpop.xlane.xlu0 %1122
    %v1124 = vadd.f32 %v336, %v337
    %1125 = vadd.xlane.f32.xlu0 %v1124
    %v1126 = vpop.xlane.xlu0 %1125
    %v1127 = vadd.f32 %v338, %v339
    %1128 = vadd.xlane.f32.xlu0 %v1127
    %v1129 = vpop.xlane.xlu0 %1128
    %v1130 = vadd.f32 %v340, %v341
    %1131 = vadd.xlane.f32.xlu0 %v1130
    %v1132 = vpop.xlane.xlu0 %1131
    %v1133 = vadd.f32 %v342, %v343
    %1134 = vadd.xlane.f32.xlu0 %v1133
    %v1135 = vpop.xlane.xlu0 %1134
    %v1136 = vadd.f32 %v344, %v345
    %1137 = vadd.xlane.f32.xlu0 %v1136
    %v1138 = vpop.xlane.xlu0 %1137
    %v1139 = vadd.f32 %v346, %v347
    %1140 = vadd.xlane.f32.xlu0 %v1139
    %v1141 = vpop.xlane.xlu0 %1140
    %v1142 = vadd.f32 %v348, %v349
    %1143 = vadd.xlane.f32.xlu0 %v1142
    %v1144 = vpop.xlane.xlu0 %1143
    %v1145 = vadd.f32 %v350, %v351
    %1146 = vadd.xlane.f32.xlu0 %v1145
    %v1147 = vpop.xlane.xlu0 %1146
    %v1148 = vadd.f32 %v352, %v353
    %1149 = vadd.xlane.f32.xlu0 %v1148
    %v1150 = vpop.xlane.xlu0 %1149
    %v1151 = vadd.f32 %v354, %v355
    %1152 = vadd.xlane.f32.xlu0 %v1151
    %v1153 = vpop.xlane.xlu0 %1152
    %v1154 = vadd.f32 %v356, %v357
    %1155 = vadd.xlane.f32.xlu0 %v1154
    %v1156 = vpop.xlane.xlu0 %1155
    %v1157 = vadd.f32 %v358, %v359
    %1158 = vadd.xlane.f32.xlu0 %v1157
    %v1159 = vpop.xlane.xlu0 %1158
    %v1160 = vadd.f32 %v360, %v361
    %1161 = vadd.xlane.f32.xlu0 %v1160
    %v1162 = vpop.xlane.xlu0 %1161
    %v1163 = vadd.f32 %v362, %v363
    %1164 = vadd.xlane.f32.xlu0 %v1163
    %v1165 = vpop.xlane.xlu0 %1164
    %v1166 = vadd.f32 %v364, %v365
    %1167 = vadd.xlane.f32.xlu0 %v1166
    %v1168 = vpop.xlane.xlu0 %1167
    %v1169 = vadd.f32 %v366, %v367
    %1170 = vadd.xlane.f32.xlu0 %v1169
    %v1171 = vpop.xlane.xlu0 %1170
    %v1172 = vadd.f32 %v368, %v369
    %1173 = vadd.xlane.f32.xlu0 %v1172
    %v1174 = vpop.xlane.xlu0 %1173
    %v1175 = vadd.f32 %v370, %v371
    %1176 = vadd.xlane.f32.xlu0 %v1175
    %v1177 = vpop.xlane.xlu0 %1176
    %v1178 = vadd.f32 %v372, %v373
    %1179 = vadd.xlane.f32.xlu0 %v1178
    %v1180 = vpop.xlane.xlu0 %1179
    %v1181 = vadd.f32 %v374, %v375
    %1182 = vadd.xlane.f32.xlu0 %v1181
    %v1183 = vpop.xlane.xlu0 %1182
    %v1184 = vadd.f32 %v376, %v377
    %1185 = vadd.xlane.f32.xlu0 %v1184
    %v1186 = vpop.xlane.xlu0 %1185
    %v1187 = vadd.f32 %v378, %v379
    %1188 = vadd.xlane.f32.xlu0 %v1187
    %v1189 = vpop.xlane.xlu0 %1188
    %v1190 = vadd.f32 %v380, %v381
    %1191 = vadd.xlane.f32.xlu0 %v1190
    %v1192 = vpop.xlane.xlu0 %1191
    %v1193 = vadd.f32 %v382, %v383
    %1194 = vadd.xlane.f32.xlu0 %v1193
    %v1195 = vpop.xlane.xlu0 %1194
    %v1196 = vadd.f32 %v384, %v385
    %1197 = vadd.xlane.f32.xlu0 %v1196
    %v1198 = vpop.xlane.xlu0 %1197
    %v1199 = vadd.f32 %v386, %v387
    %1200 = vadd.xlane.f32.xlu0 %v1199
    %v1201 = vpop.xlane.xlu0 %1200
    %v1202 = vadd.f32 %v388, %v389
    %1203 = vadd.xlane.f32.xlu0 %v1202
    %v1204 = vpop.xlane.xlu0 %1203
    %v1205 = vadd.f32 %v390, %v391
    %1206 = vadd.xlane.f32.xlu0 %v1205
    %v1207 = vpop.xlane.xlu0 %1206
    %v1208 = vadd.f32 %v392, %v393
    %1209 = vadd.xlane.f32.xlu0 %v1208
    %v1210 = vpop.xlane.xlu0 %1209
    %v1211 = vadd.f32 %v394, %v395
    %1212 = vadd.xlane.f32.xlu0 %v1211
    %v1213 = vpop.xlane.xlu0 %1212
    %v1214 = vadd.f32 %v396, %v397
    %1215 = vadd.xlane.f32.xlu0 %v1214
    %v1216 = vpop.xlane.xlu0 %1215
    %v1217 = vadd.f32 %v398, %v399
    %1218 = vadd.xlane.f32.xlu0 %v1217
    %v1219 = vpop.xlane.xlu0 %1218
    %v1220 = vadd.f32 %v400, %v401
    %1221 = vadd.xlane.f32.xlu0 %v1220
    %v1222 = vpop.xlane.xlu0 %1221
    %v1223 = vadd.f32 %v402, %v403
    %1224 = vadd.xlane.f32.xlu0 %v1223
    %v1225 = vpop.xlane.xlu0 %1224
    %v1226 = vadd.f32 %v404, %v405
    %1227 = vadd.xlane.f32.xlu0 %v1226
    %v1228 = vpop.xlane.xlu0 %1227
    %v1229 = vadd.f32 %v406, %v407
    %1230 = vadd.xlane.f32.xlu0 %v1229
    %v1231 = vpop.xlane.xlu0 %1230
    %v1232 = vadd.f32 %v408, %v409
    %1233 = vadd.xlane.f32.xlu0 %v1232
    %v1234 = vpop.xlane.xlu0 %1233
    %v1235 = vadd.f32 %v410, %v411
    %1236 = vadd.xlane.f32.xlu0 %v1235
    %v1237 = vpop.xlane.xlu0 %1236
    %v1238 = vadd.f32 %v412, %v413
    %1239 = vadd.xlane.f32.xlu0 %v1238
    %v1240 = vpop.xlane.xlu0 %1239
    %v1241 = vadd.f32 %v414, %v415
    %1242 = vadd.xlane.f32.xlu0 %v1241
    %v1243 = vpop.xlane.xlu0 %1242
    %v1244 = vadd.f32 %v416, %v417
    %1245 = vadd.xlane.f32.xlu0 %v1244
    %v1246 = vpop.xlane.xlu0 %1245
    %v1247 = vadd.f32 %v418, %v419
    %1248 = vadd.xlane.f32.xlu0 %v1247
    %v1249 = vpop.xlane.xlu0 %1248
    %v1250 = vadd.f32 %v420, %v421
    %1251 = vadd.xlane.f32.xlu0 %v1250
    %v1252 = vpop.xlane.xlu0 %1251
    %v1253 = vadd.f32 %v422, %v423
    %1254 = vadd.xlane.f32.xlu0 %v1253
    %v1255 = vpop.xlane.xlu0 %1254
    %v1256 = vadd.f32 %v424, %v425
    %1257 = vadd.xlane.f32.xlu0 %v1256
    %v1258 = vpop.xlane.xlu0 %1257
    %v1259 = vadd.f32 %v426, %v427
    %1260 = vadd.xlane.f32.xlu0 %v1259
    %v1261 = vpop.xlane.xlu0 %1260
    %v1262 = vadd.f32 %v428, %v429
    %1263 = vadd.xlane.f32.xlu0 %v1262
    %v1264 = vpop.xlane.xlu0 %1263
    %v1265 = vadd.f32 %v430, %v431
    %1266 = vadd.xlane.f32.xlu0 %v1265
    %v1267 = vpop.xlane.xlu0 %1266
    %v1268 = vadd.f32 %v432, %v433
    %1269 = vadd.xlane.f32.xlu0 %v1268
    %v1270 = vpop.xlane.xlu0 %1269
    %v1271 = vadd.f32 %v434, %v435
    %1272 = vadd.xlane.f32.xlu0 %v1271
    %v1273 = vpop.xlane.xlu0 %1272
    %v1274 = vadd.f32 %v436, %v437
    %1275 = vadd.xlane.f32.xlu0 %v1274
    %v1276 = vpop.xlane.xlu0 %1275
    %v1277 = vadd.f32 %v438, %v439
    %1278 = vadd.xlane.f32.xlu0 %v1277
    %v1279 = vpop.xlane.xlu0 %1278
    %v1280 = vadd.f32 %v440, %v441
    %1281 = vadd.xlane.f32.xlu0 %v1280
    %v1282 = vpop.xlane.xlu0 %1281
    %v1283 = vadd.f32 %v442, %v443
    %1284 = vadd.xlane.f32.xlu0 %v1283
    %v1285 = vpop.xlane.xlu0 %1284
    %v1286 = vadd.f32 %v444, %v445
    %1287 = vadd.xlane.f32.xlu0 %v1286
    %v1288 = vpop.xlane.xlu0 %1287
    %v1289 = vadd.f32 %v446, %v447
    %1290 = vadd.xlane.f32.xlu0 %v1289
    %v1291 = vpop.xlane.xlu0 %1290
    %v1292 = vadd.f32 %v448, %v449
    %1293 = vadd.xlane.f32.xlu0 %v1292
    %v1294 = vpop.xlane.xlu0 %1293
    %v1295 = vadd.f32 %v450, %v451
    %1296 = vadd.xlane.f32.xlu0 %v1295
    %v1297 = vpop.xlane.xlu0 %1296
    %v1298 = vadd.f32 %v452, %v453
    %1299 = vadd.xlane.f32.xlu0 %v1298
    %v1300 = vpop.xlane.xlu0 %1299
    %v1301 = vadd.f32 %v454, %v455
    %1302 = vadd.xlane.f32.xlu0 %v1301
    %v1303 = vpop.xlane.xlu0 %1302
    %v1304 = vadd.f32 %v456, %v457
    %1305 = vadd.xlane.f32.xlu0 %v1304
    %v1306 = vpop.xlane.xlu0 %1305
    %v1307 = vadd.f32 %v458, %v459
    %1308 = vadd.xlane.f32.xlu0 %v1307
    %v1309 = vpop.xlane.xlu0 %1308
    %v1310 = vadd.f32 %v460, %v461
    %1311 = vadd.xlane.f32.xlu0 %v1310
    %v1312 = vpop.xlane.xlu0 %1311
    %v1313 = vadd.f32 %v462, %v463
    %1314 = vadd.xlane.f32.xlu0 %v1313
    %v1315 = vpop.xlane.xlu0 %1314
    %v1316 = vadd.f32 %v464, %v465
    %1317 = vadd.xlane.f32.xlu0 %v1316
    %v1318 = vpop.xlane.xlu0 %1317
    %v1319 = vadd.f32 %v466, %v467
    %1320 = vadd.xlane.f32.xlu0 %v1319
    %v1321 = vpop.xlane.xlu0 %1320
    %v1322 = vadd.f32 %v468, %v469
    %1323 = vadd.xlane.f32.xlu0 %v1322
    %v1324 = vpop.xlane.xlu0 %1323
    %v1325 = vadd.f32 %v470, %v471
    %1326 = vadd.xlane.f32.xlu0 %v1325
    %v1327 = vpop.xlane.xlu0 %1326
    %v1328 = vadd.f32 %v472, %v473
    %1329 = vadd.xlane.f32.xlu0 %v1328
    %v1330 = vpop.xlane.xlu0 %1329
    %v1331 = vadd.f32 %v474, %v475
    %1332 = vadd.xlane.f32.xlu0 %v1331
    %v1333 = vpop.xlane.xlu0 %1332
    %v1334 = vadd.f32 %v476, %v477
    %1335 = vadd.xlane.f32.xlu0 %v1334
    %v1336 = vpop.xlane.xlu0 %1335
    %v1337 = vadd.f32 %v478, %v479
    %1338 = vadd.xlane.f32.xlu0 %v1337
    %v1339 = vpop.xlane.xlu0 %1338
    %v1340 = vadd.f32 %v480, %v481
    %1341 = vadd.xlane.f32.xlu0 %v1340
    %v1342 = vpop.xlane.xlu0 %1341
    %v1343 = vadd.f32 %v482, %v483
    %1344 = vadd.xlane.f32.xlu0 %v1343
    %v1345 = vpop.xlane.xlu0 %1344
    %v1346 = vadd.f32 %v484, %v485
    %1347 = vadd.xlane.f32.xlu0 %v1346
    %v1348 = vpop.xlane.xlu0 %1347
    %v1349 = vadd.f32 %v486, %v487
    %1350 = vadd.xlane.f32.xlu0 %v1349
    %v1351 = vpop.xlane.xlu0 %1350
    %v1352 = vadd.f32 %v488, %v489
    %1353 = vadd.xlane.f32.xlu0 %v1352
    %v1354 = vpop.xlane.xlu0 %1353
    %v1355 = vadd.f32 %v490, %v491
    %1356 = vadd.xlane.f32.xlu0 %v1355
    %v1357 = vpop.xlane.xlu0 %1356
    %v1358 = vadd.f32 %v492, %v493
    %1359 = vadd.xlane.f32.xlu0 %v1358
    %v1360 = vpop.xlane.xlu0 %1359
    %v1361 = vadd.f32 %v494, %v495
    %1362 = vadd.xlane.f32.xlu0 %v1361
    %v1363 = vpop.xlane.xlu0 %1362
    %v1364 = vadd.f32 %v496, %v497
    %1365 = vadd.xlane.f32.xlu0 %v1364
    %v1366 = vpop.xlane.xlu0 %1365
    %v1367 = vadd.f32 %v498, %v499
    %1368 = vadd.xlane.f32.xlu0 %v1367
    %v1369 = vpop.xlane.xlu0 %1368
    %v1370 = vadd.f32 %v500, %v501
    %1371 = vadd.xlane.f32.xlu0 %v1370
    %v1372 = vpop.xlane.xlu0 %1371
    %v1373 = vadd.f32 %v502, %v503
    %1374 = vadd.xlane.f32.xlu0 %v1373
    %v1375 = vpop.xlane.xlu0 %1374
    %v1376 = vadd.f32 %v504, %v505
    %1377 = vadd.xlane.f32.xlu0 %v1376
    %v1378 = vpop.xlane.xlu0 %1377
    %v1379 = vadd.f32 %v506, %v507
    %1380 = vadd.xlane.f32.xlu0 %v1379
    %v1381 = vpop.xlane.xlu0 %1380
    %v1382 = vadd.f32 %v508, %v509
    %1383 = vadd.xlane.f32.xlu0 %v1382
    %v1384 = vpop.xlane.xlu0 %1383
    %v1385 = vadd.f32 %v510, %v511
    %1386 = vadd.xlane.f32.xlu0 %v1385
    %v1387 = vpop.xlane.xlu0 %1386
    %v1388 = vadd.f32 %v512, %v513
    %1389 = vadd.xlane.f32.xlu0 %v1388
    %v1390 = vpop.xlane.xlu0 %1389
    %v1391 = vadd.f32 %v514, %v515
    %1392 = vadd.xlane.f32.xlu0 %v1391
    %v1393 = vpop.xlane.xlu0 %1392
    %v1394 = vadd.f32 %v516, %v517
    %1395 = vadd.xlane.f32.xlu0 %v1394
    %v1396 = vpop.xlane.xlu0 %1395
    %v1397 = vadd.f32 %v518, %v519
    %1398 = vadd.xlane.f32.xlu0 %v1397
    %v1399 = vpop.xlane.xlu0 %1398
    %v1400 = vadd.f32 %v520, %v521
    %1401 = vadd.xlane.f32.xlu0 %v1400
    %v1402 = vpop.xlane.xlu0 %1401
    %v1403 = vadd.f32 %v522, %v523
    %1404 = vadd.xlane.f32.xlu0 %v1403
    %v1405 = vpop.xlane.xlu0 %1404
    %v1406 = vadd.f32 %v524, %v525
    %1407 = vadd.xlane.f32.xlu0 %v1406
    %v1408 = vpop.xlane.xlu0 %1407
    %v1409 = vadd.f32 %v526, %v527
    %1410 = vadd.xlane.f32.xlu0 %v1409
    %v1411 = vpop.xlane.xlu0 %1410
    %v1412 = vadd.f32 %v528, %v529
    %1413 = vadd.xlane.f32.xlu0 %v1412
    %v1414 = vpop.xlane.xlu0 %1413
    %v1415 = vadd.f32 %v530, %v531
    %1416 = vadd.xlane.f32.xlu0 %v1415
    %v1417 = vpop.xlane.xlu0 %1416
    %v1418 = vadd.f32 %v532, %v533
    %1419 = vadd.xlane.f32.xlu0 %v1418
    %v1420 = vpop.xlane.xlu0 %1419
    %v1421 = vadd.f32 %v534, %v535
    %1422 = vadd.xlane.f32.xlu0 %v1421
    %v1423 = vpop.xlane.xlu0 %1422
    %v1424 = vadd.f32 %v536, %v537
    %1425 = vadd.xlane.f32.xlu0 %v1424
    %v1426 = vpop.xlane.xlu0 %1425
    %v1427 = vadd.f32 %v538, %v539
    %1428 = vadd.xlane.f32.xlu0 %v1427
    %v1429 = vpop.xlane.xlu0 %1428
    %v1430 = vadd.f32 %v540, %v541
    %1431 = vadd.xlane.f32.xlu0 %v1430
    %v1432 = vpop.xlane.xlu0 %1431
    %v1433 = vadd.f32 %v542, %v543
    %1434 = vadd.xlane.f32.xlu0 %v1433
    %v1435 = vpop.xlane.xlu0 %1434
    %v1436 = vadd.f32 %v544, %v545
    %1437 = vadd.xlane.f32.xlu0 %v1436
    %v1438 = vpop.xlane.xlu0 %1437
    %v1439 = vadd.f32 %v546, %v547
    %1440 = vadd.xlane.f32.xlu0 %v1439
    %v1441 = vpop.xlane.xlu0 %1440
    %v1442 = vadd.f32 %v548, %v549
    %1443 = vadd.xlane.f32.xlu0 %v1442
    %v1444 = vpop.xlane.xlu0 %1443
    %v1445 = vadd.f32 %v550, %v551
    %1446 = vadd.xlane.f32.xlu0 %v1445
    %v1447 = vpop.xlane.xlu0 %1446
    %v1448 = vadd.f32 %v552, %v553
    %1449 = vadd.xlane.f32.xlu0 %v1448
    %v1450 = vpop.xlane.xlu0 %1449
    %v1451 = vadd.f32 %v554, %v555
    %1452 = vadd.xlane.f32.xlu0 %v1451
    %v1453 = vpop.xlane.xlu0 %1452
    %v1454 = vadd.f32 %v556, %v557
    %1455 = vadd.xlane.f32.xlu0 %v1454
    %v1456 = vpop.xlane.xlu0 %1455
    %v1457 = vadd.f32 %v558, %v559
    %1458 = vadd.xlane.f32.xlu0 %v1457
    %v1459 = vpop.xlane.xlu0 %1458
    %v1460 = vadd.f32 %v560, %v561
    %1461 = vadd.xlane.f32.xlu0 %v1460
    %v1462 = vpop.xlane.xlu0 %1461
    %v1463 = vadd.f32 %v562, %v563
    %1464 = vadd.xlane.f32.xlu0 %v1463
    %v1465 = vpop.xlane.xlu0 %1464
    %v1466 = vadd.f32 %v564, %v565
    %1467 = vadd.xlane.f32.xlu0 %v1466
    %v1468 = vpop.xlane.xlu0 %1467
    %v1469 = vadd.f32 %v566, %v567
    %1470 = vadd.xlane.f32.xlu0 %v1469
    %v1471 = vpop.xlane.xlu0 %1470
    %v1472 = vadd.f32 %v568, %v569
    %1473 = vadd.xlane.f32.xlu0 %v1472
    %v1474 = vpop.xlane.xlu0 %1473
    %v1475 = vadd.f32 %v570, %v571
    %1476 = vadd.xlane.f32.xlu0 %v1475
    %v1477 = vpop.xlane.xlu0 %1476
    %v1478 = vadd.f32 %v572, %v573
    %1479 = vadd.xlane.f32.xlu0 %v1478
    %v1480 = vpop.xlane.xlu0 %1479
    %v1481 = vadd.f32 %v574, %v575
    %1482 = vadd.xlane.f32.xlu0 %v1481
    %v1483 = vpop.xlane.xlu0 %1482
    %v1484 = vadd.f32 %v576, %v577
    %1485 = vadd.xlane.f32.xlu0 %v1484
    %v1486 = vpop.xlane.xlu0 %1485
    %v1487 = vadd.f32 %v578, %v579
    %1488 = vadd.xlane.f32.xlu0 %v1487
    %v1489 = vpop.xlane.xlu0 %1488
    %v1490 = vadd.f32 %v580, %v581
    %1491 = vadd.xlane.f32.xlu0 %v1490
    %v1492 = vpop.xlane.xlu0 %1491
    %v1493 = vadd.f32 %v582, %v583
    %1494 = vadd.xlane.f32.xlu0 %v1493
    %v1495 = vpop.xlane.xlu0 %1494
    %v1496 = vadd.f32 %v584, %v585
    %1497 = vadd.xlane.f32.xlu0 %v1496
    %v1498 = vpop.xlane.xlu0 %1497
    %v1499 = vadd.f32 %v586, %v587
    %1500 = vadd.xlane.f32.xlu0 %v1499
    %v1501 = vpop.xlane.xlu0 %1500
    %v1502 = vadd.f32 %v588, %v589
    %1503 = vadd.xlane.f32.xlu0 %v1502
    %v1504 = vpop.xlane.xlu0 %1503
    %v1505 = vadd.f32 %v590, %v591
    %1506 = vadd.xlane.f32.xlu0 %v1505
    %v1507 = vpop.xlane.xlu0 %1506
    %v1508 = vadd.f32 %v592, %v593
    %1509 = vadd.xlane.f32.xlu0 %v1508
    %v1510 = vpop.xlane.xlu0 %1509
    %v1511 = vadd.f32 %v594, %v595
    %1512 = vadd.xlane.f32.xlu0 %v1511
    %v1513 = vpop.xlane.xlu0 %1512
    %v1514 = vadd.f32 %v596, %v597
    %1515 = vadd.xlane.f32.xlu0 %v1514
    %v1516 = vpop.xlane.xlu0 %1515
    %v1517 = vadd.f32 %v598, %v599
    %1518 = vadd.xlane.f32.xlu0 %v1517
    %v1519 = vpop.xlane.xlu0 %1518
    %v1520 = vadd.f32 %v600, %v601
    %1521 = vadd.xlane.f32.xlu0 %v1520
    %v1522 = vpop.xlane.xlu0 %1521
    %v1523 = vadd.f32 %v602, %v603
    %1524 = vadd.xlane.f32.xlu0 %v1523
    %v1525 = vpop.xlane.xlu0 %1524
    %v1526 = vadd.f32 %v604, %v605
    %1527 = vadd.xlane.f32.xlu0 %v1526
    %v1528 = vpop.xlane.xlu0 %1527
    %v1529 = vadd.f32 %v606, %v607
    %1530 = vadd.xlane.f32.xlu0 %v1529
    %v1531 = vpop.xlane.xlu0 %1530
    %v1532 = vadd.f32 %v608, %v609
    %1533 = vadd.xlane.f32.xlu0 %v1532
    %v1534 = vpop.xlane.xlu0 %1533
    %v1535 = vadd.f32 %v610, %v611
    %1536 = vadd.xlane.f32.xlu0 %v1535
    %v1537 = vpop.xlane.xlu0 %1536
    %v1538 = vadd.f32 %v612, %v613
    %1539 = vadd.xlane.f32.xlu0 %v1538
    %v1540 = vpop.xlane.xlu0 %1539
    %v1541 = vadd.f32 %v614, %v615
    %1542 = vadd.xlane.f32.xlu0 %v1541
    %v1543 = vpop.xlane.xlu0 %1542
    %v1544 = vadd.f32 %v616, %v617
    %1545 = vadd.xlane.f32.xlu0 %v1544
    %v1546 = vpop.xlane.xlu0 %1545
    %v1547 = vadd.f32 %v618, %v619
    %1548 = vadd.xlane.f32.xlu0 %v1547
    %v1549 = vpop.xlane.xlu0 %1548
    %v1550 = vadd.f32 %v620, %v621
    %1551 = vadd.xlane.f32.xlu0 %v1550
    %v1552 = vpop.xlane.xlu0 %1551
    %v1553 = vadd.f32 %v622, %v623
    %1554 = vadd.xlane.f32.xlu0 %v1553
    %v1555 = vpop.xlane.xlu0 %1554
    %v1556 = vadd.f32 %v624, %v625
    %1557 = vadd.xlane.f32.xlu0 %v1556
    %v1558 = vpop.xlane.xlu0 %1557
    %v1559 = vadd.f32 %v626, %v627
    %1560 = vadd.xlane.f32.xlu0 %v1559
    %v1561 = vpop.xlane.xlu0 %1560
    %v1562 = vadd.f32 %v628, %v629
    %1563 = vadd.xlane.f32.xlu0 %v1562
    %v1564 = vpop.xlane.xlu0 %1563
    %v1565 = vadd.f32 %v630, %v631
    %1566 = vadd.xlane.f32.xlu0 %v1565
    %v1567 = vpop.xlane.xlu0 %1566
    %v1568 = vadd.f32 %v632, %v633
    %1569 = vadd.xlane.f32.xlu0 %v1568
    %v1570 = vpop.xlane.xlu0 %1569
    %v1571 = vadd.f32 %v634, %v635
    %1572 = vadd.xlane.f32.xlu0 %v1571
    %v1573 = vpop.xlane.xlu0 %1572
    %v1574 = vadd.f32 %v636, %v637
    %1575 = vadd.xlane.f32.xlu0 %v1574
    %v1576 = vpop.xlane.xlu0 %1575
    %v1577 = vadd.f32 %v638, %v639
    %1578 = vadd.xlane.f32.xlu0 %v1577
    %v1579 = vpop.xlane.xlu0 %1578
    %v1580 = vadd.f32 %v640, %v641
    %1581 = vadd.xlane.f32.xlu0 %v1580
    %v1582 = vpop.xlane.xlu0 %1581
    %v1583 = vadd.f32 %v642, %v643
    %1584 = vadd.xlane.f32.xlu0 %v1583
    %v1585 = vpop.xlane.xlu0 %1584
    %v1586 = vadd.f32 %v644, %v645
    %1587 = vadd.xlane.f32.xlu0 %v1586
    %v1588 = vpop.xlane.xlu0 %1587
    %v1589 = vadd.f32 %v646, %v647
    %1590 = vadd.xlane.f32.xlu0 %v1589
    %v1591 = vpop.xlane.xlu0 %1590
    %v1592 = vadd.f32 %v648, %v649
    %1593 = vadd.xlane.f32.xlu0 %v1592
    %v1594 = vpop.xlane.xlu0 %1593
    %v1595 = vadd.f32 %v650, %v651
    %1596 = vadd.xlane.f32.xlu0 %v1595
    %v1597 = vpop.xlane.xlu0 %1596
    %v1598 = vadd.f32 %v652, %v653
    %1599 = vadd.xlane.f32.xlu0 %v1598
    %v1600 = vpop.xlane.xlu0 %1599
    %v1601 = vadd.f32 %v654, %v655
    %1602 = vadd.xlane.f32.xlu0 %v1601
    %v1603 = vpop.xlane.xlu0 %1602
    %v1604 = vadd.f32 %v656, %v657
    %1605 = vadd.xlane.f32.xlu0 %v1604
    %v1606 = vpop.xlane.xlu0 %1605
    %v1607 = vadd.f32 %v658, %v659
    %1608 = vadd.xlane.f32.xlu0 %v1607
    %v1609 = vpop.xlane.xlu0 %1608
    %v1610 = vadd.f32 %v660, %v661
    %1611 = vadd.xlane.f32.xlu0 %v1610
    %v1612 = vpop.xlane.xlu0 %1611
    %v1613 = vadd.f32 %v662, %v663
    %1614 = vadd.xlane.f32.xlu0 %v1613
    %v1615 = vpop.xlane.xlu0 %1614
    %v1616 = vadd.f32 %v664, %v665
    %1617 = vadd.xlane.f32.xlu0 %v1616
    %v1618 = vpop.xlane.xlu0 %1617
    %v1619 = vadd.f32 %v666, %v667
    %1620 = vadd.xlane.f32.xlu0 %v1619
    %v1621 = vpop.xlane.xlu0 %1620
    %v1622 = vadd.f32 %v668, %v669
    %1623 = vadd.xlane.f32.xlu0 %v1622
    %v1624 = vpop.xlane.xlu0 %1623
    %v1625 = vadd.f32 %v670, %v671
    %1626 = vadd.xlane.f32.xlu0 %v1625
    %v1627 = vpop.xlane.xlu0 %1626
    %v1628 = vadd.f32 %v672, %v673
    %1629 = vadd.xlane.f32.xlu0 %v1628
    %v1630 = vpop.xlane.xlu0 %1629
    %v1631 = vadd.f32 %v674, %v675
    %1632 = vadd.xlane.f32.xlu0 %v1631
    %v1633 = vpop.xlane.xlu0 %1632
    %v1634 = vadd.f32 %v676, %v677
    %1635 = vadd.xlane.f32.xlu0 %v1634
    %v1636 = vpop.xlane.xlu0 %1635
    %v1637 = vadd.f32 %v678, %v679
    %1638 = vadd.xlane.f32.xlu0 %v1637
    %v1639 = vpop.xlane.xlu0 %1638
    %v1640 = vld [vmem:[#allocation5] sm:$0xff]
    %v1641 = vld [vmem:[#allocation5 + $0x8] sm:$0xff]
    %v1642 = vld [vmem:[#allocation5 + $0x10] sm:$0xff]
    %v1643 = vld [vmem:[#allocation5 + $0x18] sm:$0xff]
    %v1644 = vld [vmem:[#allocation5 + $0x20] sm:$0xff]
    %v1645 = vld [vmem:[#allocation5 + $0x28] sm:$0xff]
    %v1646 = vld [vmem:[#allocation5 + $0x30] sm:$0xff]
    %v1647 = vld [vmem:[#allocation5 + $0x38] sm:$0xff]
    %v1648 = vld [vmem:[#allocation5 + $0x40] sm:$0xff]
    %v1649 = vld [vmem:[#allocation5 + $0x48] sm:$0xff]
    %v1650 = vld [vmem:[#allocation5 + $0x50] sm:$0xff]
    %v1651 = vld [vmem:[#allocation5 + $0x58] sm:$0xff]
    %v1652 = vld [vmem:[#allocation5 + $0x60] sm:$0xff]
    %v1653 = vld [vmem:[#allocation5 + $0x68] sm:$0xff]
    %v1654 = vld [vmem:[#allocation5 + $0x70] sm:$0xff]
    %v1655 = vld [vmem:[#allocation5 + $0x78] sm:$0xff]
    %v1656 = vld [vmem:[#allocation5 + $0x80] sm:$0xff]
    %v1657 = vld [vmem:[#allocation5 + $0x88] sm:$0xff]
    %v1658 = vld [vmem:[#allocation5 + $0x90] sm:$0xff]
    %v1659 = vld [vmem:[#allocation5 + $0x98] sm:$0xff]
    %v1660 = vld [vmem:[#allocation5 + $0xa0] sm:$0xff]
    %v1661 = vld [vmem:[#allocation5 + $0xa8] sm:$0xff]
    %v1662 = vld [vmem:[#allocation5 + $0xb0] sm:$0xff]
    %v1663 = vld [vmem:[#allocation5 + $0xb8] sm:$0xff]
    %v1664 = vld [vmem:[#allocation5 + $0xc0] sm:$0xff]
    %v1665 = vld [vmem:[#allocation5 + $0xc8] sm:$0xff]
    %v1666 = vld [vmem:[#allocation5 + $0xd0] sm:$0xff]
    %v1667 = vld [vmem:[#allocation5 + $0xd8] sm:$0xff]
    %v1668 = vld [vmem:[#allocation5 + $0xe0] sm:$0xff]
    %v1669 = vld [vmem:[#allocation5 + $0xe8] sm:$0xff]
    %v1670 = vld [vmem:[#allocation5 + $0xf0] sm:$0xff]
    %v1671 = vld [vmem:[#allocation5 + $0xf8] sm:$0xff]
    %v1672 = vld [vmem:[#allocation5 + $0x100] sm:$0xff]
    %v1673 = vld [vmem:[#allocation5 + $0x108] sm:$0xff]
    %v1674 = vld [vmem:[#allocation5 + $0x110] sm:$0xff]
    %v1675 = vld [vmem:[#allocation5 + $0x118] sm:$0xff]
    %v1676 = vld [vmem:[#allocation5 + $0x120] sm:$0xff]
    %v1677 = vld [vmem:[#allocation5 + $0x128] sm:$0xff]
    %v1678 = vld [vmem:[#allocation5 + $0x130] sm:$0xff]
    %v1679 = vld [vmem:[#allocation5 + $0x138] sm:$0xff]
    %v1680 = vld [vmem:[#allocation5 + $0x140] sm:$0xff]
    %v1681 = vld [vmem:[#allocation5 + $0x148] sm:$0xff]
    %v1682 = vld [vmem:[#allocation5 + $0x150] sm:$0xff]
    %v1683 = vld [vmem:[#allocation5 + $0x158] sm:$0xff]
    %v1684 = vld [vmem:[#allocation5 + $0x160] sm:$0xff]
    %v1685 = vld [vmem:[#allocation5 + $0x168] sm:$0xff]
    %v1686 = vld [vmem:[#allocation5 + $0x170] sm:$0xff]
    %v1687 = vld [vmem:[#allocation5 + $0x178] sm:$0xff]
    %v1688 = vld [vmem:[#allocation5 + $0x180] sm:$0xff]
    %v1689 = vld [vmem:[#allocation5 + $0x188] sm:$0xff]
    %v1690 = vld [vmem:[#allocation5 + $0x190] sm:$0xff]
    %v1691 = vld [vmem:[#allocation5 + $0x198] sm:$0xff]
    %v1692 = vld [vmem:[#allocation5 + $0x1a0] sm:$0xff]
    %v1693 = vld [vmem:[#allocation5 + $0x1a8] sm:$0xff]
    %v1694 = vld [vmem:[#allocation5 + $0x1b0] sm:$0xff]
    %v1695 = vld [vmem:[#allocation5 + $0x1b8] sm:$0xff]
    %v1696 = vld [vmem:[#allocation5 + $0x1c0] sm:$0xff]
    %v1697 = vld [vmem:[#allocation5 + $0x1c8] sm:$0xff]
    %v1698 = vld [vmem:[#allocation5 + $0x1d0] sm:$0xff]
    %v1699 = vld [vmem:[#allocation5 + $0x1d8] sm:$0xff]
    %v1700 = vld [vmem:[#allocation5 + $0x1e0] sm:$0xff]
    %v1701 = vld [vmem:[#allocation5 + $0x1e8] sm:$0xff]
    %v1702 = vld [vmem:[#allocation5 + $0x1f0] sm:$0xff]
    %v1703 = vld [vmem:[#allocation5 + $0x1f8] sm:$0xff]
    %v1704 = vld [vmem:[#allocation5 + $0x200] sm:$0xff]
    %v1705 = vld [vmem:[#allocation5 + $0x208] sm:$0xff]
    %v1706 = vld [vmem:[#allocation5 + $0x210] sm:$0xff]
    %v1707 = vld [vmem:[#allocation5 + $0x218] sm:$0xff]
    %v1708 = vld [vmem:[#allocation5 + $0x220] sm:$0xff]
    %v1709 = vld [vmem:[#allocation5 + $0x228] sm:$0xff]
    %v1710 = vld [vmem:[#allocation5 + $0x230] sm:$0xff]
    %v1711 = vld [vmem:[#allocation5 + $0x238] sm:$0xff]
    %v1712 = vld [vmem:[#allocation5 + $0x240] sm:$0xff]
    %v1713 = vld [vmem:[#allocation5 + $0x248] sm:$0xff]
    %v1714 = vld [vmem:[#allocation5 + $0x250] sm:$0xff]
    %v1715 = vld [vmem:[#allocation5 + $0x258] sm:$0xff]
    %v1716 = vld [vmem:[#allocation5 + $0x260] sm:$0xff]
    %v1717 = vld [vmem:[#allocation5 + $0x268] sm:$0xff]
    %v1718 = vld [vmem:[#allocation5 + $0x270] sm:$0xff]
    %v1719 = vld [vmem:[#allocation5 + $0x278] sm:$0xff]
    %v1720 = vld [vmem:[#allocation5 + $0x280] sm:$0xff]
    %v1721 = vld [vmem:[#allocation5 + $0x288] sm:$0xff]
    %v1722 = vld [vmem:[#allocation5 + $0x290] sm:$0xff]
    %v1723 = vld [vmem:[#allocation5 + $0x298] sm:$0xff]
    %v1724 = vld [vmem:[#allocation5 + $0x2a0] sm:$0xff]
    %v1725 = vld [vmem:[#allocation5 + $0x2a8] sm:$0xff]
    %v1726 = vld [vmem:[#allocation5 + $0x2b0] sm:$0xff]
    %v1727 = vld [vmem:[#allocation5 + $0x2b8] sm:$0xff]
    %v1728 = vld [vmem:[#allocation5 + $0x2c0] sm:$0xff]
    %v1729 = vld [vmem:[#allocation5 + $0x2c8] sm:$0xff]
    %v1730 = vld [vmem:[#allocation5 + $0x2d0] sm:$0xff]
    %v1731 = vld [vmem:[#allocation5 + $0x2d8] sm:$0xff]
    %v1732 = vld [vmem:[#allocation5 + $0x2e0] sm:$0xff]
    %v1733 = vld [vmem:[#allocation5 + $0x2e8] sm:$0xff]
    %v1734 = vld [vmem:[#allocation5 + $0x2f0] sm:$0xff]
    %v1735 = vld [vmem:[#allocation5 + $0x2f8] sm:$0xff]
    %v1736 = vld [vmem:[#allocation5 + $0x300] sm:$0xff]
    %v1737 = vld [vmem:[#allocation5 + $0x308] sm:$0xff]
    %v1738 = vld [vmem:[#allocation5 + $0x310] sm:$0xff]
    %v1739 = vld [vmem:[#allocation5 + $0x318] sm:$0xff]
    %v1740 = vld [vmem:[#allocation5 + $0x320] sm:$0xff]
    %v1741 = vld [vmem:[#allocation5 + $0x328] sm:$0xff]
    %v1742 = vld [vmem:[#allocation5 + $0x330] sm:$0xff]
    %v1743 = vld [vmem:[#allocation5 + $0x338] sm:$0xff]
    %v1744 = vld [vmem:[#allocation5 + $0x340] sm:$0xff]
    %v1745 = vld [vmem:[#allocation5 + $0x348] sm:$0xff]
    %v1746 = vld [vmem:[#allocation5 + $0x350] sm:$0xff]
    %v1747 = vld [vmem:[#allocation5 + $0x358] sm:$0xff]
    %v1748 = vld [vmem:[#allocation5 + $0x360] sm:$0xff]
    %v1749 = vld [vmem:[#allocation5 + $0x368] sm:$0xff]
    %v1750 = vld [vmem:[#allocation5 + $0x370] sm:$0xff]
    %v1751 = vld [vmem:[#allocation5 + $0x378] sm:$0xff]
    %v1752 = vld [vmem:[#allocation5 + $0x380] sm:$0xff]
    %v1753 = vld [vmem:[#allocation5 + $0x388] sm:$0xff]
    %v1754 = vld [vmem:[#allocation5 + $0x390] sm:$0xff]
    %v1755 = vld [vmem:[#allocation5 + $0x398] sm:$0xff]
    %v1756 = vld [vmem:[#allocation5 + $0x3a0] sm:$0xff]
    %v1757 = vld [vmem:[#allocation5 + $0x3a8] sm:$0xff]
    %v1758 = vld [vmem:[#allocation5 + $0x3b0] sm:$0xff]
    %v1759 = vld [vmem:[#allocation5 + $0x3b8] sm:$0xff]
    %v1760 = vld [vmem:[#allocation5 + $0x3c0] sm:$0xff]
    %v1761 = vld [vmem:[#allocation5 + $0x3c8] sm:$0xff]
    %v1762 = vld [vmem:[#allocation5 + $0x3d0] sm:$0xff]
    %v1763 = vld [vmem:[#allocation5 + $0x3d8] sm:$0xff]
    %v1764 = vld [vmem:[#allocation5 + $0x3e0] sm:$0xff]
    %v1765 = vld [vmem:[#allocation5 + $0x3e8] sm:$0xff]
    %v1766 = vld [vmem:[#allocation5 + $0x3f0] sm:$0xff]
    %v1767 = vld [vmem:[#allocation5 + $0x3f8] sm:$0xff]
    %v1768 = vld [vmem:[#allocation5 + $0x400] sm:$0xff]
    %v1769 = vld [vmem:[#allocation5 + $0x408] sm:$0xff]
    %v1770 = vld [vmem:[#allocation5 + $0x410] sm:$0xff]
    %v1771 = vld [vmem:[#allocation5 + $0x418] sm:$0xff]
    %v1772 = vld [vmem:[#allocation5 + $0x420] sm:$0xff]
    %v1773 = vld [vmem:[#allocation5 + $0x428] sm:$0xff]
    %v1774 = vld [vmem:[#allocation5 + $0x430] sm:$0xff]
    %v1775 = vld [vmem:[#allocation5 + $0x438] sm:$0xff]
    %v1776 = vld [vmem:[#allocation5 + $0x440] sm:$0xff]
    %v1777 = vld [vmem:[#allocation5 + $0x448] sm:$0xff]
    %v1778 = vld [vmem:[#allocation5 + $0x450] sm:$0xff]
    %v1779 = vld [vmem:[#allocation5 + $0x458] sm:$0xff]
    %v1780 = vld [vmem:[#allocation5 + $0x460] sm:$0xff]
    %v1781 = vld [vmem:[#allocation5 + $0x468] sm:$0xff]
    %v1782 = vld [vmem:[#allocation5 + $0x470] sm:$0xff]
    %v1783 = vld [vmem:[#allocation5 + $0x478] sm:$0xff]
    %v1784 = vld [vmem:[#allocation5 + $0x480] sm:$0xff]
    %v1785 = vld [vmem:[#allocation5 + $0x488] sm:$0xff]
    %v1786 = vld [vmem:[#allocation5 + $0x490] sm:$0xff]
    %v1787 = vld [vmem:[#allocation5 + $0x498] sm:$0xff]
    %v1788 = vld [vmem:[#allocation5 + $0x4a0] sm:$0xff]
    %v1789 = vld [vmem:[#allocation5 + $0x4a8] sm:$0xff]
    %v1790 = vld [vmem:[#allocation5 + $0x4b0] sm:$0xff]
    %v1791 = vld [vmem:[#allocation5 + $0x4b8] sm:$0xff]
    %v1792 = vld [vmem:[#allocation5 + $0x4c0] sm:$0xff]
    %v1793 = vld [vmem:[#allocation5 + $0x4c8] sm:$0xff]
    %v1794 = vld [vmem:[#allocation5 + $0x4d0] sm:$0xff]
    %v1795 = vld [vmem:[#allocation5 + $0x4d8] sm:$0xff]
    %v1796 = vld [vmem:[#allocation5 + $0x4e0] sm:$0xff]
    %v1797 = vld [vmem:[#allocation5 + $0x4e8] sm:$0xff]
    %v1798 = vld [vmem:[#allocation5 + $0x4f0] sm:$0xff]
    %v1799 = vld [vmem:[#allocation5 + $0x4f8] sm:$0xff]
    %v2120 = vlaneseq
    %v2121 = vand.u32 %v2120, 127
    %v2122 = vlaneseq
    %v2123 = vshrl.u32 %v2122, 7
    %v2124 = vsub.s32 %v2121, %v2123
    %v2125 = vrot.slane %v682, %v2124
    %v2126 = vadd.s32 %v2121, 4294967288
    %v2127 = vlaneseq
    %v2128 = vshrl.u32 %v2127, 7
    %v2129 = vsub.s32 %v2126, %v2128
    %v2130 = vrot.slane %v685, %v2129
    %vm2131 = vcmask 130112
    %v2132 = vsel %vm2131, %v2130, %v2125
    %v2133 = vadd.s32 %v2121, 4294967280
    %v2134 = vlaneseq
    %v2135 = vshrl.u32 %v2134, 7
    %v2136 = vsub.s32 %v2133, %v2135
    %v2137 = vrot.slane %v688, %v2136
    %vm2138 = vcmask 195712
    %v2139 = vsel %vm2138, %v2137, %v2132
    %v2140 = vadd.s32 %v2121, 4294967272
    %v2141 = vlaneseq
    %v2142 = vshrl.u32 %v2141, 7
    %v2143 = vsub.s32 %v2140, %v2142
    %v2144 = vrot.slane %v691, %v2143
    %vm2145 = vcmask 261312
    %v2146 = vsel %vm2145, %v2144, %v2139
    %v2147 = vadd.s32 %v2121, 4294967264
    %v2148 = vlaneseq
    %v2149 = vshrl.u32 %v2148, 7
    %v2150 = vsub.s32 %v2147, %v2149
    %v2151 = vrot.slane %v694, %v2150
    %vm2152 = vcmask 326912
    %v2153 = vsel %vm2152, %v2151, %v2146
    %v2154 = vadd.s32 %v2121, 4294967256
    %v2155 = vlaneseq
    %v2156 = vshrl.u32 %v2155, 7
    %v2157 = vsub.s32 %v2154, %v2156
    %v2158 = vrot.slane %v697, %v2157
    %vm2159 = vcmask 392512
    %v2160 = vsel %vm2159, %v2158, %v2153
    %v2161 = vadd.s32 %v2121, 4294967248
    %v2162 = vlaneseq
    %v2163 = vshrl.u32 %v2162, 7
    %v2164 = vsub.s32 %v2161, %v2163
    %v2165 = vrot.slane %v700, %v2164
    %vm2166 = vcmask 458112
    %v2167 = vsel %vm2166, %v2165, %v2160
    %v2168 = vadd.s32 %v2121, 4294967240
    %v2169 = vlaneseq
    %v2170 = vshrl.u32 %v2169, 7
    %v2171 = vsub.s32 %v2168, %v2170
    %v2172 = vrot.slane %v703, %v2171
    %vm2173 = vcmask 523712
    %v2174 = vsel %vm2173, %v2172, %v2167
    %v2175 = vadd.s32 %v2121, 4294967232
    %v2176 = vlaneseq
    %v2177 = vshrl.u32 %v2176, 7
    %v2178 = vsub.s32 %v2175, %v2177
    %v2179 = vrot.slane %v706, %v2178
    %vm2180 = vcmask 589312
    %v2181 = vsel %vm2180, %v2179, %v2174
    %v2182 = vadd.s32 %v2121, 4294967224
    %v2183 = vlaneseq
    %v2184 = vshrl.u32 %v2183, 7
    %v2185 = vsub.s32 %v2182, %v2184
    %v2186 = vrot.slane %v709, %v2185
    %vm2187 = vcmask 654912
    %v2188 = vsel %vm2187, %v2186, %v2181
    %v2189 = vadd.s32 %v2121, 4294967216
    %v2190 = vlaneseq
    %v2191 = vshrl.u32 %v2190, 7
    %v2192 = vsub.s32 %v2189, %v2191
    %v2193 = vrot.slane %v712, %v2192
    %vm2194 = vcmask 720512
    %v2195 = vsel %vm2194, %v2193, %v2188
    %v2196 = vadd.s32 %v2121, 4294967208
    %v2197 = vlaneseq
    %v2198 = vshrl.u32 %v2197, 7
    %v2199 = vsub.s32 %v2196, %v2198
    %v2200 = vrot.slane %v715, %v2199
    %vm2201 = vcmask 786112
    %v2202 = vsel %vm2201, %v2200, %v2195
    %v2203 = vadd.s32 %v2121, 4294967200
    %v2204 = vlaneseq
    %v2205 = vshrl.u32 %v2204, 7
    %v2206 = vsub.s32 %v2203, %v2205
    %v2207 = vrot.slane %v718, %v2206
    %vm2208 = vcmask 851712
    %v2209 = vsel %vm2208, %v2207, %v2202
    %v2210 = vadd.s32 %v2121, 4294967192
    %v2211 = vlaneseq
    %v2212 = vshrl.u32 %v2211, 7
    %v2213 = vsub.s32 %v2210, %v2212
    %v2214 = vrot.slane %v721, %v2213
    %vm2215 = vcmask 917312
    %v2216 = vsel %vm2215, %v2214, %v2209
    %v2217 = vadd.s32 %v2121, 4294967184
    %v2218 = vlaneseq
    %v2219 = vshrl.u32 %v2218, 7
    %v2220 = vsub.s32 %v2217, %v2219
    %v2221 = vrot.slane %v724, %v2220
    %vm2222 = vcmask 982912
    %v2223 = vsel %vm2222, %v2221, %v2216
    %v2224 = vadd.s32 %v2121, 4294967176
    %v2225 = vlaneseq
    %v2226 = vshrl.u32 %v2225, 7
    %v2227 = vsub.s32 %v2224, %v2226
    %v2228 = vrot.slane %v727, %v2227
    %vm2229 = vcmask 1048512
    %v2230 = vsel %vm2229, %v2228, %v2223
    %v2231 = vlaneseq
    %v2232 = vshrl.u32 %v2231, 7
    %v2233 = vsub.s32 %v2121, %v2232
    %v2234 = vrot.slane %v730, %v2233
    %v2235 = vlaneseq
    %v2236 = vshrl.u32 %v2235, 7
    %v2237 = vsub.s32 %v2126, %v2236
    %v2238 = vrot.slane %v733, %v2237
    %v2239 = vsel %vm2131, %v2238, %v2234
    %v2240 = vlaneseq
    %v2241 = vshrl.u32 %v2240, 7
    %v2242 = vsub.s32 %v2133, %v2241
    %v2243 = vrot.slane %v736, %v2242
    %v2244 = vsel %vm2138, %v2243, %v2239
    %v2245 = vlaneseq
    %v2246 = vshrl.u32 %v2245, 7
    %v2247 = vsub.s32 %v2140, %v2246
    %v2248 = vrot.slane %v739, %v2247
    %v2249 = vsel %vm2145, %v2248, %v2244
    %v2250 = vlaneseq
    %v2251 = vshrl.u32 %v2250, 7
    %v2252 = vsub.s32 %v2147, %v2251
    %v2253 = vrot.slane %v742, %v2252
    %v2254 = vsel %vm2152, %v2253, %v2249
    %v2255 = vlaneseq
    %v2256 = vshrl.u32 %v2255, 7
    %v2257 = vsub.s32 %v2154, %v2256
    %v2258 = vrot.slane %v745, %v2257
    %v2259 = vsel %vm2159, %v2258, %v2254
    %v2260 = vlaneseq
    %v2261 = vshrl.u32 %v2260, 7
    %v2262 = vsub.s32 %v2161, %v2261
    %v2263 = vrot.slane %v748, %v2262
    %v2264 = vsel %vm2166, %v2263, %v2259
    %v2265 = vlaneseq
    %v2266 = vshrl.u32 %v2265, 7
    %v2267 = vsub.s32 %v2168, %v2266
    %v2268 = vrot.slane %v751, %v2267
    %v2269 = vsel %vm2173, %v2268, %v2264
    %v2270 = vlaneseq
    %v2271 = vshrl.u32 %v2270, 7
    %v2272 = vsub.s32 %v2175, %v2271
    %v2273 = vrot.slane %v754, %v2272
    %v2274 = vsel %vm2180, %v2273, %v2269
    %v2275 = vlaneseq
    %v2276 = vshrl.u32 %v2275, 7
    %v2277 = vsub.s32 %v2182, %v2276
    %v2278 = vrot.slane %v757, %v2277
    %v2279 = vsel %vm2187, %v2278, %v2274
    %v2280 = vlaneseq
    %v2281 = vshrl.u32 %v2280, 7
    %v2282 = vsub.s32 %v2189, %v2281
    %v2283 = vrot.slane %v760, %v2282
    %v2284 = vsel %vm2194, %v2283, %v2279
    %v2285 = vlaneseq
    %v2286 = vshrl.u32 %v2285, 7
    %v2287 = vsub.s32 %v2196, %v2286
    %v2288 = vrot.slane %v763, %v2287
    %v2289 = vsel %vm2201, %v2288, %v2284
    %v2290 = vlaneseq
    %v2291 = vshrl.u32 %v2290, 7
    %v2292 = vsub.s32 %v2203, %v2291
    %v2293 = vrot.slane %v766, %v2292
    %v2294 = vsel %vm2208, %v2293, %v2289
    %v2295 = vlaneseq
    %v2296 = vshrl.u32 %v2295, 7
    %v2297 = vsub.s32 %v2210, %v2296
    %v2298 = vrot.slane %v769, %v2297
    %v2299 = vsel %vm2215, %v2298, %v2294
    %v2300 = vlaneseq
    %v2301 = vshrl.u32 %v2300, 7
    %v2302 = vsub.s32 %v2217, %v2301
    %v2303 = vrot.slane %v772, %v2302
    %v2304 = vsel %vm2222, %v2303, %v2299
    %v2305 = vlaneseq
    %v2306 = vshrl.u32 %v2305, 7
    %v2307 = vsub.s32 %v2224, %v2306
    %v2308 = vrot.slane %v775, %v2307
    %v2309 = vsel %vm2229, %v2308, %v2304
    %v2310 = vlaneseq
    %v2311 = vshrl.u32 %v2310, 7
    %v2312 = vsub.s32 %v2121, %v2311
    %v2313 = vrot.slane %v778, %v2312
    %v2314 = vlaneseq
    %v2315 = vshrl.u32 %v2314, 7
    %v2316 = vsub.s32 %v2126, %v2315
    %v2317 = vrot.slane %v781, %v2316
    %v2318 = vsel %vm2131, %v2317, %v2313
    %v2319 = vlaneseq
    %v2320 = vshrl.u32 %v2319, 7
    %v2321 = vsub.s32 %v2133, %v2320
    %v2322 = vrot.slane %v784, %v2321
    %v2323 = vsel %vm2138, %v2322, %v2318
    %v2324 = vlaneseq
    %v2325 = vshrl.u32 %v2324, 7
    %v2326 = vsub.s32 %v2140, %v2325
    %v2327 = vrot.slane %v787, %v2326
    %v2328 = vsel %vm2145, %v2327, %v2323
    %v2329 = vlaneseq
    %v2330 = vshrl.u32 %v2329, 7
    %v2331 = vsub.s32 %v2147, %v2330
    %v2332 = vrot.slane %v790, %v2331
    %v2333 = vsel %vm2152, %v2332, %v2328
    %v2334 = vlaneseq
    %v2335 = vshrl.u32 %v2334, 7
    %v2336 = vsub.s32 %v2154, %v2335
    %v2337 = vrot.slane %v793, %v2336
    %v2338 = vsel %vm2159, %v2337, %v2333
    %v2339 = vlaneseq
    %v2340 = vshrl.u32 %v2339, 7
    %v2341 = vsub.s32 %v2161, %v2340
    %v2342 = vrot.slane %v796, %v2341
    %v2343 = vsel %vm2166, %v2342, %v2338
    %v2344 = vlaneseq
    %v2345 = vshrl.u32 %v2344, 7
    %v2346 = vsub.s32 %v2168, %v2345
    %v2347 = vrot.slane %v799, %v2346
    %v2348 = vsel %vm2173, %v2347, %v2343
    %v2349 = vlaneseq
    %v2350 = vshrl.u32 %v2349, 7
    %v2351 = vsub.s32 %v2175, %v2350
    %v2352 = vrot.slane %v802, %v2351
    %v2353 = vsel %vm2180, %v2352, %v2348
    %v2354 = vlaneseq
    %v2355 = vshrl.u32 %v2354, 7
    %v2356 = vsub.s32 %v2182, %v2355
    %v2357 = vrot.slane %v805, %v2356
    %v2358 = vsel %vm2187, %v2357, %v2353
    %v2359 = vlaneseq
    %v2360 = vshrl.u32 %v2359, 7
    %v2361 = vsub.s32 %v2189, %v2360
    %v2362 = vrot.slane %v808, %v2361
    %v2363 = vsel %vm2194, %v2362, %v2358
    %v2364 = vlaneseq
    %v2365 = vshrl.u32 %v2364, 7
    %v2366 = vsub.s32 %v2196, %v2365
    %v2367 = vrot.slane %v811, %v2366
    %v2368 = vsel %vm2201, %v2367, %v2363
    %v2369 = vlaneseq
    %v2370 = vshrl.u32 %v2369, 7
    %v2371 = vsub.s32 %v2203, %v2370
    %v2372 = vrot.slane %v814, %v2371
    %v2373 = vsel %vm2208, %v2372, %v2368
    %v2374 = vlaneseq
    %v2375 = vshrl.u32 %v2374, 7
    %v2376 = vsub.s32 %v2210, %v2375
    %v2377 = vrot.slane %v817, %v2376
    %v2378 = vsel %vm2215, %v2377, %v2373
    %v2379 = vlaneseq
    %v2380 = vshrl.u32 %v2379, 7
    %v2381 = vsub.s32 %v2217, %v2380
    %v2382 = vrot.slane %v820, %v2381
    %v2383 = vsel %vm2222, %v2382, %v2378
    %v2384 = vlaneseq
    %v2385 = vshrl.u32 %v2384, 7
    %v2386 = vsub.s32 %v2224, %v2385
    %v2387 = vrot.slane %v823, %v2386
    %v2388 = vsel %vm2229, %v2387, %v2383
    %v2389 = vlaneseq
    %v2390 = vshrl.u32 %v2389, 7
    %v2391 = vsub.s32 %v2121, %v2390
    %v2392 = vrot.slane %v826, %v2391
    %v2393 = vlaneseq
    %v2394 = vshrl.u32 %v2393, 7
    %v2395 = vsub.s32 %v2126, %v2394
    %v2396 = vrot.slane %v829, %v2395
    %v2397 = vsel %vm2131, %v2396, %v2392
    %v2398 = vlaneseq
    %v2399 = vshrl.u32 %v2398, 7
    %v2400 = vsub.s32 %v2133, %v2399
    %v2401 = vrot.slane %v832, %v2400
    %v2402 = vsel %vm2138, %v2401, %v2397
    %v2403 = vlaneseq
    %v2404 = vshrl.u32 %v2403, 7
    %v2405 = vsub.s32 %v2140, %v2404
    %v2406 = vrot.slane %v835, %v2405
    %v2407 = vsel %vm2145, %v2406, %v2402
    %v2408 = vlaneseq
    %v2409 = vshrl.u32 %v2408, 7
    %v2410 = vsub.s32 %v2147, %v2409
    %v2411 = vrot.slane %v838, %v2410
    %v2412 = vsel %vm2152, %v2411, %v2407
    %v2413 = vlaneseq
    %v2414 = vshrl.u32 %v2413, 7
    %v2415 = vsub.s32 %v2154, %v2414
    %v2416 = vrot.slane %v841, %v2415
    %v2417 = vsel %vm2159, %v2416, %v2412
    %v2418 = vlaneseq
    %v2419 = vshrl.u32 %v2418, 7
    %v2420 = vsub.s32 %v2161, %v2419
    %v2421 = vrot.slane %v844, %v2420
    %v2422 = vsel %vm2166, %v2421, %v2417
    %v2423 = vlaneseq
    %v2424 = vshrl.u32 %v2423, 7
    %v2425 = vsub.s32 %v2168, %v2424
    %v2426 = vrot.slane %v847, %v2425
    %v2427 = vsel %vm2173, %v2426, %v2422
    %v2428 = vlaneseq
    %v2429 = vshrl.u32 %v2428, 7
    %v2430 = vsub.s32 %v2175, %v2429
    %v2431 = vrot.slane %v850, %v2430
    %v2432 = vsel %vm2180, %v2431, %v2427
    %v2433 = vlaneseq
    %v2434 = vshrl.u32 %v2433, 7
    %v2435 = vsub.s32 %v2182, %v2434
    %v2436 = vrot.slane %v853, %v2435
    %v2437 = vsel %vm2187, %v2436, %v2432
    %v2438 = vlaneseq
    %v2439 = vshrl.u32 %v2438, 7
    %v2440 = vsub.s32 %v2189, %v2439
    %v2441 = vrot.slane %v856, %v2440
    %v2442 = vsel %vm2194, %v2441, %v2437
    %v2443 = vlaneseq
    %v2444 = vshrl.u32 %v2443, 7
    %v2445 = vsub.s32 %v2196, %v2444
    %v2446 = vrot.slane %v859, %v2445
    %v2447 = vsel %vm2201, %v2446, %v2442
    %v2448 = vlaneseq
    %v2449 = vshrl.u32 %v2448, 7
    %v2450 = vsub.s32 %v2203, %v2449
    %v2451 = vrot.slane %v862, %v2450
    %v2452 = vsel %vm2208, %v2451, %v2447
    %v2453 = vlaneseq
    %v2454 = vshrl.u32 %v2453, 7
    %v2455 = vsub.s32 %v2210, %v2454
    %v2456 = vrot.slane %v865, %v2455
    %v2457 = vsel %vm2215, %v2456, %v2452
    %v2458 = vlaneseq
    %v2459 = vshrl.u32 %v2458, 7
    %v2460 = vsub.s32 %v2217, %v2459
    %v2461 = vrot.slane %v868, %v2460
    %v2462 = vsel %vm2222, %v2461, %v2457
    %v2463 = vlaneseq
    %v2464 = vshrl.u32 %v2463, 7
    %v2465 = vsub.s32 %v2224, %v2464
    %v2466 = vrot.slane %v871, %v2465
    %v2467 = vsel %vm2229, %v2466, %v2462
    %v2468 = vlaneseq
    %v2469 = vshrl.u32 %v2468, 7
    %v2470 = vsub.s32 %v2121, %v2469
    %v2471 = vrot.slane %v874, %v2470
    %v2472 = vlaneseq
    %v2473 = vshrl.u32 %v2472, 7
    %v2474 = vsub.s32 %v2126, %v2473
    %v2475 = vrot.slane %v877, %v2474
    %v2476 = vsel %vm2131, %v2475, %v2471
    %v2477 = vlaneseq
    %v2478 = vshrl.u32 %v2477, 7
    %v2479 = vsub.s32 %v2133, %v2478
    %v2480 = vrot.slane %v880, %v2479
    %v2481 = vsel %vm2138, %v2480, %v2476
    %v2482 = vlaneseq
    %v2483 = vshrl.u32 %v2482, 7
    %v2484 = vsub.s32 %v2140, %v2483
    %v2485 = vrot.slane %v883, %v2484
    %v2486 = vsel %vm2145, %v2485, %v2481
    %v2487 = vlaneseq
    %v2488 = vshrl.u32 %v2487, 7
    %v2489 = vsub.s32 %v2147, %v2488
    %v2490 = vrot.slane %v886, %v2489
    %v2491 = vsel %vm2152, %v2490, %v2486
    %v2492 = vlaneseq
    %v2493 = vshrl.u32 %v2492, 7
    %v2494 = vsub.s32 %v2154, %v2493
    %v2495 = vrot.slane %v889, %v2494
    %v2496 = vsel %vm2159, %v2495, %v2491
    %v2497 = vlaneseq
    %v2498 = vshrl.u32 %v2497, 7
    %v2499 = vsub.s32 %v2161, %v2498
    %v2500 = vrot.slane %v892, %v2499
    %v2501 = vsel %vm2166, %v2500, %v2496
    %v2502 = vlaneseq
    %v2503 = vshrl.u32 %v2502, 7
    %v2504 = vsub.s32 %v2168, %v2503
    %v2505 = vrot.slane %v895, %v2504
    %v2506 = vsel %vm2173, %v2505, %v2501
    %v2507 = vlaneseq
    %v2508 = vshrl.u32 %v2507, 7
    %v2509 = vsub.s32 %v2175, %v2508
    %v2510 = vrot.slane %v898, %v2509
    %v2511 = vsel %vm2180, %v2510, %v2506
    %v2512 = vlaneseq
    %v2513 = vshrl.u32 %v2512, 7
    %v2514 = vsub.s32 %v2182, %v2513
    %v2515 = vrot.slane %v901, %v2514
    %v2516 = vsel %vm2187, %v2515, %v2511
    %v2517 = vlaneseq
    %v2518 = vshrl.u32 %v2517, 7
    %v2519 = vsub.s32 %v2189, %v2518
    %v2520 = vrot.slane %v904, %v2519
    %v2521 = vsel %vm2194, %v2520, %v2516
    %v2522 = vlaneseq
    %v2523 = vshrl.u32 %v2522, 7
    %v2524 = vsub.s32 %v2196, %v2523
    %v2525 = vrot.slane %v907, %v2524
    %v2526 = vsel %vm2201, %v2525, %v2521
    %v2527 = vlaneseq
    %v2528 = vshrl.u32 %v2527, 7
    %v2529 = vsub.s32 %v2203, %v2528
    %v2530 = vrot.slane %v910, %v2529
    %v2531 = vsel %vm2208, %v2530, %v2526
    %v2532 = vlaneseq
    %v2533 = vshrl.u32 %v2532, 7
    %v2534 = vsub.s32 %v2210, %v2533
    %v2535 = vrot.slane %v913, %v2534
    %v2536 = vsel %vm2215, %v2535, %v2531
    %v2537 = vlaneseq
    %v2538 = vshrl.u32 %v2537, 7
    %v2539 = vsub.s32 %v2217, %v2538
    %v2540 = vrot.slane %v916, %v2539
    %v2541 = vsel %vm2222, %v2540, %v2536
    %v2542 = vlaneseq
    %v2543 = vshrl.u32 %v2542, 7
    %v2544 = vsub.s32 %v2224, %v2543
    %v2545 = vrot.slane %v919, %v2544
    %v2546 = vsel %vm2229, %v2545, %v2541
    %v2547 = vlaneseq
    %v2548 = vshrl.u32 %v2547, 7
    %v2549 = vsub.s32 %v2121, %v2548
    %v2550 = vrot.slane %v922, %v2549
    %v2551 = vlaneseq
    %v2552 = vshrl.u32 %v2551, 7
    %v2553 = vsub.s32 %v2126, %v2552
    %v2554 = vrot.slane %v925, %v2553
    %v2555 = vsel %vm2131, %v2554, %v2550
    %v2556 = vlaneseq
    %v2557 = vshrl.u32 %v2556, 7
    %v2558 = vsub.s32 %v2133, %v2557
    %v2559 = vrot.slane %v928, %v2558
    %v2560 = vsel %vm2138, %v2559, %v2555
    %v2561 = vlaneseq
    %v2562 = vshrl.u32 %v2561, 7
    %v2563 = vsub.s32 %v2140, %v2562
    %v2564 = vrot.slane %v931, %v2563
    %v2565 = vsel %vm2145, %v2564, %v2560
    %v2566 = vlaneseq
    %v2567 = vshrl.u32 %v2566, 7
    %v2568 = vsub.s32 %v2147, %v2567
    %v2569 = vrot.slane %v934, %v2568
    %v2570 = vsel %vm2152, %v2569, %v2565
    %v2571 = vlaneseq
    %v2572 = vshrl.u32 %v2571, 7
    %v2573 = vsub.s32 %v2154, %v2572
    %v2574 = vrot.slane %v937, %v2573
    %v2575 = vsel %vm2159, %v2574, %v2570
    %v2576 = vlaneseq
    %v2577 = vshrl.u32 %v2576, 7
    %v2578 = vsub.s32 %v2161, %v2577
    %v2579 = vrot.slane %v940, %v2578
    %v2580 = vsel %vm2166, %v2579, %v2575
    %v2581 = vlaneseq
    %v2582 = vshrl.u32 %v2581, 7
    %v2583 = vsub.s32 %v2168, %v2582
    %v2584 = vrot.slane %v943, %v2583
    %v2585 = vsel %vm2173, %v2584, %v2580
    %v2586 = vlaneseq
    %v2587 = vshrl.u32 %v2586, 7
    %v2588 = vsub.s32 %v2175, %v2587
    %v2589 = vrot.slane %v946, %v2588
    %v2590 = vsel %vm2180, %v2589, %v2585
    %v2591 = vlaneseq
    %v2592 = vshrl.u32 %v2591, 7
    %v2593 = vsub.s32 %v2182, %v2592
    %v2594 = vrot.slane %v949, %v2593
    %v2595 = vsel %vm2187, %v2594, %v2590
    %v2596 = vlaneseq
    %v2597 = vshrl.u32 %v2596, 7
    %v2598 = vsub.s32 %v2189, %v2597
    %v2599 = vrot.slane %v952, %v2598
    %v2600 = vsel %vm2194, %v2599, %v2595
    %v2601 = vlaneseq
    %v2602 = vshrl.u32 %v2601, 7
    %v2603 = vsub.s32 %v2196, %v2602
    %v2604 = vrot.slane %v955, %v2603
    %v2605 = vsel %vm2201, %v2604, %v2600
    %v2606 = vlaneseq
    %v2607 = vshrl.u32 %v2606, 7
    %v2608 = vsub.s32 %v2203, %v2607
    %v2609 = vrot.slane %v958, %v2608
    %v2610 = vsel %vm2208, %v2609, %v2605
    %v2611 = vlaneseq
    %v2612 = vshrl.u32 %v2611, 7
    %v2613 = vsub.s32 %v2210, %v2612
    %v2614 = vrot.slane %v961, %v2613
    %v2615 = vsel %vm2215, %v2614, %v2610
    %v2616 = vlaneseq
    %v2617 = vshrl.u32 %v2616, 7
    %v2618 = vsub.s32 %v2217, %v2617
    %v2619 = vrot.slane %v964, %v2618
    %v2620 = vsel %vm2222, %v2619, %v2615
    %v2621 = vlaneseq
    %v2622 = vshrl.u32 %v2621, 7
    %v2623 = vsub.s32 %v2224, %v2622
    %v2624 = vrot.slane %v967, %v2623
    %v2625 = vsel %vm2229, %v2624, %v2620
    %v2626 = vlaneseq
    %v2627 = vshrl.u32 %v2626, 7
    %v2628 = vsub.s32 %v2121, %v2627
    %v2629 = vrot.slane %v970, %v2628
    %v2630 = vlaneseq
    %v2631 = vshrl.u32 %v2630, 7
    %v2632 = vsub.s32 %v2126, %v2631
    %v2633 = vrot.slane %v973, %v2632
    %v2634 = vsel %vm2131, %v2633, %v2629
    %v2635 = vlaneseq
    %v2636 = vshrl.u32 %v2635, 7
    %v2637 = vsub.s32 %v2133, %v2636
    %v2638 = vrot.slane %v976, %v2637
    %v2639 = vsel %vm2138, %v2638, %v2634
    %v2640 = vlaneseq
    %v2641 = vshrl.u32 %v2640, 7
    %v2642 = vsub.s32 %v2140, %v2641
    %v2643 = vrot.slane %v979, %v2642
    %v2644 = vsel %vm2145, %v2643, %v2639
    %v2645 = vlaneseq
    %v2646 = vshrl.u32 %v2645, 7
    %v2647 = vsub.s32 %v2147, %v2646
    %v2648 = vrot.slane %v982, %v2647
    %v2649 = vsel %vm2152, %v2648, %v2644
    %v2650 = vlaneseq
    %v2651 = vshrl.u32 %v2650, 7
    %v2652 = vsub.s32 %v2154, %v2651
    %v2653 = vrot.slane %v985, %v2652
    %v2654 = vsel %vm2159, %v2653, %v2649
    %v2655 = vlaneseq
    %v2656 = vshrl.u32 %v2655, 7
    %v2657 = vsub.s32 %v2161, %v2656
    %v2658 = vrot.slane %v988, %v2657
    %v2659 = vsel %vm2166, %v2658, %v2654
    %v2660 = vlaneseq
    %v2661 = vshrl.u32 %v2660, 7
    %v2662 = vsub.s32 %v2168, %v2661
    %v2663 = vrot.slane %v991, %v2662
    %v2664 = vsel %vm2173, %v2663, %v2659
    %v2665 = vlaneseq
    %v2666 = vshrl.u32 %v2665, 7
    %v2667 = vsub.s32 %v2175, %v2666
    %v2668 = vrot.slane %v994, %v2667
    %v2669 = vsel %vm2180, %v2668, %v2664
    %v2670 = vlaneseq
    %v2671 = vshrl.u32 %v2670, 7
    %v2672 = vsub.s32 %v2182, %v2671
    %v2673 = vrot.slane %v997, %v2672
    %v2674 = vsel %vm2187, %v2673, %v2669
    %v2675 = vlaneseq
    %v2676 = vshrl.u32 %v2675, 7
    %v2677 = vsub.s32 %v2189, %v2676
    %v2678 = vrot.slane %v1000, %v2677
    %v2679 = vsel %vm2194, %v2678, %v2674
    %v2680 = vlaneseq
    %v2681 = vshrl.u32 %v2680, 7
    %v2682 = vsub.s32 %v2196, %v2681
    %v2683 = vrot.slane %v1003, %v2682
    %v2684 = vsel %vm2201, %v2683, %v2679
    %v2685 = vlaneseq
    %v2686 = vshrl.u32 %v2685, 7
    %v2687 = vsub.s32 %v2203, %v2686
    %v2688 = vrot.slane %v1006, %v2687
    %v2689 = vsel %vm2208, %v2688, %v2684
    %v2690 = vlaneseq
    %v2691 = vshrl.u32 %v2690, 7
    %v2692 = vsub.s32 %v2210, %v2691
    %v2693 = vrot.slane %v1009, %v2692
    %v2694 = vsel %vm2215, %v2693, %v2689
    %v2695 = vlaneseq
    %v2696 = vshrl.u32 %v2695, 7
    %v2697 = vsub.s32 %v2217, %v2696
    %v2698 = vrot.slane %v1012, %v2697
    %v2699 = vsel %vm2222, %v2698, %v2694
    %v2700 = vlaneseq
    %v2701 = vshrl.u32 %v2700, 7
    %v2702 = vsub.s32 %v2224, %v2701
    %v2703 = vrot.slane %v1015, %v2702
    %v2704 = vsel %vm2229, %v2703, %v2699
    %v2705 = vlaneseq
    %v2706 = vshrl.u32 %v2705, 7
    %v2707 = vsub.s32 %v2121, %v2706
    %v2708 = vrot.slane %v1018, %v2707
    %v2709 = vlaneseq
    %v2710 = vshrl.u32 %v2709, 7
    %v2711 = vsub.s32 %v2126, %v2710
    %v2712 = vrot.slane %v1021, %v2711
    %v2713 = vsel %vm2131, %v2712, %v2708
    %v2714 = vlaneseq
    %v2715 = vshrl.u32 %v2714, 7
    %v2716 = vsub.s32 %v2133, %v2715
    %v2717 = vrot.slane %v1024, %v2716
    %v2718 = vsel %vm2138, %v2717, %v2713
    %v2719 = vlaneseq
    %v2720 = vshrl.u32 %v2719, 7
    %v2721 = vsub.s32 %v2140, %v2720
    %v2722 = vrot.slane %v1027, %v2721
    %v2723 = vsel %vm2145, %v2722, %v2718
    %v2724 = vlaneseq
    %v2725 = vshrl.u32 %v2724, 7
    %v2726 = vsub.s32 %v2147, %v2725
    %v2727 = vrot.slane %v1030, %v2726
    %v2728 = vsel %vm2152, %v2727, %v2723
    %v2729 = vlaneseq
    %v2730 = vshrl.u32 %v2729, 7
    %v2731 = vsub.s32 %v2154, %v2730
    %v2732 = vrot.slane %v1033, %v2731
    %v2733 = vsel %vm2159, %v2732, %v2728
    %v2734 = vlaneseq
    %v2735 = vshrl.u32 %v2734, 7
    %v2736 = vsub.s32 %v2161, %v2735
    %v2737 = vrot.slane %v1036, %v2736
    %v2738 = vsel %vm2166, %v2737, %v2733
    %v2739 = vlaneseq
    %v2740 = vshrl.u32 %v2739, 7
    %v2741 = vsub.s32 %v2168, %v2740
    %v2742 = vrot.slane %v1039, %v2741
    %v2743 = vsel %vm2173, %v2742, %v2738
    %v2744 = vlaneseq
    %v2745 = vshrl.u32 %v2744, 7
    %v2746 = vsub.s32 %v2175, %v2745
    %v2747 = vrot.slane %v1042, %v2746
    %v2748 = vsel %vm2180, %v2747, %v2743
    %v2749 = vlaneseq
    %v2750 = vshrl.u32 %v2749, 7
    %v2751 = vsub.s32 %v2182, %v2750
    %v2752 = vrot.slane %v1045, %v2751
    %v2753 = vsel %vm2187, %v2752, %v2748
    %v2754 = vlaneseq
    %v2755 = vshrl.u32 %v2754, 7
    %v2756 = vsub.s32 %v2189, %v2755
    %v2757 = vrot.slane %v1048, %v2756
    %v2758 = vsel %vm2194, %v2757, %v2753
    %v2759 = vlaneseq
    %v2760 = vshrl.u32 %v2759, 7
    %v2761 = vsub.s32 %v2196, %v2760
    %v2762 = vrot.slane %v1051, %v2761
    %v2763 = vsel %vm2201, %v2762, %v2758
    %v2764 = vlaneseq
    %v2765 = vshrl.u32 %v2764, 7
    %v2766 = vsub.s32 %v2203, %v2765
    %v2767 = vrot.slane %v1054, %v2766
    %v2768 = vsel %vm2208, %v2767, %v2763
    %v2769 = vlaneseq
    %v2770 = vshrl.u32 %v2769, 7
    %v2771 = vsub.s32 %v2210, %v2770
    %v2772 = vrot.slane %v1057, %v2771
    %v2773 = vsel %vm2215, %v2772, %v2768
    %v2774 = vlaneseq
    %v2775 = vshrl.u32 %v2774, 7
    %v2776 = vsub.s32 %v2217, %v2775
    %v2777 = vrot.slane %v1060, %v2776
    %v2778 = vsel %vm2222, %v2777, %v2773
    %v2779 = vlaneseq
    %v2780 = vshrl.u32 %v2779, 7
    %v2781 = vsub.s32 %v2224, %v2780
    %v2782 = vrot.slane %v1063, %v2781
    %v2783 = vsel %vm2229, %v2782, %v2778
    %v2784 = vlaneseq
    %v2785 = vshrl.u32 %v2784, 7
    %v2786 = vsub.s32 %v2121, %v2785
    %v2787 = vrot.slane %v1066, %v2786
    %v2788 = vlaneseq
    %v2789 = vshrl.u32 %v2788, 7
    %v2790 = vsub.s32 %v2126, %v2789
    %v2791 = vrot.slane %v1069, %v2790
    %v2792 = vsel %vm2131, %v2791, %v2787
    %v2793 = vlaneseq
    %v2794 = vshrl.u32 %v2793, 7
    %v2795 = vsub.s32 %v2133, %v2794
    %v2796 = vrot.slane %v1072, %v2795
    %v2797 = vsel %vm2138, %v2796, %v2792
    %v2798 = vlaneseq
    %v2799 = vshrl.u32 %v2798, 7
    %v2800 = vsub.s32 %v2140, %v2799
    %v2801 = vrot.slane %v1075, %v2800
    %v2802 = vsel %vm2145, %v2801, %v2797
    %v2803 = vlaneseq
    %v2804 = vshrl.u32 %v2803, 7
    %v2805 = vsub.s32 %v2147, %v2804
    %v2806 = vrot.slane %v1078, %v2805
    %v2807 = vsel %vm2152, %v2806, %v2802
    %v2808 = vlaneseq
    %v2809 = vshrl.u32 %v2808, 7
    %v2810 = vsub.s32 %v2154, %v2809
    %v2811 = vrot.slane %v1081, %v2810
    %v2812 = vsel %vm2159, %v2811, %v2807
    %v2813 = vlaneseq
    %v2814 = vshrl.u32 %v2813, 7
    %v2815 = vsub.s32 %v2161, %v2814
    %v2816 = vrot.slane %v1084, %v2815
    %v2817 = vsel %vm2166, %v2816, %v2812
    %v2818 = vlaneseq
    %v2819 = vshrl.u32 %v2818, 7
    %v2820 = vsub.s32 %v2168, %v2819
    %v2821 = vrot.slane %v1087, %v2820
    %v2822 = vsel %vm2173, %v2821, %v2817
    %v2823 = vlaneseq
    %v2824 = vshrl.u32 %v2823, 7
    %v2825 = vsub.s32 %v2175, %v2824
    %v2826 = vrot.slane %v1090, %v2825
    %v2827 = vsel %vm2180, %v2826, %v2822
    %v2828 = vlaneseq
    %v2829 = vshrl.u32 %v2828, 7
    %v2830 = vsub.s32 %v2182, %v2829
    %v2831 = vrot.slane %v1093, %v2830
    %v2832 = vsel %vm2187, %v2831, %v2827
    %v2833 = vlaneseq
    %v2834 = vshrl.u32 %v2833, 7
    %v2835 = vsub.s32 %v2189, %v2834
    %v2836 = vrot.slane %v1096, %v2835
    %v2837 = vsel %vm2194, %v2836, %v2832
    %v2838 = vlaneseq
    %v2839 = vshrl.u32 %v2838, 7
    %v2840 = vsub.s32 %v2196, %v2839
    %v2841 = vrot.slane %v1099, %v2840
    %v2842 = vsel %vm2201, %v2841, %v2837
    %v2843 = vlaneseq
    %v2844 = vshrl.u32 %v2843, 7
    %v2845 = vsub.s32 %v2203, %v2844
    %v2846 = vrot.slane %v1102, %v2845
    %v2847 = vsel %vm2208, %v2846, %v2842
    %v2848 = vlaneseq
    %v2849 = vshrl.u32 %v2848, 7
    %v2850 = vsub.s32 %v2210, %v2849
    %v2851 = vrot.slane %v1105, %v2850
    %v2852 = vsel %vm2215, %v2851, %v2847
    %v2853 = vlaneseq
    %v2854 = vshrl.u32 %v2853, 7
    %v2855 = vsub.s32 %v2217, %v2854
    %v2856 = vrot.slane %v1108, %v2855
    %v2857 = vsel %vm2222, %v2856, %v2852
    %v2858 = vlaneseq
    %v2859 = vshrl.u32 %v2858, 7
    %v2860 = vsub.s32 %v2224, %v2859
    %v2861 = vrot.slane %v1111, %v2860
    %v2862 = vsel %vm2229, %v2861, %v2857
    %v2863 = vlaneseq
    %v2864 = vshrl.u32 %v2863, 7
    %v2865 = vsub.s32 %v2121, %v2864
    %v2866 = vrot.slane %v1114, %v2865
    %v2867 = vlaneseq
    %v2868 = vshrl.u32 %v2867, 7
    %v2869 = vsub.s32 %v2126, %v2868
    %v2870 = vrot.slane %v1117, %v2869
    %v2871 = vsel %vm2131, %v2870, %v2866
    %v2872 = vlaneseq
    %v2873 = vshrl.u32 %v2872, 7
    %v2874 = vsub.s32 %v2133, %v2873
    %v2875 = vrot.slane %v1120, %v2874
    %v2876 = vsel %vm2138, %v2875, %v2871
    %v2877 = vlaneseq
    %v2878 = vshrl.u32 %v2877, 7
    %v2879 = vsub.s32 %v2140, %v2878
    %v2880 = vrot.slane %v1123, %v2879
    %v2881 = vsel %vm2145, %v2880, %v2876
    %v2882 = vlaneseq
    %v2883 = vshrl.u32 %v2882, 7
    %v2884 = vsub.s32 %v2147, %v2883
    %v2885 = vrot.slane %v1126, %v2884
    %v2886 = vsel %vm2152, %v2885, %v2881
    %v2887 = vlaneseq
    %v2888 = vshrl.u32 %v2887, 7
    %v2889 = vsub.s32 %v2154, %v2888
    %v2890 = vrot.slane %v1129, %v2889
    %v2891 = vsel %vm2159, %v2890, %v2886
    %v2892 = vlaneseq
    %v2893 = vshrl.u32 %v2892, 7
    %v2894 = vsub.s32 %v2161, %v2893
    %v2895 = vrot.slane %v1132, %v2894
    %v2896 = vsel %vm2166, %v2895, %v2891
    %v2897 = vlaneseq
    %v2898 = vshrl.u32 %v2897, 7
    %v2899 = vsub.s32 %v2168, %v2898
    %v2900 = vrot.slane %v1135, %v2899
    %v2901 = vsel %vm2173, %v2900, %v2896
    %v2902 = vlaneseq
    %v2903 = vshrl.u32 %v2902, 7
    %v2904 = vsub.s32 %v2175, %v2903
    %v2905 = vrot.slane %v1138, %v2904
    %v2906 = vsel %vm2180, %v2905, %v2901
    %v2907 = vlaneseq
    %v2908 = vshrl.u32 %v2907, 7
    %v2909 = vsub.s32 %v2182, %v2908
    %v2910 = vrot.slane %v1141, %v2909
    %v2911 = vsel %vm2187, %v2910, %v2906
    %v2912 = vlaneseq
    %v2913 = vshrl.u32 %v2912, 7
    %v2914 = vsub.s32 %v2189, %v2913
    %v2915 = vrot.slane %v1144, %v2914
    %v2916 = vsel %vm2194, %v2915, %v2911
    %v2917 = vlaneseq
    %v2918 = vshrl.u32 %v2917, 7
    %v2919 = vsub.s32 %v2196, %v2918
    %v2920 = vrot.slane %v1147, %v2919
    %v2921 = vsel %vm2201, %v2920, %v2916
    %v2922 = vlaneseq
    %v2923 = vshrl.u32 %v2922, 7
    %v2924 = vsub.s32 %v2203, %v2923
    %v2925 = vrot.slane %v1150, %v2924
    %v2926 = vsel %vm2208, %v2925, %v2921
    %v2927 = vlaneseq
    %v2928 = vshrl.u32 %v2927, 7
    %v2929 = vsub.s32 %v2210, %v2928
    %v2930 = vrot.slane %v1153, %v2929
    %v2931 = vsel %vm2215, %v2930, %v2926
    %v2932 = vlaneseq
    %v2933 = vshrl.u32 %v2932, 7
    %v2934 = vsub.s32 %v2217, %v2933
    %v2935 = vrot.slane %v1156, %v2934
    %v2936 = vsel %vm2222, %v2935, %v2931
    %v2937 = vlaneseq
    %v2938 = vshrl.u32 %v2937, 7
    %v2939 = vsub.s32 %v2224, %v2938
    %v2940 = vrot.slane %v1159, %v2939
    %v2941 = vsel %vm2229, %v2940, %v2936
    %v2942 = vlaneseq
    %v2943 = vshrl.u32 %v2942, 7
    %v2944 = vsub.s32 %v2121, %v2943
    %v2945 = vrot.slane %v1162, %v2944
    %v2946 = vlaneseq
    %v2947 = vshrl.u32 %v2946, 7
    %v2948 = vsub.s32 %v2126, %v2947
    %v2949 = vrot.slane %v1165, %v2948
    %v2950 = vsel %vm2131, %v2949, %v2945
    %v2951 = vlaneseq
    %v2952 = vshrl.u32 %v2951, 7
    %v2953 = vsub.s32 %v2133, %v2952
    %v2954 = vrot.slane %v1168, %v2953
    %v2955 = vsel %vm2138, %v2954, %v2950
    %v2956 = vlaneseq
    %v2957 = vshrl.u32 %v2956, 7
    %v2958 = vsub.s32 %v2140, %v2957
    %v2959 = vrot.slane %v1171, %v2958
    %v2960 = vsel %vm2145, %v2959, %v2955
    %v2961 = vlaneseq
    %v2962 = vshrl.u32 %v2961, 7
    %v2963 = vsub.s32 %v2147, %v2962
    %v2964 = vrot.slane %v1174, %v2963
    %v2965 = vsel %vm2152, %v2964, %v2960
    %v2966 = vlaneseq
    %v2967 = vshrl.u32 %v2966, 7
    %v2968 = vsub.s32 %v2154, %v2967
    %v2969 = vrot.slane %v1177, %v2968
    %v2970 = vsel %vm2159, %v2969, %v2965
    %v2971 = vlaneseq
    %v2972 = vshrl.u32 %v2971, 7
    %v2973 = vsub.s32 %v2161, %v2972
    %v2974 = vrot.slane %v1180, %v2973
    %v2975 = vsel %vm2166, %v2974, %v2970
    %v2976 = vlaneseq
    %v2977 = vshrl.u32 %v2976, 7
    %v2978 = vsub.s32 %v2168, %v2977
    %v2979 = vrot.slane %v1183, %v2978
    %v2980 = vsel %vm2173, %v2979, %v2975
    %v2981 = vlaneseq
    %v2982 = vshrl.u32 %v2981, 7
    %v2983 = vsub.s32 %v2175, %v2982
    %v2984 = vrot.slane %v1186, %v2983
    %v2985 = vsel %vm2180, %v2984, %v2980
    %v2986 = vlaneseq
    %v2987 = vshrl.u32 %v2986, 7
    %v2988 = vsub.s32 %v2182, %v2987
    %v2989 = vrot.slane %v1189, %v2988
    %v2990 = vsel %vm2187, %v2989, %v2985
    %v2991 = vlaneseq
    %v2992 = vshrl.u32 %v2991, 7
    %v2993 = vsub.s32 %v2189, %v2992
    %v2994 = vrot.slane %v1192, %v2993
    %v2995 = vsel %vm2194, %v2994, %v2990
    %v2996 = vlaneseq
    %v2997 = vshrl.u32 %v2996, 7
    %v2998 = vsub.s32 %v2196, %v2997
    %v2999 = vrot.slane %v1195, %v2998
    %v3000 = vsel %vm2201, %v2999, %v2995
    %v3001 = vlaneseq
    %v3002 = vshrl.u32 %v3001, 7
    %v3003 = vsub.s32 %v2203, %v3002
    %v3004 = vrot.slane %v1198, %v3003
    %v3005 = vsel %vm2208, %v3004, %v3000
    %v3006 = vlaneseq
    %v3007 = vshrl.u32 %v3006, 7
    %v3008 = vsub.s32 %v2210, %v3007
    %v3009 = vrot.slane %v1201, %v3008
    %v3010 = vsel %vm2215, %v3009, %v3005
    %v3011 = vlaneseq
    %v3012 = vshrl.u32 %v3011, 7
    %v3013 = vsub.s32 %v2217, %v3012
    %v3014 = vrot.slane %v1204, %v3013
    %v3015 = vsel %vm2222, %v3014, %v3010
    %v3016 = vlaneseq
    %v3017 = vshrl.u32 %v3016, 7
    %v3018 = vsub.s32 %v2224, %v3017
    %v3019 = vrot.slane %v1207, %v3018
    %v3020 = vsel %vm2229, %v3019, %v3015
    %v3021 = vlaneseq
    %v3022 = vshrl.u32 %v3021, 7
    %v3023 = vsub.s32 %v2121, %v3022
    %v3024 = vrot.slane %v1210, %v3023
    %v3025 = vlaneseq
    %v3026 = vshrl.u32 %v3025, 7
    %v3027 = vsub.s32 %v2126, %v3026
    %v3028 = vrot.slane %v1213, %v3027
    %v3029 = vsel %vm2131, %v3028, %v3024
    %v3030 = vlaneseq
    %v3031 = vshrl.u32 %v3030, 7
    %v3032 = vsub.s32 %v2133, %v3031
    %v3033 = vrot.slane %v1216, %v3032
    %v3034 = vsel %vm2138, %v3033, %v3029
    %v3035 = vlaneseq
    %v3036 = vshrl.u32 %v3035, 7
    %v3037 = vsub.s32 %v2140, %v3036
    %v3038 = vrot.slane %v1219, %v3037
    %v3039 = vsel %vm2145, %v3038, %v3034
    %v3040 = vlaneseq
    %v3041 = vshrl.u32 %v3040, 7
    %v3042 = vsub.s32 %v2147, %v3041
    %v3043 = vrot.slane %v1222, %v3042
    %v3044 = vsel %vm2152, %v3043, %v3039
    %v3045 = vlaneseq
    %v3046 = vshrl.u32 %v3045, 7
    %v3047 = vsub.s32 %v2154, %v3046
    %v3048 = vrot.slane %v1225, %v3047
    %v3049 = vsel %vm2159, %v3048, %v3044
    %v3050 = vlaneseq
    %v3051 = vshrl.u32 %v3050, 7
    %v3052 = vsub.s32 %v2161, %v3051
    %v3053 = vrot.slane %v1228, %v3052
    %v3054 = vsel %vm2166, %v3053, %v3049
    %v3055 = vlaneseq
    %v3056 = vshrl.u32 %v3055, 7
    %v3057 = vsub.s32 %v2168, %v3056
    %v3058 = vrot.slane %v1231, %v3057
    %v3059 = vsel %vm2173, %v3058, %v3054
    %v3060 = vlaneseq
    %v3061 = vshrl.u32 %v3060, 7
    %v3062 = vsub.s32 %v2175, %v3061
    %v3063 = vrot.slane %v1234, %v3062
    %v3064 = vsel %vm2180, %v3063, %v3059
    %v3065 = vlaneseq
    %v3066 = vshrl.u32 %v3065, 7
    %v3067 = vsub.s32 %v2182, %v3066
    %v3068 = vrot.slane %v1237, %v3067
    %v3069 = vsel %vm2187, %v3068, %v3064
    %v3070 = vlaneseq
    %v3071 = vshrl.u32 %v3070, 7
    %v3072 = vsub.s32 %v2189, %v3071
    %v3073 = vrot.slane %v1240, %v3072
    %v3074 = vsel %vm2194, %v3073, %v3069
    %v3075 = vlaneseq
    %v3076 = vshrl.u32 %v3075, 7
    %v3077 = vsub.s32 %v2196, %v3076
    %v3078 = vrot.slane %v1243, %v3077
    %v3079 = vsel %vm2201, %v3078, %v3074
    %v3080 = vlaneseq
    %v3081 = vshrl.u32 %v3080, 7
    %v3082 = vsub.s32 %v2203, %v3081
    %v3083 = vrot.slane %v1246, %v3082
    %v3084 = vsel %vm2208, %v3083, %v3079
    %v3085 = vlaneseq
    %v3086 = vshrl.u32 %v3085, 7
    %v3087 = vsub.s32 %v2210, %v3086
    %v3088 = vrot.slane %v1249, %v3087
    %v3089 = vsel %vm2215, %v3088, %v3084
    %v3090 = vlaneseq
    %v3091 = vshrl.u32 %v3090, 7
    %v3092 = vsub.s32 %v2217, %v3091
    %v3093 = vrot.slane %v1252, %v3092
    %v3094 = vsel %vm2222, %v3093, %v3089
    %v3095 = vlaneseq
    %v3096 = vshrl.u32 %v3095, 7
    %v3097 = vsub.s32 %v2224, %v3096
    %v3098 = vrot.slane %v1255, %v3097
    %v3099 = vsel %vm2229, %v3098, %v3094
    %v3100 = vlaneseq
    %v3101 = vshrl.u32 %v3100, 7
    %v3102 = vsub.s32 %v2121, %v3101
    %v3103 = vrot.slane %v1258, %v3102
    %v3104 = vlaneseq
    %v3105 = vshrl.u32 %v3104, 7
    %v3106 = vsub.s32 %v2126, %v3105
    %v3107 = vrot.slane %v1261, %v3106
    %v3108 = vsel %vm2131, %v3107, %v3103
    %v3109 = vlaneseq
    %v3110 = vshrl.u32 %v3109, 7
    %v3111 = vsub.s32 %v2133, %v3110
    %v3112 = vrot.slane %v1264, %v3111
    %v3113 = vsel %vm2138, %v3112, %v3108
    %v3114 = vlaneseq
    %v3115 = vshrl.u32 %v3114, 7
    %v3116 = vsub.s32 %v2140, %v3115
    %v3117 = vrot.slane %v1267, %v3116
    %v3118 = vsel %vm2145, %v3117, %v3113
    %v3119 = vlaneseq
    %v3120 = vshrl.u32 %v3119, 7
    %v3121 = vsub.s32 %v2147, %v3120
    %v3122 = vrot.slane %v1270, %v3121
    %v3123 = vsel %vm2152, %v3122, %v3118
    %v3124 = vlaneseq
    %v3125 = vshrl.u32 %v3124, 7
    %v3126 = vsub.s32 %v2154, %v3125
    %v3127 = vrot.slane %v1273, %v3126
    %v3128 = vsel %vm2159, %v3127, %v3123
    %v3129 = vlaneseq
    %v3130 = vshrl.u32 %v3129, 7
    %v3131 = vsub.s32 %v2161, %v3130
    %v3132 = vrot.slane %v1276, %v3131
    %v3133 = vsel %vm2166, %v3132, %v3128
    %v3134 = vlaneseq
    %v3135 = vshrl.u32 %v3134, 7
    %v3136 = vsub.s32 %v2168, %v3135
    %v3137 = vrot.slane %v1279, %v3136
    %v3138 = vsel %vm2173, %v3137, %v3133
    %v3139 = vlaneseq
    %v3140 = vshrl.u32 %v3139, 7
    %v3141 = vsub.s32 %v2175, %v3140
    %v3142 = vrot.slane %v1282, %v3141
    %v3143 = vsel %vm2180, %v3142, %v3138
    %v3144 = vlaneseq
    %v3145 = vshrl.u32 %v3144, 7
    %v3146 = vsub.s32 %v2182, %v3145
    %v3147 = vrot.slane %v1285, %v3146
    %v3148 = vsel %vm2187, %v3147, %v3143
    %v3149 = vlaneseq
    %v3150 = vshrl.u32 %v3149, 7
    %v3151 = vsub.s32 %v2189, %v3150
    %v3152 = vrot.slane %v1288, %v3151
    %v3153 = vsel %vm2194, %v3152, %v3148
    %v3154 = vlaneseq
    %v3155 = vshrl.u32 %v3154, 7
    %v3156 = vsub.s32 %v2196, %v3155
    %v3157 = vrot.slane %v1291, %v3156
    %v3158 = vsel %vm2201, %v3157, %v3153
    %v3159 = vlaneseq
    %v3160 = vshrl.u32 %v3159, 7
    %v3161 = vsub.s32 %v2203, %v3160
    %v3162 = vrot.slane %v1294, %v3161
    %v3163 = vsel %vm2208, %v3162, %v3158
    %v3164 = vlaneseq
    %v3165 = vshrl.u32 %v3164, 7
    %v3166 = vsub.s32 %v2210, %v3165
    %v3167 = vrot.slane %v1297, %v3166
    %v3168 = vsel %vm2215, %v3167, %v3163
    %v3169 = vlaneseq
    %v3170 = vshrl.u32 %v3169, 7
    %v3171 = vsub.s32 %v2217, %v3170
    %v3172 = vrot.slane %v1300, %v3171
    %v3173 = vsel %vm2222, %v3172, %v3168
    %v3174 = vlaneseq
    %v3175 = vshrl.u32 %v3174, 7
    %v3176 = vsub.s32 %v2224, %v3175
    %v3177 = vrot.slane %v1303, %v3176
    %v3178 = vsel %vm2229, %v3177, %v3173
    %v3179 = vlaneseq
    %v3180 = vshrl.u32 %v3179, 7
    %v3181 = vsub.s32 %v2121, %v3180
    %v3182 = vrot.slane %v1306, %v3181
    %v3183 = vlaneseq
    %v3184 = vshrl.u32 %v3183, 7
    %v3185 = vsub.s32 %v2126, %v3184
    %v3186 = vrot.slane %v1309, %v3185
    %v3187 = vsel %vm2131, %v3186, %v3182
    %v3188 = vlaneseq
    %v3189 = vshrl.u32 %v3188, 7
    %v3190 = vsub.s32 %v2133, %v3189
    %v3191 = vrot.slane %v1312, %v3190
    %v3192 = vsel %vm2138, %v3191, %v3187
    %v3193 = vlaneseq
    %v3194 = vshrl.u32 %v3193, 7
    %v3195 = vsub.s32 %v2140, %v3194
    %v3196 = vrot.slane %v1315, %v3195
    %v3197 = vsel %vm2145, %v3196, %v3192
    %v3198 = vlaneseq
    %v3199 = vshrl.u32 %v3198, 7
    %v3200 = vsub.s32 %v2147, %v3199
    %v3201 = vrot.slane %v1318, %v3200
    %v3202 = vsel %vm2152, %v3201, %v3197
    %v3203 = vlaneseq
    %v3204 = vshrl.u32 %v3203, 7
    %v3205 = vsub.s32 %v2154, %v3204
    %v3206 = vrot.slane %v1321, %v3205
    %v3207 = vsel %vm2159, %v3206, %v3202
    %v3208 = vlaneseq
    %v3209 = vshrl.u32 %v3208, 7
    %v3210 = vsub.s32 %v2161, %v3209
    %v3211 = vrot.slane %v1324, %v3210
    %v3212 = vsel %vm2166, %v3211, %v3207
    %v3213 = vlaneseq
    %v3214 = vshrl.u32 %v3213, 7
    %v3215 = vsub.s32 %v2168, %v3214
    %v3216 = vrot.slane %v1327, %v3215
    %v3217 = vsel %vm2173, %v3216, %v3212
    %v3218 = vlaneseq
    %v3219 = vshrl.u32 %v3218, 7
    %v3220 = vsub.s32 %v2175, %v3219
    %v3221 = vrot.slane %v1330, %v3220
    %v3222 = vsel %vm2180, %v3221, %v3217
    %v3223 = vlaneseq
    %v3224 = vshrl.u32 %v3223, 7
    %v3225 = vsub.s32 %v2182, %v3224
    %v3226 = vrot.slane %v1333, %v3225
    %v3227 = vsel %vm2187, %v3226, %v3222
    %v3228 = vlaneseq
    %v3229 = vshrl.u32 %v3228, 7
    %v3230 = vsub.s32 %v2189, %v3229
    %v3231 = vrot.slane %v1336, %v3230
    %v3232 = vsel %vm2194, %v3231, %v3227
    %v3233 = vlaneseq
    %v3234 = vshrl.u32 %v3233, 7
    %v3235 = vsub.s32 %v2196, %v3234
    %v3236 = vrot.slane %v1339, %v3235
    %v3237 = vsel %vm2201, %v3236, %v3232
    %v3238 = vlaneseq
    %v3239 = vshrl.u32 %v3238, 7
    %v3240 = vsub.s32 %v2203, %v3239
    %v3241 = vrot.slane %v1342, %v3240
    %v3242 = vsel %vm2208, %v3241, %v3237
    %v3243 = vlaneseq
    %v3244 = vshrl.u32 %v3243, 7
    %v3245 = vsub.s32 %v2210, %v3244
    %v3246 = vrot.slane %v1345, %v3245
    %v3247 = vsel %vm2215, %v3246, %v3242
    %v3248 = vlaneseq
    %v3249 = vshrl.u32 %v3248, 7
    %v3250 = vsub.s32 %v2217, %v3249
    %v3251 = vrot.slane %v1348, %v3250
    %v3252 = vsel %vm2222, %v3251, %v3247
    %v3253 = vlaneseq
    %v3254 = vshrl.u32 %v3253, 7
    %v3255 = vsub.s32 %v2224, %v3254
    %v3256 = vrot.slane %v1351, %v3255
    %v3257 = vsel %vm2229, %v3256, %v3252
    %v3258 = vlaneseq
    %v3259 = vshrl.u32 %v3258, 7
    %v3260 = vsub.s32 %v2121, %v3259
    %v3261 = vrot.slane %v1354, %v3260
    %v3262 = vlaneseq
    %v3263 = vshrl.u32 %v3262, 7
    %v3264 = vsub.s32 %v2126, %v3263
    %v3265 = vrot.slane %v1357, %v3264
    %v3266 = vsel %vm2131, %v3265, %v3261
    %v3267 = vlaneseq
    %v3268 = vshrl.u32 %v3267, 7
    %v3269 = vsub.s32 %v2133, %v3268
    %v3270 = vrot.slane %v1360, %v3269
    %v3271 = vsel %vm2138, %v3270, %v3266
    %v3272 = vlaneseq
    %v3273 = vshrl.u32 %v3272, 7
    %v3274 = vsub.s32 %v2140, %v3273
    %v3275 = vrot.slane %v1363, %v3274
    %v3276 = vsel %vm2145, %v3275, %v3271
    %v3277 = vlaneseq
    %v3278 = vshrl.u32 %v3277, 7
    %v3279 = vsub.s32 %v2147, %v3278
    %v3280 = vrot.slane %v1366, %v3279
    %v3281 = vsel %vm2152, %v3280, %v3276
    %v3282 = vlaneseq
    %v3283 = vshrl.u32 %v3282, 7
    %v3284 = vsub.s32 %v2154, %v3283
    %v3285 = vrot.slane %v1369, %v3284
    %v3286 = vsel %vm2159, %v3285, %v3281
    %v3287 = vlaneseq
    %v3288 = vshrl.u32 %v3287, 7
    %v3289 = vsub.s32 %v2161, %v3288
    %v3290 = vrot.slane %v1372, %v3289
    %v3291 = vsel %vm2166, %v3290, %v3286
    %v3292 = vlaneseq
    %v3293 = vshrl.u32 %v3292, 7
    %v3294 = vsub.s32 %v2168, %v3293
    %v3295 = vrot.slane %v1375, %v3294
    %v3296 = vsel %vm2173, %v3295, %v3291
    %v3297 = vlaneseq
    %v3298 = vshrl.u32 %v3297, 7
    %v3299 = vsub.s32 %v2175, %v3298
    %v3300 = vrot.slane %v1378, %v3299
    %v3301 = vsel %vm2180, %v3300, %v3296
    %v3302 = vlaneseq
    %v3303 = vshrl.u32 %v3302, 7
    %v3304 = vsub.s32 %v2182, %v3303
    %v3305 = vrot.slane %v1381, %v3304
    %v3306 = vsel %vm2187, %v3305, %v3301
    %v3307 = vlaneseq
    %v3308 = vshrl.u32 %v3307, 7
    %v3309 = vsub.s32 %v2189, %v3308
    %v3310 = vrot.slane %v1384, %v3309
    %v3311 = vsel %vm2194, %v3310, %v3306
    %v3312 = vlaneseq
    %v3313 = vshrl.u32 %v3312, 7
    %v3314 = vsub.s32 %v2196, %v3313
    %v3315 = vrot.slane %v1387, %v3314
    %v3316 = vsel %vm2201, %v3315, %v3311
    %v3317 = vlaneseq
    %v3318 = vshrl.u32 %v3317, 7
    %v3319 = vsub.s32 %v2203, %v3318
    %v3320 = vrot.slane %v1390, %v3319
    %v3321 = vsel %vm2208, %v3320, %v3316
    %v3322 = vlaneseq
    %v3323 = vshrl.u32 %v3322, 7
    %v3324 = vsub.s32 %v2210, %v3323
    %v3325 = vrot.slane %v1393, %v3324
    %v3326 = vsel %vm2215, %v3325, %v3321
    %v3327 = vlaneseq
    %v3328 = vshrl.u32 %v3327, 7
    %v3329 = vsub.s32 %v2217, %v3328
    %v3330 = vrot.slane %v1396, %v3329
    %v3331 = vsel %vm2222, %v3330, %v3326
    %v3332 = vlaneseq
    %v3333 = vshrl.u32 %v3332, 7
    %v3334 = vsub.s32 %v2224, %v3333
    %v3335 = vrot.slane %v1399, %v3334
    %v3336 = vsel %vm2229, %v3335, %v3331
    %v3337 = vlaneseq
    %v3338 = vshrl.u32 %v3337, 7
    %v3339 = vsub.s32 %v2121, %v3338
    %v3340 = vrot.slane %v1402, %v3339
    %v3341 = vlaneseq
    %v3342 = vshrl.u32 %v3341, 7
    %v3343 = vsub.s32 %v2126, %v3342
    %v3344 = vrot.slane %v1405, %v3343
    %v3345 = vsel %vm2131, %v3344, %v3340
    %v3346 = vlaneseq
    %v3347 = vshrl.u32 %v3346, 7
    %v3348 = vsub.s32 %v2133, %v3347
    %v3349 = vrot.slane %v1408, %v3348
    %v3350 = vsel %vm2138, %v3349, %v3345
    %v3351 = vlaneseq
    %v3352 = vshrl.u32 %v3351, 7
    %v3353 = vsub.s32 %v2140, %v3352
    %v3354 = vrot.slane %v1411, %v3353
    %v3355 = vsel %vm2145, %v3354, %v3350
    %v3356 = vlaneseq
    %v3357 = vshrl.u32 %v3356, 7
    %v3358 = vsub.s32 %v2147, %v3357
    %v3359 = vrot.slane %v1414, %v3358
    %v3360 = vsel %vm2152, %v3359, %v3355
    %v3361 = vlaneseq
    %v3362 = vshrl.u32 %v3361, 7
    %v3363 = vsub.s32 %v2154, %v3362
    %v3364 = vrot.slane %v1417, %v3363
    %v3365 = vsel %vm2159, %v3364, %v3360
    %v3366 = vlaneseq
    %v3367 = vshrl.u32 %v3366, 7
    %v3368 = vsub.s32 %v2161, %v3367
    %v3369 = vrot.slane %v1420, %v3368
    %v3370 = vsel %vm2166, %v3369, %v3365
    %v3371 = vlaneseq
    %v3372 = vshrl.u32 %v3371, 7
    %v3373 = vsub.s32 %v2168, %v3372
    %v3374 = vrot.slane %v1423, %v3373
    %v3375 = vsel %vm2173, %v3374, %v3370
    %v3376 = vlaneseq
    %v3377 = vshrl.u32 %v3376, 7
    %v3378 = vsub.s32 %v2175, %v3377
    %v3379 = vrot.slane %v1426, %v3378
    %v3380 = vsel %vm2180, %v3379, %v3375
    %v3381 = vlaneseq
    %v3382 = vshrl.u32 %v3381, 7
    %v3383 = vsub.s32 %v2182, %v3382
    %v3384 = vrot.slane %v1429, %v3383
    %v3385 = vsel %vm2187, %v3384, %v3380
    %v3386 = vlaneseq
    %v3387 = vshrl.u32 %v3386, 7
    %v3388 = vsub.s32 %v2189, %v3387
    %v3389 = vrot.slane %v1432, %v3388
    %v3390 = vsel %vm2194, %v3389, %v3385
    %v3391 = vlaneseq
    %v3392 = vshrl.u32 %v3391, 7
    %v3393 = vsub.s32 %v2196, %v3392
    %v3394 = vrot.slane %v1435, %v3393
    %v3395 = vsel %vm2201, %v3394, %v3390
    %v3396 = vlaneseq
    %v3397 = vshrl.u32 %v3396, 7
    %v3398 = vsub.s32 %v2203, %v3397
    %v3399 = vrot.slane %v1438, %v3398
    %v3400 = vsel %vm2208, %v3399, %v3395
    %v3401 = vlaneseq
    %v3402 = vshrl.u32 %v3401, 7
    %v3403 = vsub.s32 %v2210, %v3402
    %v3404 = vrot.slane %v1441, %v3403
    %v3405 = vsel %vm2215, %v3404, %v3400
    %v3406 = vlaneseq
    %v3407 = vshrl.u32 %v3406, 7
    %v3408 = vsub.s32 %v2217, %v3407
    %v3409 = vrot.slane %v1444, %v3408
    %v3410 = vsel %vm2222, %v3409, %v3405
    %v3411 = vlaneseq
    %v3412 = vshrl.u32 %v3411, 7
    %v3413 = vsub.s32 %v2224, %v3412
    %v3414 = vrot.slane %v1447, %v3413
    %v3415 = vsel %vm2229, %v3414, %v3410
    %v3416 = vlaneseq
    %v3417 = vshrl.u32 %v3416, 7
    %v3418 = vsub.s32 %v2121, %v3417
    %v3419 = vrot.slane %v1450, %v3418
    %v3420 = vlaneseq
    %v3421 = vshrl.u32 %v3420, 7
    %v3422 = vsub.s32 %v2126, %v3421
    %v3423 = vrot.slane %v1453, %v3422
    %v3424 = vsel %vm2131, %v3423, %v3419
    %v3425 = vlaneseq
    %v3426 = vshrl.u32 %v3425, 7
    %v3427 = vsub.s32 %v2133, %v3426
    %v3428 = vrot.slane %v1456, %v3427
    %v3429 = vsel %vm2138, %v3428, %v3424
    %v3430 = vlaneseq
    %v3431 = vshrl.u32 %v3430, 7
    %v3432 = vsub.s32 %v2140, %v3431
    %v3433 = vrot.slane %v1459, %v3432
    %v3434 = vsel %vm2145, %v3433, %v3429
    %v3435 = vlaneseq
    %v3436 = vshrl.u32 %v3435, 7
    %v3437 = vsub.s32 %v2147, %v3436
    %v3438 = vrot.slane %v1462, %v3437
    %v3439 = vsel %vm2152, %v3438, %v3434
    %v3440 = vlaneseq
    %v3441 = vshrl.u32 %v3440, 7
    %v3442 = vsub.s32 %v2154, %v3441
    %v3443 = vrot.slane %v1465, %v3442
    %v3444 = vsel %vm2159, %v3443, %v3439
    %v3445 = vlaneseq
    %v3446 = vshrl.u32 %v3445, 7
    %v3447 = vsub.s32 %v2161, %v3446
    %v3448 = vrot.slane %v1468, %v3447
    %v3449 = vsel %vm2166, %v3448, %v3444
    %v3450 = vlaneseq
    %v3451 = vshrl.u32 %v3450, 7
    %v3452 = vsub.s32 %v2168, %v3451
    %v3453 = vrot.slane %v1471, %v3452
    %v3454 = vsel %vm2173, %v3453, %v3449
    %v3455 = vlaneseq
    %v3456 = vshrl.u32 %v3455, 7
    %v3457 = vsub.s32 %v2175, %v3456
    %v3458 = vrot.slane %v1474, %v3457
    %v3459 = vsel %vm2180, %v3458, %v3454
    %v3460 = vlaneseq
    %v3461 = vshrl.u32 %v3460, 7
    %v3462 = vsub.s32 %v2182, %v3461
    %v3463 = vrot.slane %v1477, %v3462
    %v3464 = vsel %vm2187, %v3463, %v3459
    %v3465 = vlaneseq
    %v3466 = vshrl.u32 %v3465, 7
    %v3467 = vsub.s32 %v2189, %v3466
    %v3468 = vrot.slane %v1480, %v3467
    %v3469 = vsel %vm2194, %v3468, %v3464
    %v3470 = vlaneseq
    %v3471 = vshrl.u32 %v3470, 7
    %v3472 = vsub.s32 %v2196, %v3471
    %v3473 = vrot.slane %v1483, %v3472
    %v3474 = vsel %vm2201, %v3473, %v3469
    %v3475 = vlaneseq
    %v3476 = vshrl.u32 %v3475, 7
    %v3477 = vsub.s32 %v2203, %v3476
    %v3478 = vrot.slane %v1486, %v3477
    %v3479 = vsel %vm2208, %v3478, %v3474
    %v3480 = vlaneseq
    %v3481 = vshrl.u32 %v3480, 7
    %v3482 = vsub.s32 %v2210, %v3481
    %v3483 = vrot.slane %v1489, %v3482
    %v3484 = vsel %vm2215, %v3483, %v3479
    %v3485 = vlaneseq
    %v3486 = vshrl.u32 %v3485, 7
    %v3487 = vsub.s32 %v2217, %v3486
    %v3488 = vrot.slane %v1492, %v3487
    %v3489 = vsel %vm2222, %v3488, %v3484
    %v3490 = vlaneseq
    %v3491 = vshrl.u32 %v3490, 7
    %v3492 = vsub.s32 %v2224, %v3491
    %v3493 = vrot.slane %v1495, %v3492
    %v3494 = vsel %vm2229, %v3493, %v3489
    %v3495 = vlaneseq
    %v3496 = vshrl.u32 %v3495, 7
    %v3497 = vsub.s32 %v2121, %v3496
    %v3498 = vrot.slane %v1498, %v3497
    %v3499 = vlaneseq
    %v3500 = vshrl.u32 %v3499, 7
    %v3501 = vsub.s32 %v2126, %v3500
    %v3502 = vrot.slane %v1501, %v3501
    %v3503 = vsel %vm2131, %v3502, %v3498
    %v3504 = vlaneseq
    %v3505 = vshrl.u32 %v3504, 7
    %v3506 = vsub.s32 %v2133, %v3505
    %v3507 = vrot.slane %v1504, %v3506
    %v3508 = vsel %vm2138, %v3507, %v3503
    %v3509 = vlaneseq
    %v3510 = vshrl.u32 %v3509, 7
    %v3511 = vsub.s32 %v2140, %v3510
    %v3512 = vrot.slane %v1507, %v3511
    %v3513 = vsel %vm2145, %v3512, %v3508
    %v3514 = vlaneseq
    %v3515 = vshrl.u32 %v3514, 7
    %v3516 = vsub.s32 %v2147, %v3515
    %v3517 = vrot.slane %v1510, %v3516
    %v3518 = vsel %vm2152, %v3517, %v3513
    %v3519 = vlaneseq
    %v3520 = vshrl.u32 %v3519, 7
    %v3521 = vsub.s32 %v2154, %v3520
    %v3522 = vrot.slane %v1513, %v3521
    %v3523 = vsel %vm2159, %v3522, %v3518
    %v3524 = vlaneseq
    %v3525 = vshrl.u32 %v3524, 7
    %v3526 = vsub.s32 %v2161, %v3525
    %v3527 = vrot.slane %v1516, %v3526
    %v3528 = vsel %vm2166, %v3527, %v3523
    %v3529 = vlaneseq
    %v3530 = vshrl.u32 %v3529, 7
    %v3531 = vsub.s32 %v2168, %v3530
    %v3532 = vrot.slane %v1519, %v3531
    %v3533 = vsel %vm2173, %v3532, %v3528
    %v3534 = vlaneseq
    %v3535 = vshrl.u32 %v3534, 7
    %v3536 = vsub.s32 %v2175, %v3535
    %v3537 = vrot.slane %v1522, %v3536
    %v3538 = vsel %vm2180, %v3537, %v3533
    %v3539 = vlaneseq
    %v3540 = vshrl.u32 %v3539, 7
    %v3541 = vsub.s32 %v2182, %v3540
    %v3542 = vrot.slane %v1525, %v3541
    %v3543 = vsel %vm2187, %v3542, %v3538
    %v3544 = vlaneseq
    %v3545 = vshrl.u32 %v3544, 7
    %v3546 = vsub.s32 %v2189, %v3545
    %v3547 = vrot.slane %v1528, %v3546
    %v3548 = vsel %vm2194, %v3547, %v3543
    %v3549 = vlaneseq
    %v3550 = vshrl.u32 %v3549, 7
    %v3551 = vsub.s32 %v2196, %v3550
    %v3552 = vrot.slane %v1531, %v3551
    %v3553 = vsel %vm2201, %v3552, %v3548
    %v3554 = vlaneseq
    %v3555 = vshrl.u32 %v3554, 7
    %v3556 = vsub.s32 %v2203, %v3555
    %v3557 = vrot.slane %v1534, %v3556
    %v3558 = vsel %vm2208, %v3557, %v3553
    %v3559 = vlaneseq
    %v3560 = vshrl.u32 %v3559, 7
    %v3561 = vsub.s32 %v2210, %v3560
    %v3562 = vrot.slane %v1537, %v3561
    %v3563 = vsel %vm2215, %v3562, %v3558
    %v3564 = vlaneseq
    %v3565 = vshrl.u32 %v3564, 7
    %v3566 = vsub.s32 %v2217, %v3565
    %v3567 = vrot.slane %v1540, %v3566
    %v3568 = vsel %vm2222, %v3567, %v3563
    %v3569 = vlaneseq
    %v3570 = vshrl.u32 %v3569, 7
    %v3571 = vsub.s32 %v2224, %v3570
    %v3572 = vrot.slane %v1543, %v3571
    %v3573 = vsel %vm2229, %v3572, %v3568
    %v3574 = vlaneseq
    %v3575 = vshrl.u32 %v3574, 7
    %v3576 = vsub.s32 %v2121, %v3575
    %v3577 = vrot.slane %v1546, %v3576
    %v3578 = vlaneseq
    %v3579 = vshrl.u32 %v3578, 7
    %v3580 = vsub.s32 %v2126, %v3579
    %v3581 = vrot.slane %v1549, %v3580
    %v3582 = vsel %vm2131, %v3581, %v3577
    %v3583 = vlaneseq
    %v3584 = vshrl.u32 %v3583, 7
    %v3585 = vsub.s32 %v2133, %v3584
    %v3586 = vrot.slane %v1552, %v3585
    %v3587 = vsel %vm2138, %v3586, %v3582
    %v3588 = vlaneseq
    %v3589 = vshrl.u32 %v3588, 7
    %v3590 = vsub.s32 %v2140, %v3589
    %v3591 = vrot.slane %v1555, %v3590
    %v3592 = vsel %vm2145, %v3591, %v3587
    %v3593 = vlaneseq
    %v3594 = vshrl.u32 %v3593, 7
    %v3595 = vsub.s32 %v2147, %v3594
    %v3596 = vrot.slane %v1558, %v3595
    %v3597 = vsel %vm2152, %v3596, %v3592
    %v3598 = vlaneseq
    %v3599 = vshrl.u32 %v3598, 7
    %v3600 = vsub.s32 %v2154, %v3599
    %v3601 = vrot.slane %v1561, %v3600
    %v3602 = vsel %vm2159, %v3601, %v3597
    %v3603 = vlaneseq
    %v3604 = vshrl.u32 %v3603, 7
    %v3605 = vsub.s32 %v2161, %v3604
    %v3606 = vrot.slane %v1564, %v3605
    %v3607 = vsel %vm2166, %v3606, %v3602
    %v3608 = vlaneseq
    %v3609 = vshrl.u32 %v3608, 7
    %v3610 = vsub.s32 %v2168, %v3609
    %v3611 = vrot.slane %v1567, %v3610
    %v3612 = vsel %vm2173, %v3611, %v3607
    %v3613 = vlaneseq
    %v3614 = vshrl.u32 %v3613, 7
    %v3615 = vsub.s32 %v2175, %v3614
    %v3616 = vrot.slane %v1570, %v3615
    %v3617 = vsel %vm2180, %v3616, %v3612
    %v3618 = vlaneseq
    %v3619 = vshrl.u32 %v3618, 7
    %v3620 = vsub.s32 %v2182, %v3619
    %v3621 = vrot.slane %v1573, %v3620
    %v3622 = vsel %vm2187, %v3621, %v3617
    %v3623 = vlaneseq
    %v3624 = vshrl.u32 %v3623, 7
    %v3625 = vsub.s32 %v2189, %v3624
    %v3626 = vrot.slane %v1576, %v3625
    %v3627 = vsel %vm2194, %v3626, %v3622
    %v3628 = vlaneseq
    %v3629 = vshrl.u32 %v3628, 7
    %v3630 = vsub.s32 %v2196, %v3629
    %v3631 = vrot.slane %v1579, %v3630
    %v3632 = vsel %vm2201, %v3631, %v3627
    %v3633 = vlaneseq
    %v3634 = vshrl.u32 %v3633, 7
    %v3635 = vsub.s32 %v2203, %v3634
    %v3636 = vrot.slane %v1582, %v3635
    %v3637 = vsel %vm2208, %v3636, %v3632
    %v3638 = vlaneseq
    %v3639 = vshrl.u32 %v3638, 7
    %v3640 = vsub.s32 %v2210, %v3639
    %v3641 = vrot.slane %v1585, %v3640
    %v3642 = vsel %vm2215, %v3641, %v3637
    %v3643 = vlaneseq
    %v3644 = vshrl.u32 %v3643, 7
    %v3645 = vsub.s32 %v2217, %v3644
    %v3646 = vrot.slane %v1588, %v3645
    %v3647 = vsel %vm2222, %v3646, %v3642
    %v3648 = vlaneseq
    %v3649 = vshrl.u32 %v3648, 7
    %v3650 = vsub.s32 %v2224, %v3649
    %v3651 = vrot.slane %v1591, %v3650
    %v3652 = vsel %vm2229, %v3651, %v3647
    %v3653 = vlaneseq
    %v3654 = vshrl.u32 %v3653, 7
    %v3655 = vsub.s32 %v2121, %v3654
    %v3656 = vrot.slane %v1594, %v3655
    %v3657 = vlaneseq
    %v3658 = vshrl.u32 %v3657, 7
    %v3659 = vsub.s32 %v2126, %v3658
    %v3660 = vrot.slane %v1597, %v3659
    %v3661 = vsel %vm2131, %v3660, %v3656
    %v3662 = vlaneseq
    %v3663 = vshrl.u32 %v3662, 7
    %v3664 = vsub.s32 %v2133, %v3663
    %v3665 = vrot.slane %v1600, %v3664
    %v3666 = vsel %vm2138, %v3665, %v3661
    %v3667 = vlaneseq
    %v3668 = vshrl.u32 %v3667, 7
    %v3669 = vsub.s32 %v2140, %v3668
    %v3670 = vrot.slane %v1603, %v3669
    %v3671 = vsel %vm2145, %v3670, %v3666
    %v3672 = vlaneseq
    %v3673 = vshrl.u32 %v3672, 7
    %v3674 = vsub.s32 %v2147, %v3673
    %v3675 = vrot.slane %v1606, %v3674
    %v3676 = vsel %vm2152, %v3675, %v3671
    %v3677 = vlaneseq
    %v3678 = vshrl.u32 %v3677, 7
    %v3679 = vsub.s32 %v2154, %v3678
    %v3680 = vrot.slane %v1609, %v3679
    %v3681 = vsel %vm2159, %v3680, %v3676
    %v3682 = vlaneseq
    %v3683 = vshrl.u32 %v3682, 7
    %v3684 = vsub.s32 %v2161, %v3683
    %v3685 = vrot.slane %v1612, %v3684
    %v3686 = vsel %vm2166, %v3685, %v3681
    %v3687 = vlaneseq
    %v3688 = vshrl.u32 %v3687, 7
    %v3689 = vsub.s32 %v2168, %v3688
    %v3690 = vrot.slane %v1615, %v3689
    %v3691 = vsel %vm2173, %v3690, %v3686
    %v3692 = vlaneseq
    %v3693 = vshrl.u32 %v3692, 7
    %v3694 = vsub.s32 %v2175, %v3693
    %v3695 = vrot.slane %v1618, %v3694
    %v3696 = vsel %vm2180, %v3695, %v3691
    %v3697 = vlaneseq
    %v3698 = vshrl.u32 %v3697, 7
    %v3699 = vsub.s32 %v2182, %v3698
    %v3700 = vrot.slane %v1621, %v3699
    %v3701 = vsel %vm2187, %v3700, %v3696
    %v3702 = vlaneseq
    %v3703 = vshrl.u32 %v3702, 7
    %v3704 = vsub.s32 %v2189, %v3703
    %v3705 = vrot.slane %v1624, %v3704
    %v3706 = vsel %vm2194, %v3705, %v3701
    %v3707 = vlaneseq
    %v3708 = vshrl.u32 %v3707, 7
    %v3709 = vsub.s32 %v2196, %v3708
    %v3710 = vrot.slane %v1627, %v3709
    %v3711 = vsel %vm2201, %v3710, %v3706
    %v3712 = vlaneseq
    %v3713 = vshrl.u32 %v3712, 7
    %v3714 = vsub.s32 %v2203, %v3713
    %v3715 = vrot.slane %v1630, %v3714
    %v3716 = vsel %vm2208, %v3715, %v3711
    %v3717 = vlaneseq
    %v3718 = vshrl.u32 %v3717, 7
    %v3719 = vsub.s32 %v2210, %v3718
    %v3720 = vrot.slane %v1633, %v3719
    %v3721 = vsel %vm2215, %v3720, %v3716
    %v3722 = vlaneseq
    %v3723 = vshrl.u32 %v3722, 7
    %v3724 = vsub.s32 %v2217, %v3723
    %v3725 = vrot.slane %v1636, %v3724
    %v3726 = vsel %vm2222, %v3725, %v3721
    %v3727 = vlaneseq
    %v3728 = vshrl.u32 %v3727, 7
    %v3729 = vsub.s32 %v2224, %v3728
    %v3730 = vrot.slane %v1639, %v3729
    %v3731 = vsel %vm2229, %v3730, %v3726
    %vm3732 = vcmask 1041409
    %v3733 = vsel %vm3732, %v3020, %v2230
    %v3734 = vsel %vm3732, %v3099, %v2309
    %v3735 = vsel %vm3732, %v3178, %v2388
    %v3736 = vsel %vm3732, %v3257, %v2467
    %v3737 = vsel %vm3732, %v3336, %v2546
    %v3738 = vsel %vm3732, %v3415, %v2625
    %v3739 = vsel %vm3732, %v3494, %v2704
    %v3740 = vsel %vm3732, %v3573, %v2783
    %v3741 = vsel %vm3732, %v3652, %v2862
    %v3742 = vsel %vm3732, %v3731, %v2941
    %3753 = vmatprep.subr.mxu0 0.0
    %3754 = vmatpush1.msra.mxu0 %v1655
    %3755 = vmatprep.subr.mxu0 0.0
    %3756 = vmatpush1.msra.mxu0 %v1654
    %3757 = vmatprep.subr.mxu0 0.0
    %3758 = vmatpush1.msra.mxu0 %v1653
    %3759 = vmatprep.subr.mxu0 0.0
    %3760 = vmatpush1.msra.mxu0 %v1652
    %3761 = vmatprep.subr.mxu0 0.0
    %3762 = vmatpush1.msra.mxu0 %v1651
    %3763 = vmatprep.subr.mxu0 0.0
    %3764 = vmatpush1.msra.mxu0 %v1650
    %3765 = vmatprep.subr.mxu0 0.0
    %3766 = vmatpush1.msra.mxu0 %v1649
    %3767 = vmatprep.subr.mxu0 0.0
    %3768 = vmatpush1.msra.mxu0 %v1648
    %3769 = vmatprep.subr.mxu0 0.0
    %3770 = vmatpush1.msra.mxu0 %v1647
    %3771 = vmatprep.subr.mxu0 0.0
    %3772 = vmatpush1.msra.mxu0 %v1646
    %3773 = vmatprep.subr.mxu0 0.0
    %3774 = vmatpush1.msra.mxu0 %v1645
    %3775 = vmatprep.subr.mxu0 0.0
    %3776 = vmatpush1.msra.mxu0 %v1644
    %3777 = vmatprep.subr.mxu0 0.0
    %3778 = vmatpush1.msra.mxu0 %v1643
    %3779 = vmatprep.subr.mxu0 0.0
    %3780 = vmatpush1.msra.mxu0 %v1642
    %3781 = vmatprep.subr.mxu0 0.0
    %3782 = vmatpush1.msra.mxu0 %v1641
    %3783 = vmatprep.subr.mxu0 0.0
    %3784 = vmatpush1.msra.mxu0 %v1640
    %3785 = vmatprep.subr.mxu0 0.0
    %3786 = vmatpush2.msra.mxu0 %v1671
    %3787 = vmatprep.subr.mxu0 0.0
    %3788 = vmatpush2.msra.mxu0 %v1670
    %3789 = vmatprep.subr.mxu0 0.0
    %3790 = vmatpush2.msra.mxu0 %v1669
    %3791 = vmatprep.subr.mxu0 0.0
    %3792 = vmatpush2.msra.mxu0 %v1668
    %3793 = vmatprep.subr.mxu0 0.0
    %3794 = vmatpush2.msra.mxu0 %v1667
    %3795 = vmatprep.subr.mxu0 0.0
    %3796 = vmatpush2.msra.mxu0 %v1666
    %3797 = vmatprep.subr.mxu0 0.0
    %3798 = vmatpush2.msra.mxu0 %v1665
    %3799 = vmatprep.subr.mxu0 0.0
    %3800 = vmatpush2.msra.mxu0 %v1664
    %3801 = vmatprep.subr.mxu0 0.0
    %3802 = vmatpush2.msra.mxu0 %v1663
    %3803 = vmatprep.subr.mxu0 0.0
    %3804 = vmatpush2.msra.mxu0 %v1662
    %3805 = vmatprep.subr.mxu0 0.0
    %3806 = vmatpush2.msra.mxu0 %v1661
    %3807 = vmatprep.subr.mxu0 0.0
    %3808 = vmatpush2.msra.mxu0 %v1660
    %3809 = vmatprep.subr.mxu0 0.0
    %3810 = vmatpush2.msra.mxu0 %v1659
    %3811 = vmatprep.subr.mxu0 0.0
    %3812 = vmatpush2.msra.mxu0 %v1658
    %3813 = vmatprep.subr.mxu0 0.0
    %3814 = vmatpush2.msra.mxu0 %v1657
    %3815 = vmatprep.subr.mxu0 0.0
    %3816 = vmatpush2.msra.mxu0 %v1656
    %3817 = vmatprep.mubr.f32.mxu0 %v3734
    %3818 = vmatmul.mubr.f32.gmra.mxu0 %v3733
    %v3819 = vpop.f32.mrf.mxu0
    %v3820 = vadd.f32 0.0, %v3819
    %v3821 = vpop.f32.mrf.mxu0
    %3822 = vdwg.mxu0
    %3823 = vmatprep.subr.mxu0 0.0
    %3824 = vmatpush1.msra.mxu0 %v1687
    %3825 = vmatprep.subr.mxu0 0.0
    %3826 = vmatpush1.msra.mxu0 %v1686
    %3827 = vmatprep.subr.mxu0 0.0
    %3828 = vmatpush1.msra.mxu0 %v1685
    %3829 = vmatprep.subr.mxu0 0.0
    %3830 = vmatpush1.msra.mxu0 %v1684
    %3831 = vmatprep.subr.mxu0 0.0
    %3832 = vmatpush1.msra.mxu0 %v1683
    %3833 = vmatprep.subr.mxu0 0.0
    %3834 = vmatpush1.msra.mxu0 %v1682
    %3835 = vmatprep.subr.mxu0 0.0
    %3836 = vmatpush1.msra.mxu0 %v1681
    %3837 = vmatprep.subr.mxu0 0.0
    %3838 = vmatpush1.msra.mxu0 %v1680
    %3839 = vmatprep.subr.mxu0 0.0
    %3840 = vmatpush1.msra.mxu0 %v1679
    %3841 = vmatprep.subr.mxu0 0.0
    %3842 = vmatpush1.msra.mxu0 %v1678
    %3843 = vmatprep.subr.mxu0 0.0
    %3844 = vmatpush1.msra.mxu0 %v1677
    %3845 = vmatprep.subr.mxu0 0.0
    %3846 = vmatpush1.msra.mxu0 %v1676
    %3847 = vmatprep.subr.mxu0 0.0
    %3848 = vmatpush1.msra.mxu0 %v1675
    %3849 = vmatprep.subr.mxu0 0.0
    %3850 = vmatpush1.msra.mxu0 %v1674
    %3851 = vmatprep.subr.mxu0 0.0
    %3852 = vmatpush1.msra.mxu0 %v1673
    %3853 = vmatprep.subr.mxu0 0.0
    %3854 = vmatpush1.msra.mxu0 %v1672
    %3855 = vmatprep.subr.mxu0 0.0
    %3856 = vmatpush2.msra.mxu0 %v1703
    %3857 = vmatprep.subr.mxu0 0.0
    %3858 = vmatpush2.msra.mxu0 %v1702
    %3859 = vmatprep.subr.mxu0 0.0
    %3860 = vmatpush2.msra.mxu0 %v1701
    %3861 = vmatprep.subr.mxu0 0.0
    %3862 = vmatpush2.msra.mxu0 %v1700
    %3863 = vmatprep.subr.mxu0 0.0
    %3864 = vmatpush2.msra.mxu0 %v1699
    %3865 = vmatprep.subr.mxu0 0.0
    %3866 = vmatpush2.msra.mxu0 %v1698
    %3867 = vmatprep.subr.mxu0 0.0
    %3868 = vmatpush2.msra.mxu0 %v1697
    %3869 = vmatprep.subr.mxu0 0.0
    %3870 = vmatpush2.msra.mxu0 %v1696
    %3871 = vmatprep.subr.mxu0 0.0
    %3872 = vmatpush2.msra.mxu0 %v1695
    %3873 = vmatprep.subr.mxu0 0.0
    %3874 = vmatpush2.msra.mxu0 %v1694
    %3875 = vmatprep.subr.mxu0 0.0
    %3876 = vmatpush2.msra.mxu0 %v1693
    %3877 = vmatprep.subr.mxu0 0.0
    %3878 = vmatpush2.msra.mxu0 %v1692
    %3879 = vmatprep.subr.mxu0 0.0
    %3880 = vmatpush2.msra.mxu0 %v1691
    %3881 = vmatprep.subr.mxu0 0.0
    %3882 = vmatpush2.msra.mxu0 %v1690
    %3883 = vmatprep.subr.mxu0 0.0
    %3884 = vmatpush2.msra.mxu0 %v1689
    %3885 = vmatprep.subr.mxu0 0.0
    %3886 = vmatpush2.msra.mxu0 %v1688
    %3887 = vmatprep.mubr.f32.mxu0 %v3736
    %3888 = vmatmul.mubr.f32.gmra.mxu0 %v3735
    %v3889 = vpop.f32.mrf.mxu0
    %v3890 = vadd.f32 %v3820, %v3889
    %v3891 = vpop.f32.mrf.mxu0
    %3892 = vdwg.mxu0
    %3893 = vmatprep.subr.mxu0 0.0
    %3894 = vmatpush1.msra.mxu0 %v1719
    %3895 = vmatprep.subr.mxu0 0.0
    %3896 = vmatpush1.msra.mxu0 %v1718
    %3897 = vmatprep.subr.mxu0 0.0
    %3898 = vmatpush1.msra.mxu0 %v1717
    %3899 = vmatprep.subr.mxu0 0.0
    %3900 = vmatpush1.msra.mxu0 %v1716
    %3901 = vmatprep.subr.mxu0 0.0
    %3902 = vmatpush1.msra.mxu0 %v1715
    %3903 = vmatprep.subr.mxu0 0.0
    %3904 = vmatpush1.msra.mxu0 %v1714
    %3905 = vmatprep.subr.mxu0 0.0
    %3906 = vmatpush1.msra.mxu0 %v1713
    %3907 = vmatprep.subr.mxu0 0.0
    %3908 = vmatpush1.msra.mxu0 %v1712
    %3909 = vmatprep.subr.mxu0 0.0
    %3910 = vmatpush1.msra.mxu0 %v1711
    %3911 = vmatprep.subr.mxu0 0.0
    %3912 = vmatpush1.msra.mxu0 %v1710
    %3913 = vmatprep.subr.mxu0 0.0
    %3914 = vmatpush1.msra.mxu0 %v1709
    %3915 = vmatprep.subr.mxu0 0.0
    %3916 = vmatpush1.msra.mxu0 %v1708
    %3917 = vmatprep.subr.mxu0 0.0
    %3918 = vmatpush1.msra.mxu0 %v1707
    %3919 = vmatprep.subr.mxu0 0.0
    %3920 = vmatpush1.msra.mxu0 %v1706
    %3921 = vmatprep.subr.mxu0 0.0
    %3922 = vmatpush1.msra.mxu0 %v1705
    %3923 = vmatprep.subr.mxu0 0.0
    %3924 = vmatpush1.msra.mxu0 %v1704
    %3925 = vmatprep.subr.mxu0 0.0
    %3926 = vmatpush2.msra.mxu0 %v1735
    %3927 = vmatprep.subr.mxu0 0.0
    %3928 = vmatpush2.msra.mxu0 %v1734
    %3929 = vmatprep.subr.mxu0 0.0
    %3930 = vmatpush2.msra.mxu0 %v1733
    %3931 = vmatprep.subr.mxu0 0.0
    %3932 = vmatpush2.msra.mxu0 %v1732
    %3933 = vmatprep.subr.mxu0 0.0
    %3934 = vmatpush2.msra.mxu0 %v1731
    %3935 = vmatprep.subr.mxu0 0.0
    %3936 = vmatpush2.msra.mxu0 %v1730
    %3937 = vmatprep.subr.mxu0 0.0
    %3938 = vmatpush2.msra.mxu0 %v1729
    %3939 = vmatprep.subr.mxu0 0.0
    %3940 = vmatpush2.msra.mxu0 %v1728
    %3941 = vmatprep.subr.mxu0 0.0
    %3942 = vmatpush2.msra.mxu0 %v1727
    %3943 = vmatprep.subr.mxu0 0.0
    %3944 = vmatpush2.msra.mxu0 %v1726
    %3945 = vmatprep.subr.mxu0 0.0
    %3946 = vmatpush2.msra.mxu0 %v1725
    %3947 = vmatprep.subr.mxu0 0.0
    %3948 = vmatpush2.msra.mxu0 %v1724
    %3949 = vmatprep.subr.mxu0 0.0
    %3950 = vmatpush2.msra.mxu0 %v1723
    %3951 = vmatprep.subr.mxu0 0.0
    %3952 = vmatpush2.msra.mxu0 %v1722
    %3953 = vmatprep.subr.mxu0 0.0
    %3954 = vmatpush2.msra.mxu0 %v1721
    %3955 = vmatprep.subr.mxu0 0.0
    %3956 = vmatpush2.msra.mxu0 %v1720
    %3957 = vmatprep.mubr.f32.mxu0 %v3738
    %3958 = vmatmul.mubr.f32.gmra.mxu0 %v3737
    %v3959 = vpop.f32.mrf.mxu0
    %v3960 = vadd.f32 %v3890, %v3959
    %v3961 = vpop.f32.mrf.mxu0
    %3962 = vdwg.mxu0
    %3963 = vmatprep.subr.mxu0 0.0
    %3964 = vmatpush1.msra.mxu0 %v1751
    %3965 = vmatprep.subr.mxu0 0.0
    %3966 = vmatpush1.msra.mxu0 %v1750
    %3967 = vmatprep.subr.mxu0 0.0
    %3968 = vmatpush1.msra.mxu0 %v1749
    %3969 = vmatprep.subr.mxu0 0.0
    %3970 = vmatpush1.msra.mxu0 %v1748
    %3971 = vmatprep.subr.mxu0 0.0
    %3972 = vmatpush1.msra.mxu0 %v1747
    %3973 = vmatprep.subr.mxu0 0.0
    %3974 = vmatpush1.msra.mxu0 %v1746
    %3975 = vmatprep.subr.mxu0 0.0
    %3976 = vmatpush1.msra.mxu0 %v1745
    %3977 = vmatprep.subr.mxu0 0.0
    %3978 = vmatpush1.msra.mxu0 %v1744
    %3979 = vmatprep.subr.mxu0 0.0
    %3980 = vmatpush1.msra.mxu0 %v1743
    %3981 = vmatprep.subr.mxu0 0.0
    %3982 = vmatpush1.msra.mxu0 %v1742
    %3983 = vmatprep.subr.mxu0 0.0
    %3984 = vmatpush1.msra.mxu0 %v1741
    %3985 = vmatprep.subr.mxu0 0.0
    %3986 = vmatpush1.msra.mxu0 %v1740
    %3987 = vmatprep.subr.mxu0 0.0
    %3988 = vmatpush1.msra.mxu0 %v1739
    %3989 = vmatprep.subr.mxu0 0.0
    %3990 = vmatpush1.msra.mxu0 %v1738
    %3991 = vmatprep.subr.mxu0 0.0
    %3992 = vmatpush1.msra.mxu0 %v1737
    %3993 = vmatprep.subr.mxu0 0.0
    %3994 = vmatpush1.msra.mxu0 %v1736
    %3995 = vmatprep.subr.mxu0 0.0
    %3996 = vmatpush2.msra.mxu0 %v1767
    %3997 = vmatprep.subr.mxu0 0.0
    %3998 = vmatpush2.msra.mxu0 %v1766
    %3999 = vmatprep.subr.mxu0 0.0
    %4000 = vmatpush2.msra.mxu0 %v1765
    %4001 = vmatprep.subr.mxu0 0.0
    %4002 = vmatpush2.msra.mxu0 %v1764
    %4003 = vmatprep.subr.mxu0 0.0
    %4004 = vmatpush2.msra.mxu0 %v1763
    %4005 = vmatprep.subr.mxu0 0.0
    %4006 = vmatpush2.msra.mxu0 %v1762
    %4007 = vmatprep.subr.mxu0 0.0
    %4008 = vmatpush2.msra.mxu0 %v1761
    %4009 = vmatprep.subr.mxu0 0.0
    %4010 = vmatpush2.msra.mxu0 %v1760
    %4011 = vmatprep.subr.mxu0 0.0
    %4012 = vmatpush2.msra.mxu0 %v1759
    %4013 = vmatprep.subr.mxu0 0.0
    %4014 = vmatpush2.msra.mxu0 %v1758
    %4015 = vmatprep.subr.mxu0 0.0
    %4016 = vmatpush2.msra.mxu0 %v1757
    %4017 = vmatprep.subr.mxu0 0.0
    %4018 = vmatpush2.msra.mxu0 %v1756
    %4019 = vmatprep.subr.mxu0 0.0
    %4020 = vmatpush2.msra.mxu0 %v1755
    %4021 = vmatprep.subr.mxu0 0.0
    %4022 = vmatpush2.msra.mxu0 %v1754
    %4023 = vmatprep.subr.mxu0 0.0
    %4024 = vmatpush2.msra.mxu0 %v1753
    %4025 = vmatprep.subr.mxu0 0.0
    %4026 = vmatpush2.msra.mxu0 %v1752
    %4027 = vmatprep.mubr.f32.mxu0 %v3740
    %4028 = vmatmul.mubr.f32.gmra.mxu0 %v3739
    %v4029 = vpop.f32.mrf.mxu0
    %v4030 = vadd.f32 %v3960, %v4029
    %v4031 = vpop.f32.mrf.mxu0
    %4032 = vdwg.mxu0
    %4033 = vmatprep.subr.mxu0 0.0
    %4034 = vmatpush1.msra.mxu0 %v1783
    %4035 = vmatprep.subr.mxu0 0.0
    %4036 = vmatpush1.msra.mxu0 %v1782
    %4037 = vmatprep.subr.mxu0 0.0
    %4038 = vmatpush1.msra.mxu0 %v1781
    %4039 = vmatprep.subr.mxu0 0.0
    %4040 = vmatpush1.msra.mxu0 %v1780
    %4041 = vmatprep.subr.mxu0 0.0
    %4042 = vmatpush1.msra.mxu0 %v1779
    %4043 = vmatprep.subr.mxu0 0.0
    %4044 = vmatpush1.msra.mxu0 %v1778
    %4045 = vmatprep.subr.mxu0 0.0
    %4046 = vmatpush1.msra.mxu0 %v1777
    %4047 = vmatprep.subr.mxu0 0.0
    %4048 = vmatpush1.msra.mxu0 %v1776
    %4049 = vmatprep.subr.mxu0 0.0
    %4050 = vmatpush1.msra.mxu0 %v1775
    %4051 = vmatprep.subr.mxu0 0.0
    %4052 = vmatpush1.msra.mxu0 %v1774
    %4053 = vmatprep.subr.mxu0 0.0
    %4054 = vmatpush1.msra.mxu0 %v1773
    %4055 = vmatprep.subr.mxu0 0.0
    %4056 = vmatpush1.msra.mxu0 %v1772
    %4057 = vmatprep.subr.mxu0 0.0
    %4058 = vmatpush1.msra.mxu0 %v1771
    %4059 = vmatprep.subr.mxu0 0.0
    %4060 = vmatpush1.msra.mxu0 %v1770
    %4061 = vmatprep.subr.mxu0 0.0
    %4062 = vmatpush1.msra.mxu0 %v1769
    %4063 = vmatprep.subr.mxu0 0.0
    %4064 = vmatpush1.msra.mxu0 %v1768
    %4065 = vmatprep.subr.mxu0 0.0
    %4066 = vmatpush2.msra.mxu0 %v1799
    %4067 = vmatprep.subr.mxu0 0.0
    %4068 = vmatpush2.msra.mxu0 %v1798
    %4069 = vmatprep.subr.mxu0 0.0
    %4070 = vmatpush2.msra.mxu0 %v1797
    %4071 = vmatprep.subr.mxu0 0.0
    %4072 = vmatpush2.msra.mxu0 %v1796
    %4073 = vmatprep.subr.mxu0 0.0
    %4074 = vmatpush2.msra.mxu0 %v1795
    %4075 = vmatprep.subr.mxu0 0.0
    %4076 = vmatpush2.msra.mxu0 %v1794
    %4077 = vmatprep.subr.mxu0 0.0
    %4078 = vmatpush2.msra.mxu0 %v1793
    %4079 = vmatprep.subr.mxu0 0.0
    %4080 = vmatpush2.msra.mxu0 %v1792
    %4081 = vmatprep.subr.mxu0 0.0
    %4082 = vmatpush2.msra.mxu0 %v1791
    %4083 = vmatprep.subr.mxu0 0.0
    %4084 = vmatpush2.msra.mxu0 %v1790
    %4085 = vmatprep.subr.mxu0 0.0
    %4086 = vmatpush2.msra.mxu0 %v1789
    %4087 = vmatprep.subr.mxu0 0.0
    %4088 = vmatpush2.msra.mxu0 %v1788
    %4089 = vmatprep.subr.mxu0 0.0
    %4090 = vmatpush2.msra.mxu0 %v1787
    %4091 = vmatprep.subr.mxu0 0.0
    %4092 = vmatpush2.msra.mxu0 %v1786
    %4093 = vmatprep.subr.mxu0 0.0
    %4094 = vmatpush2.msra.mxu0 %v1785
    %4095 = vmatprep.subr.mxu0 0.0
    %4096 = vmatpush2.msra.mxu0 %v1784
    %4097 = vmatprep.mubr.f32.mxu0 %v3742
    %4098 = vmatmul.mubr.f32.gmra.mxu0 %v3741
    %v4099 = vpop.f32.mrf.mxu0
    %v4100 = vadd.f32 %v4030, %v4099
    %v4101 = vpop.f32.mrf.mxu0
    %4102 = vdwg.mxu0
    %4103 = vst [vmem:[#allocation7] sm:$0x3] %v4100
    // Predicated region
    $region18: #{tpu_custom_call.1} parent=1 // pred_check
      _
    $region19: #{tpu_custom_call.1} parent=1 // pred_check_branch
      %4105 = sbr.rel (0) target = $region21
    $region20: #{tpu_custom_call.1} parent=1 // pred_region
      %s4107 = ssub.s32 32, 32
      %4108 = vsyncadd [#allocation4], %s4107
      %s4110 = sshll.u32 [#allocation7], 4
      %s4111 = int_to_ptr.vmem [resolvable:$true] %s4110
      %4113 = dma.vmem_to_hbm [thread:$0]  %s4111, 32, %s2, [#allocation4]
    $region21: #{tpu_custom_call.1} parent=1 // pred_fallthru
      _
    // Predicated region
    $region22: #{tpu_custom_call.1} parent=1 // pred_check
      _
    $region23: #{tpu_custom_call.1} parent=1 // pred_check_branch
      %4115 = sbr.rel (0) target = $region25
    $region24: #{tpu_custom_call.1} parent=1 // pred_region
      %4116 = dma.done [#allocation4], 32
    $region25: #{tpu_custom_call.1} parent=1 // pred_fallthru
      _
    %4117 = vsyncpa [#allocation3], 1
    %4118 = vsyncpa [#allocation6], 1
    %4119 = vsyncpa [#allocation4], 1

</llo_original>
